<compile_context>
chip_gen: v7x
topology: tpu7x:2x2x1
jax: 0.10.0
libtpu: 0.0.40
codegen_flags: <defaults>
</compile_context>

<pallas_src>
import functools

import jax
import jax.numpy as jnp
import numpy as np
from jax import lax
from jax.experimental import pallas as pl
from jax.experimental.pallas import tpu as pltpu

_BN_EPS = 1e-5
_LEAKY_SLOPE = 0.1
_LANE = 128
_SUBLANE = 8


def _round_up(x, m):
    return (x + m - 1) // m * m


def _vmem_capacity_bytes():
    try:
        info = pltpu.get_tpu_info()
        cap = getattr(info, "vmem_capacity_bytes", None)
        if cap:
            return int(cap)
    except Exception:
        pass
    return 64 * 1024 * 1024  # v7x-sized fallback (smallest of the three gens)


def _vmem_estimate(th, kh, kw, wp8, w_out, cin_p, tn, comp_bytes, out_bytes):
    """Rough per-core VMEM working set for one conv grid step."""
    thh = th + kh - 1
    buf = 2 * thh * wp8 * cin_p * comp_bytes          # manual input double-buffer
    wgt = 2 * kh * kw * cin_p * tn * comp_bytes       # pipelined weight block
    yblk = 2 * th * w_out * tn * out_bytes            # pipelined output block
    acc = th * w_out * tn * 4                         # f32 accumulator value
    z = th * wp8 * tn * 4                             # per-tap matmul result
    return buf + wgt + yblk + acc + z


def _pick_row_tile(h_out, budget, est_fn, max_rows=64):
    """Largest divisor of h_out (<= max_rows) whose working set fits budget."""
    best = 1
    for th in range(1, min(max_rows, h_out) + 1):
        if h_out % th == 0 and est_fn(th) <= budget:
            best = th
    return best


def _make_conv_kernel(KH, KW, TH, Hp, Wp8, W_out, TN, bn_act):
    """Conv tile kernel: manual-DMA'd input rows, per-tap accumulating matmuls."""
    THH = TH + KH - 1
    ROWS = TH * Wp8
    CPY = THH * Wp8

    def _tile_copy(x_hbm, buf, sem, n, row_tile, slot):
        start = (n * Hp + row_tile * TH) * Wp8
        return pltpu.make_async_copy(
            x_hbm.at[pl.ds(start, CPY)], buf.at[slot], sem.at[slot])

    def _fetch_input(x_hbm, buf, sem):
        n = pl.program_id(0)
        r = pl.program_id(1)
        ct = pl.program_id(2)
        nrt = pl.num_programs(1)
        slot = r % 2

        # Prime the first row tile of this image (first ct step of r == 0).
        @pl.when(jnp.logical_and(r == 0, ct == 0))
        def _():
            _tile_copy(x_hbm, buf, sem, n, 0, 0).start()

        # Wait for the copy of row tile r (started here or at step r-1),
        # then prefetch row tile r+1 into the other slot.
        @pl.when(ct == 0)
        def _():
            _tile_copy(x_hbm, buf, sem, n, r, slot).wait()

        @pl.when(jnp.logical_and(ct == 0, r + 1 < nrt))
        def _():
            _tile_copy(x_hbm, buf, sem, n, r + 1, 1 - slot).start()

        return slot

    def _compute(x_all, w_ref):
        # x_all: (THH*Wp8, Cin_p) in compute dtype; per-tap K=Cin_p matmuls,
        # f32 accumulation; width shift applied on the tap result.
        acc = jnp.zeros((TH, W_out, TN), jnp.float32)
        for kh in range(KH):
            rows = x_all[kh * Wp8:kh * Wp8 + ROWS, :]   # sublane-aligned slice
            for kw in range(KW):
                z = jnp.dot(rows, w_ref[kh, kw],
                            preferred_element_type=jnp.float32)
                z = z.reshape(TH, Wp8, TN)
                acc = acc + z[:, kw:kw + W_out, :]
        return acc

    if bn_act:
        def kernel(x_hbm, w_ref, y_ref, s_ref, buf, sem):
            slot = _fetch_input(x_hbm, buf, sem)
            acc = _compute(buf[slot], w_ref)
            y_ref[...] = acc.reshape(1, TH, W_out, TN).astype(y_ref.dtype)
            # Per-tile centered BN partials (tile sum + tile M2), f32.
            inv_cnt = 1.0 / float(TH * W_out)
            s1 = jnp.sum(acc, axis=(0, 1), keepdims=True)      # (1,1,TN)
            mean_t = s1 * inv_cnt
            d = acc - mean_t
            m2 = jnp.sum(d * d, axis=(0, 1), keepdims=True)    # (1,1,TN)
            s_ref[...] = jnp.concatenate(
                [s1.reshape(1, TN), m2.reshape(1, TN)],
                axis=0).reshape(1, 1, 2, TN)

        return kernel

    def kernel(x_hbm, w_ref, b_ref, y_ref, buf, sem):
        slot = _fetch_input(x_hbm, buf, sem)
        acc = _compute(buf[slot], w_ref)
        acc = acc + b_ref[...].reshape(1, 1, TN)
        y_ref[...] = acc.reshape(1, TH, W_out, TN).astype(y_ref.dtype)

    return kernel


def _make_bn_leaky_kernel(TN):
    """Finalize pass: y*scale + shift, then LeakyReLU(0.1); lane-dense stores."""

    def kernel(y_ref, scale_ref, shift_ref, o_ref):
        y = y_ref[...].astype(jnp.float32)                       # (1,TH,W_out,TN)
        sc = scale_ref[...].reshape(1, 1, 1, TN)
        sh = shift_ref[...].reshape(1, 1, 1, TN)
        z = y * sc + sh
        o_ref[...] = jnp.where(z > 0, z, _LEAKY_SLOPE * z).astype(o_ref.dtype)

    return kernel


@functools.partial(
    jax.jit,
    static_argnames=("padding", "stride", "bn_act", "row_tile", "cout_tile",
                     "compute_dtype"))
def cnn_block(x_nchw, weight_oihw, p0, p1, *, padding=1, stride=1, bn_act=True,
              row_tile=None, cout_tile=None, compute_dtype=jnp.bfloat16):
    """Forward pass of CNNBlock.

    x_nchw:      (N, Cin, H, W)        float32 (PyTorch NCHW)
    weight_oihw: (Cout, Cin, KH, KW)   float32 (PyTorch conv weight layout)
    p0, p1:      (Cout,) gamma/beta if bn_act else bias/ignored
    compute_dtype: dtype fed to the MXU (bf16 default); accumulation and BN
                   math stay f32.
    Returns (N, Cout, H_out, W_out) NCHW, matching PyTorch.
    """
    if stride != 1:
        # TODO(synk): stride > 1 (YOLOv3 downsampling CNNBlocks) unimplemented.
        raise NotImplementedError("cnn_block only supports stride=1")

    N, Cin, H, W = x_nchw.shape
    Cout, _, KH, KW = weight_oihw.shape

    H_out = H + 2 * padding - KH + 1
    W_out = W + 2 * padding - KW + 1
    Hp = H + 2 * padding
    Wp = W + 2 * padding
    Wp8 = _round_up(Wp, _SUBLANE)

    Cin_p = _round_up(Cin, _LANE)
    Cout_p = _round_up(Cout, _LANE)

    # Cout tile (MXU N dim): 256 where it divides Cout_p, else 128.
    if (cout_tile is not None and Cout_p % cout_tile == 0
            and cout_tile % _LANE == 0):
        TN = cout_tile
    else:
        TN = 256 if Cout_p % 256 == 0 else _LANE
    nct = Cout_p // TN

    comp_bytes = jnp.dtype(compute_dtype).itemsize
    out_conv_dtype = compute_dtype if bn_act else x_nchw.dtype
    out_bytes = jnp.dtype(out_conv_dtype).itemsize

    vmem_cap = _vmem_capacity_bytes()
    est = functools.partial(
        _vmem_estimate, kh=KH, kw=KW, wp8=Wp8, w_out=W_out, cin_p=Cin_p, tn=TN,
        comp_bytes=comp_bytes, out_bytes=out_bytes)

    if row_tile is not None and H_out % row_tile == 0:
        TH = row_tile
    else:
        TH = _pick_row_tile(H_out, vmem_cap // 3, est)
    nrt = H_out // TH
    THH = TH + KH - 1

    vmem_limit = int(min(vmem_cap, max(48 << 20, 3 * est(TH))))

    # ---- layout glue: NCHW -> NHWC, cast, zero pad, flatten rows ----
    x_nhwc = jnp.transpose(x_nchw, (0, 2, 3, 1)).astype(compute_dtype)
    x_pad = jnp.pad(
        x_nhwc,
        ((0, 0), (padding, padding), (padding, padding + Wp8 - Wp),
         (0, Cin_p - Cin)))
    x_flat = x_pad.reshape(N * Hp * Wp8, Cin_p)   # rows of padded image, lane-padded

    # Weight OIHW -> (KH, KW, Cin_p, Cout_p) in compute dtype.
    w_hwio = jnp.transpose(weight_oihw, (2, 3, 1, 0))
    w_pad = jnp.pad(
        w_hwio, ((0, 0), (0, 0), (0, Cin_p - Cin), (0, Cout_p - Cout)))
    w_pad = w_pad.astype(compute_dtype)

    # ---- grid / specs ----
    grid = (N, nrt, nct)
    x_spec = pl.BlockSpec(memory_space=pl.ANY)                    # manual DMA
    w_spec = pl.BlockSpec((KH, KW, Cin_p, TN), lambda n, r, c: (0, 0, 0, c))
    y_spec = pl.BlockSpec((1, TH, W_out, TN), lambda n, r, c: (n, r, 0, c))
    vec_spec = pl.BlockSpec((1, TN), lambda n, r, c: (0, c))
    scratch = [
        pltpu.VMEM((2, THH * Wp8, Cin_p), compute_dtype),
        pltpu.SemaphoreType.DMA((2,)),
    ]
    conv_params = pltpu.CompilerParams(
        dimension_semantics=("parallel", "arbitrary", "arbitrary"),
        vmem_limit_bytes=vmem_limit)

    conv_kernel = _make_conv_kernel(KH, KW, TH, Hp, Wp8, W_out, TN, bn_act)

    if bn_act:
        s_spec = pl.BlockSpec((1, 1, 2, TN), lambda n, r, c: (n, r, 0, c))
        conv_out, stats = pl.pallas_call(
            conv_kernel,
            grid=grid,
            in_specs=[x_spec, w_spec],
            out_specs=(y_spec, s_spec),
            out_shape=(
                jax.ShapeDtypeStruct((N, H_out, W_out, Cout_p), out_conv_dtype),
                jax.ShapeDtypeStruct((N, nrt, 2, Cout_p), jnp.float32)),
            scratch_shapes=scratch,
            compiler_params=conv_params,
        )(x_flat, w_pad)

        # Chan-style combine of per-tile centered stats (tiny O(Cout) work).
        cnt_tile = jnp.float32(TH * W_out)
        total = jnp.float32(N * H_out * W_out)
        s1 = stats[:, :, 0, :]                      # (N, nrt, Cout_p) tile sums
        m2 = stats[:, :, 1, :]                      # (N, nrt, Cout_p) tile M2
        mu = jnp.sum(s1, axis=(0, 1)) / total
        tmean = s1 / cnt_tile
        M2 = jnp.sum(m2, axis=(0, 1)) + cnt_tile * jnp.sum(
            (tmean - mu[None, None, :]) ** 2, axis=(0, 1))
        var = jnp.maximum(M2 / total, 0.0)          # biased batch variance

        gamma = jnp.pad(p0.astype(jnp.float32), (0, Cout_p - Cout))
        beta = jnp.pad(p1.astype(jnp.float32), (0, Cout_p - Cout))
        scale = gamma * lax.rsqrt(var + _BN_EPS)
        shift = beta - mu * scale
        scale = scale.reshape(1, Cout_p)
        shift = shift.reshape(1, Cout_p)

        fin_params = pltpu.CompilerParams(
            dimension_semantics=("parallel", "parallel", "parallel"),
            vmem_limit_bytes=vmem_limit)
        out_nhwc = pl.pallas_call(
            _make_bn_leaky_kernel(TN),
            grid=grid,
            in_specs=[y_spec, vec_spec, vec_spec],
            out_specs=y_spec,
            out_shape=jax.ShapeDtypeStruct((N, H_out, W_out, Cout_p),
                                           x_nchw.dtype),
            compiler_params=fin_params,
        )(conv_out, scale, shift)
    else:
        bias = jnp.pad(p0.astype(jnp.float32),
                       (0, Cout_p - Cout)).reshape(1, Cout_p)
        out_nhwc = pl.pallas_call(
            conv_kernel,
            grid=grid,
            in_specs=[x_spec, w_spec, vec_spec],
            out_specs=y_spec,
            out_shape=jax.ShapeDtypeStruct((N, H_out, W_out, Cout_p),
                                           out_conv_dtype),
            scratch_shapes=scratch,
            compiler_params=conv_params,
        )(x_flat, w_pad, bias)

    return jnp.transpose(out_nhwc[..., :Cout], (0, 3, 1, 2))


def _reference(x_nchw, weight_oihw, g, b, *, padding=1, bn_act=True):
    """Pure-JAX reference mirroring the PyTorch forward (training-mode BN)."""
    conv = lax.conv_general_dilated(
        x_nchw, weight_oihw, window_strides=(1, 1),
        padding=[(padding, padding), (padding, padding)],
        dimension_numbers=("NCHW", "OIHW", "NCHW"))
    if not bn_act:
        return conv + g[None, :, None, None]
    mu = conv.mean(axis=(0, 2, 3), keepdims=True)
    var = ((conv - mu) ** 2).mean(axis=(0, 2, 3), keepdims=True)
    y = (conv - mu) / jnp.sqrt(var + _BN_EPS)
    y = y * g[None, :, None, None] + b[None, :, None, None]
    return jnp.where(y > 0, y, _LEAKY_SLOPE * y)


if __name__ == "__main__":
    key = jax.random.PRNGKey(0)
    kx, kw, kb, kw2 = jax.random.split(key, 4)

    N, Cin, Cout, H, W, K = 2, 4, 8, 16, 16, 3
    x = jax.random.normal(kx, (N, Cin, H, W), dtype=jnp.float32)
    weight = jax.random.normal(kw, (Cout, Cin, K, K), dtype=jnp.float32) * 0.1
    gamma = jnp.ones((Cout,), jnp.float32)    # BatchNorm2d default weight
    beta = jnp.zeros((Cout,), jnp.float32)    # BatchNorm2d default bias
    bias = jax.random.normal(kb, (Cout,), jnp.float32) * 0.1

    ref = _reference(x, weight, gamma, beta, padding=1, bn_act=True)

    # 1) f32 MXU path, row_tile=8 -> 2 row tiles (exercises DMA double-buffer).
    out = cnn_block(x, weight, gamma, beta, padding=1, bn_act=True,
                    row_tile=8, compute_dtype=jnp.float32)
    out = jax.block_until_ready(out)
    assert out.shape == (N, Cout, H, W)
    assert np.allclose(np.asarray(out), np.asarray(ref), atol=1e-3, rtol=1e-3)

    # 2) default bf16 MXU path (f32 accumulation / BN), auto row tile.
    out_bf = cnn_block(x, weight, gamma, beta, padding=1, bn_act=True)
    out_bf = jax.block_until_ready(out_bf)
    assert np.allclose(np.asarray(out_bf), np.asarray(ref), atol=1e-1, rtol=1e-1)

    # 3) bn_act=False (conv + bias only), f32.
    out2 = cnn_block(x, weight, bias, jnp.zeros_like(bias), padding=1,
                     bn_act=False, row_tile=8, compute_dtype=jnp.float32)
    out2 = jax.block_until_ready(out2)
    ref2 = _reference(x, weight, bias, beta, padding=1, bn_act=False)
    assert np.allclose(np.asarray(out2), np.asarray(ref2), atol=1e-3, rtol=1e-3)

    # 4) Cout tiling path (Cout=256, TN=128 -> 2 Cout tiles per row tile).
    Cout4 = 256
    weight4 = jax.random.normal(kw2, (Cout4, Cin, K, K), dtype=jnp.float32) * 0.1
    gamma4 = jnp.ones((Cout4,), jnp.float32)
    beta4 = jnp.zeros((Cout4,), jnp.float32)
    out4 = cnn_block(x, weight4, gamma4, beta4, padding=1, bn_act=True,
                     row_tile=8, cout_tile=128, compute_dtype=jnp.float32)
    out4 = jax.block_until_ready(out4)
    ref4 = _reference(x, weight4, gamma4, beta4, padding=1, bn_act=True)
    assert out4.shape == (N, Cout4, H, W)
    assert np.allclose(np.asarray(out4), np.asarray(ref4), atol=1e-3, rtol=1e-3)

    print("KERNEL_OK")
</pallas_src>

<mosaic_0001>
module attributes {stable_mosaic.version = 11 : i64} {
  func.func @kernel(%arg0: i32, %arg1: i32, %arg2: i32, %arg3: memref<864x128xf32, #tpu.memory_space<any>>, %arg4: memref<3x3x128x128xf32, #tpu.memory_space<vmem>>, %arg5: memref<1x8x16x128xf32, #tpu.memory_space<vmem>>, %arg6: memref<1x1x2x128xf32, #tpu.memory_space<vmem>>, %arg7: memref<2x240x128xf32, #tpu.memory_space<vmem>>, %arg8: memref<2x!tpu.dma_semaphore, #tpu.memory_space<semaphore_mem>>) attributes {dimension_semantics = [#tpu.dimension_semantics<parallel>, #tpu.dimension_semantics<arbitrary>, #tpu.dimension_semantics<arbitrary>], iteration_bounds = array<i64: 2, 2, 1>, scalar_prefetch = 0 : i64, scratch_operands = 2 : i64, tpu.core_type = #tpu.core_type<tc>, window_params = [{}, {transform_indices = @transform_1, window_bounds = array<i64: 3, 3, 128, 128>}, {transform_indices = @transform_2, window_bounds = array<i64: 1, 8, 16, 128>}, {transform_indices = @transform_3, window_bounds = array<i64: 1, 1, 2, 128>}]} {
    %c2_i32 = arith.constant 2 : i32
    %c0_i32 = arith.constant 0 : i32
    %0 = arith.cmpi eq, %c2_i32, %c0_i32 : i32
    %c1_i32 = arith.constant 1 : i32
    %1 = arith.select %0, %c1_i32, %c2_i32 : i32
    %2 = arith.remsi %arg1, %1 : i32
    %c0_i32_0 = arith.constant 0 : i32
    %3 = arith.cmpi ne, %2, %c0_i32_0 : i32
    %c0_i32_1 = arith.constant 0 : i32
    %4 = arith.cmpi slt, %2, %c0_i32_1 : i32
    %c0_i32_2 = arith.constant 0 : i32
    %5 = arith.cmpi slt, %1, %c0_i32_2 : i32
    %6 = arith.xori %4, %5 : i1
    %7 = arith.andi %6, %3 : i1
    %8 = arith.addi %2, %1 : i32
    %9 = arith.select %7, %8, %2 : i32
    %c0_i32_3 = arith.constant 0 : i32
    %10 = arith.cmpi eq, %arg1, %c0_i32_3 : i32
    %c0_i32_4 = arith.constant 0 : i32
    %11 = arith.cmpi eq, %arg2, %c0_i32_4 : i32
    %12 = arith.andi %10, %11 : i1
    %13 = arith.extui %12 : i1 to i32
    %c0_i32_5 = arith.constant 0 : i32
    %14 = arith.cmpi ne, %13, %c0_i32_5 : i32
    scf.if %14 {
      %c18_i32 = arith.constant 18 : i32
      %101 = arith.muli %arg0, %c18_i32 : i32
      %c0_i32_67 = arith.constant 0 : i32
      %102 = arith.addi %101, %c0_i32_67 : i32
      %c24_i32 = arith.constant 24 : i32
      %103 = arith.muli %102, %c24_i32 : i32
      %c0_i32_68 = arith.constant 0 : i32
      %c0_i32_69 = arith.constant 0 : i32
      %c0_i32_70 = arith.constant 0 : i32
      %104 = tpu.memref_slice %arg3[%103, %c0_i32_70] : memref<864x128xf32, #tpu.memory_space<any>> -> memref<240x128xf32, #tpu.memory_space<any>>
      %c0_i32_71 = arith.constant 0 : i32
      %c0_i32_72 = arith.constant 0 : i32
      %105 = tpu.memref_slice %arg7[%c0_i32_68, %c0_i32_71, %c0_i32_72] : memref<2x240x128xf32, #tpu.memory_space<vmem>> -> memref<1x240x128xf32, #tpu.memory_space<vmem>>
      %106 = tpu.memref_squeeze %105 : memref<1x240x128xf32, #tpu.memory_space<vmem>> -> memref<240x128xf32, #tpu.memory_space<vmem>>
      %107 = tpu.memref_slice %arg8[%c0_i32_69] : memref<2x!tpu.dma_semaphore, #tpu.memory_space<semaphore_mem>> -> memref<1x!tpu.dma_semaphore, #tpu.memory_space<semaphore_mem>>
      %108 = tpu.memref_squeeze %107 : memref<1x!tpu.dma_semaphore, #tpu.memory_space<semaphore_mem>> -> memref<!tpu.dma_semaphore, #tpu.memory_space<semaphore_mem>>
      tpu.enqueue_dma source(%104 : memref<240x128xf32, #tpu.memory_space<any>>) target(%106 : memref<240x128xf32, #tpu.memory_space<vmem>>) target_semaphore(%108 : memref<!tpu.dma_semaphore, #tpu.memory_space<semaphore_mem>>)
    } else {
    }
    %c0_i32_6 = arith.constant 0 : i32
    %15 = arith.cmpi eq, %arg2, %c0_i32_6 : i32
    %16 = arith.extui %15 : i1 to i32
    %c0_i32_7 = arith.constant 0 : i32
    %17 = arith.cmpi ne, %16, %c0_i32_7 : i32
    scf.if %17 {
      %c18_i32 = arith.constant 18 : i32
      %101 = arith.muli %arg0, %c18_i32 : i32
      %c8_i32 = arith.constant 8 : i32
      %102 = arith.muli %arg1, %c8_i32 : i32
      %103 = arith.addi %101, %102 : i32
      %c24_i32 = arith.constant 24 : i32
      %104 = arith.muli %103, %c24_i32 : i32
      %c0_i32_67 = arith.constant 0 : i32
      %105 = tpu.memref_slice %arg3[%104, %c0_i32_67] : memref<864x128xf32, #tpu.memory_space<any>> -> memref<240x128xf32, #tpu.memory_space<any>>
      %c0_i32_68 = arith.constant 0 : i32
      %c0_i32_69 = arith.constant 0 : i32
      %106 = tpu.memref_slice %arg7[%9, %c0_i32_68, %c0_i32_69] : memref<2x240x128xf32, #tpu.memory_space<vmem>> -> memref<1x240x128xf32, #tpu.memory_space<vmem>>
      %107 = tpu.memref_squeeze %106 : memref<1x240x128xf32, #tpu.memory_space<vmem>> -> memref<240x128xf32, #tpu.memory_space<vmem>>
      %108 = tpu.memref_slice %arg8[%9] : memref<2x!tpu.dma_semaphore, #tpu.memory_space<semaphore_mem>> -> memref<1x!tpu.dma_semaphore, #tpu.memory_space<semaphore_mem>>
      %109 = tpu.memref_squeeze %108 : memref<1x!tpu.dma_semaphore, #tpu.memory_space<semaphore_mem>> -> memref<!tpu.dma_semaphore, #tpu.memory_space<semaphore_mem>>
      tpu.wait_dma2 semaphore(%109 : memref<!tpu.dma_semaphore, #tpu.memory_space<semaphore_mem>>) src(%105 : memref<240x128xf32, #tpu.memory_space<any>>) dst(%107 : memref<240x128xf32, #tpu.memory_space<vmem>>)
    } else {
    }
    %c0_i32_8 = arith.constant 0 : i32
    %18 = arith.cmpi eq, %arg2, %c0_i32_8 : i32
    %c1_i32_9 = arith.constant 1 : i32
    %19 = arith.addi %arg1, %c1_i32_9 : i32
    %c2_i32_10 = arith.constant 2 : i32
    %20 = arith.cmpi slt, %19, %c2_i32_10 : i32
    %21 = arith.andi %18, %20 : i1
    %22 = arith.extui %21 : i1 to i32
    %c0_i32_11 = arith.constant 0 : i32
    %23 = arith.cmpi ne, %22, %c0_i32_11 : i32
    scf.if %23 {
      %c1_i32_67 = arith.constant 1 : i32
      %101 = arith.addi %arg1, %c1_i32_67 : i32
      %c1_i32_68 = arith.constant 1 : i32
      %102 = arith.subi %c1_i32_68, %9 : i32
      %c18_i32 = arith.constant 18 : i32
      %103 = arith.muli %arg0, %c18_i32 : i32
      %c8_i32 = arith.constant 8 : i32
      %104 = arith.muli %101, %c8_i32 : i32
      %105 = arith.addi %103, %104 : i32
      %c24_i32 = arith.constant 24 : i32
      %106 = arith.muli %105, %c24_i32 : i32
      %c0_i32_69 = arith.constant 0 : i32
      %107 = tpu.memref_slice %arg3[%106, %c0_i32_69] : memref<864x128xf32, #tpu.memory_space<any>> -> memref<240x128xf32, #tpu.memory_space<any>>
      %c0_i32_70 = arith.constant 0 : i32
      %c0_i32_71 = arith.constant 0 : i32
      %108 = tpu.memref_slice %arg7[%102, %c0_i32_70, %c0_i32_71] : memref<2x240x128xf32, #tpu.memory_space<vmem>> -> memref<1x240x128xf32, #tpu.memory_space<vmem>>
      %109 = tpu.memref_squeeze %108 : memref<1x240x128xf32, #tpu.memory_space<vmem>> -> memref<240x128xf32, #tpu.memory_space<vmem>>
      %110 = tpu.memref_slice %arg8[%102] : memref<2x!tpu.dma_semaphore, #tpu.memory_space<semaphore_mem>> -> memref<1x!tpu.dma_semaphore, #tpu.memory_space<semaphore_mem>>
      %111 = tpu.memref_squeeze %110 : memref<1x!tpu.dma_semaphore, #tpu.memory_space<semaphore_mem>> -> memref<!tpu.dma_semaphore, #tpu.memory_space<semaphore_mem>>
      tpu.enqueue_dma source(%107 : memref<240x128xf32, #tpu.memory_space<any>>) target(%109 : memref<240x128xf32, #tpu.memory_space<vmem>>) target_semaphore(%111 : memref<!tpu.dma_semaphore, #tpu.memory_space<semaphore_mem>>)
    } else {
    }
    %24 = arith.index_cast %9 : i32 to index
    %c0 = arith.constant 0 : index
    %c0_12 = arith.constant 0 : index
    %25 = vector.load %arg7[%24, %c0, %c0_12] : memref<2x240x128xf32, #tpu.memory_space<vmem>>, vector<1x240x128xf32>
    %26 = vector.shape_cast %25 : vector<1x240x128xf32> to vector<240x128xf32>
    %cst = arith.constant 0.000000e+00 : f32
    %27 = vector.broadcast %cst : f32 to vector<8x16x128xf32>
    %28 = vector.extract_strided_slice %26 {offsets = [0, 0], sizes = [192, 128], strides = [1, 1]} : vector<240x128xf32> to vector<192x128xf32>
    %c0_13 = arith.constant 0 : index
    %c0_14 = arith.constant 0 : index
    %c0_15 = arith.constant 0 : index
    %c0_16 = arith.constant 0 : index
    %29 = vector.load %arg4[%c0_13, %c0_14, %c0_15, %c0_16] : memref<3x3x128x128xf32, #tpu.memory_space<vmem>>, vector<1x1x128x128xf32>
    %30 = vector.shape_cast %29 : vector<1x1x128x128xf32> to vector<128x128xf32>
    %cst_17 = arith.constant dense<0.000000e+00> : vector<192x128xf32>
    %31 = tpu.matmul %28, %30, %cst_17 {dimension_numbers = #tpu.dot_dimension_numbers<[1], [0], [0], [1], [0, 0, 1, 1], [], []>} : vector<192x128xf32>, vector<128x128xf32>, vector<192x128xf32> -> vector<192x128xf32>
    %32 = vector.shape_cast %31 : vector<192x128xf32> to vector<8x24x128xf32>
    %33 = vector.extract_strided_slice %32 {offsets = [0, 0, 0], sizes = [8, 16, 128], strides = [1, 1, 1]} : vector<8x24x128xf32> to vector<8x16x128xf32>
    %34 = arith.addf %27, %33 : vector<8x16x128xf32>
    %c0_18 = arith.constant 0 : index
    %c1 = arith.constant 1 : index
    %c0_19 = arith.constant 0 : index
    %c0_20 = arith.constant 0 : index
    %35 = vector.load %arg4[%c0_18, %c1, %c0_19, %c0_20] : memref<3x3x128x128xf32, #tpu.memory_space<vmem>>, vector<1x1x128x128xf32>
    %36 = vector.shape_cast %35 : vector<1x1x128x128xf32> to vector<128x128xf32>
    %cst_21 = arith.constant dense<0.000000e+00> : vector<192x128xf32>
    %37 = tpu.matmul %28, %36, %cst_21 {dimension_numbers = #tpu.dot_dimension_numbers<[1], [0], [0], [1], [0, 0, 1, 1], [], []>} : vector<192x128xf32>, vector<128x128xf32>, vector<192x128xf32> -> vector<192x128xf32>
    %38 = vector.shape_cast %37 : vector<192x128xf32> to vector<8x24x128xf32>
    %39 = vector.extract_strided_slice %38 {offsets = [0, 1, 0], sizes = [8, 16, 128], strides = [1, 1, 1]} : vector<8x24x128xf32> to vector<8x16x128xf32>
    %40 = arith.addf %34, %39 : vector<8x16x128xf32>
    %c0_22 = arith.constant 0 : index
    %c2 = arith.constant 2 : index
    %c0_23 = arith.constant 0 : index
    %c0_24 = arith.constant 0 : index
    %41 = vector.load %arg4[%c0_22, %c2, %c0_23, %c0_24] : memref<3x3x128x128xf32, #tpu.memory_space<vmem>>, vector<1x1x128x128xf32>
    %42 = vector.shape_cast %41 : vector<1x1x128x128xf32> to vector<128x128xf32>
    %cst_25 = arith.constant dense<0.000000e+00> : vector<192x128xf32>
    %43 = tpu.matmul %28, %42, %cst_25 {dimension_numbers = #tpu.dot_dimension_numbers<[1], [0], [0], [1], [0, 0, 1, 1], [], []>} : vector<192x128xf32>, vector<128x128xf32>, vector<192x128xf32> -> vector<192x128xf32>
    %44 = vector.shape_cast %43 : vector<192x128xf32> to vector<8x24x128xf32>
    %45 = vector.extract_strided_slice %44 {offsets = [0, 2, 0], sizes = [8, 16, 128], strides = [1, 1, 1]} : vector<8x24x128xf32> to vector<8x16x128xf32>
    %46 = arith.addf %40, %45 : vector<8x16x128xf32>
    %47 = vector.extract_strided_slice %26 {offsets = [24, 0], sizes = [192, 128], strides = [1, 1]} : vector<240x128xf32> to vector<192x128xf32>
    %c1_26 = arith.constant 1 : index
    %c0_27 = arith.constant 0 : index
    %c0_28 = arith.constant 0 : index
    %c0_29 = arith.constant 0 : index
    %48 = vector.load %arg4[%c1_26, %c0_27, %c0_28, %c0_29] : memref<3x3x128x128xf32, #tpu.memory_space<vmem>>, vector<1x1x128x128xf32>
    %49 = vector.shape_cast %48 : vector<1x1x128x128xf32> to vector<128x128xf32>
    %cst_30 = arith.constant dense<0.000000e+00> : vector<192x128xf32>
    %50 = tpu.matmul %47, %49, %cst_30 {dimension_numbers = #tpu.dot_dimension_numbers<[1], [0], [0], [1], [0, 0, 1, 1], [], []>} : vector<192x128xf32>, vector<128x128xf32>, vector<192x128xf32> -> vector<192x128xf32>
    %51 = vector.shape_cast %50 : vector<192x128xf32> to vector<8x24x128xf32>
    %52 = vector.extract_strided_slice %51 {offsets = [0, 0, 0], sizes = [8, 16, 128], strides = [1, 1, 1]} : vector<8x24x128xf32> to vector<8x16x128xf32>
    %53 = arith.addf %46, %52 : vector<8x16x128xf32>
    %c1_31 = arith.constant 1 : index
    %c1_32 = arith.constant 1 : index
    %c0_33 = arith.constant 0 : index
    %c0_34 = arith.constant 0 : index
    %54 = vector.load %arg4[%c1_31, %c1_32, %c0_33, %c0_34] : memref<3x3x128x128xf32, #tpu.memory_space<vmem>>, vector<1x1x128x128xf32>
    %55 = vector.shape_cast %54 : vector<1x1x128x128xf32> to vector<128x128xf32>
    %cst_35 = arith.constant dense<0.000000e+00> : vector<192x128xf32>
    %56 = tpu.matmul %47, %55, %cst_35 {dimension_numbers = #tpu.dot_dimension_numbers<[1], [0], [0], [1], [0, 0, 1, 1], [], []>} : vector<192x128xf32>, vector<128x128xf32>, vector<192x128xf32> -> vector<192x128xf32>
    %57 = vector.shape_cast %56 : vector<192x128xf32> to vector<8x24x128xf32>
    %58 = vector.extract_strided_slice %57 {offsets = [0, 1, 0], sizes = [8, 16, 128], strides = [1, 1, 1]} : vector<8x24x128xf32> to vector<8x16x128xf32>
    %59 = arith.addf %53, %58 : vector<8x16x128xf32>
    %c1_36 = arith.constant 1 : index
    %c2_37 = arith.constant 2 : index
    %c0_38 = arith.constant 0 : index
    %c0_39 = arith.constant 0 : index
    %60 = vector.load %arg4[%c1_36, %c2_37, %c0_38, %c0_39] : memref<3x3x128x128xf32, #tpu.memory_space<vmem>>, vector<1x1x128x128xf32>
    %61 = vector.shape_cast %60 : vector<1x1x128x128xf32> to vector<128x128xf32>
    %cst_40 = arith.constant dense<0.000000e+00> : vector<192x128xf32>
    %62 = tpu.matmul %47, %61, %cst_40 {dimension_numbers = #tpu.dot_dimension_numbers<[1], [0], [0], [1], [0, 0, 1, 1], [], []>} : vector<192x128xf32>, vector<128x128xf32>, vector<192x128xf32> -> vector<192x128xf32>
    %63 = vector.shape_cast %62 : vector<192x128xf32> to vector<8x24x128xf32>
    %64 = vector.extract_strided_slice %63 {offsets = [0, 2, 0], sizes = [8, 16, 128], strides = [1, 1, 1]} : vector<8x24x128xf32> to vector<8x16x128xf32>
    %65 = arith.addf %59, %64 : vector<8x16x128xf32>
    %66 = vector.extract_strided_slice %26 {offsets = [48, 0], sizes = [192, 128], strides = [1, 1]} : vector<240x128xf32> to vector<192x128xf32>
    %c2_41 = arith.constant 2 : index
    %c0_42 = arith.constant 0 : index
    %c0_43 = arith.constant 0 : index
    %c0_44 = arith.constant 0 : index
    %67 = vector.load %arg4[%c2_41, %c0_42, %c0_43, %c0_44] : memref<3x3x128x128xf32, #tpu.memory_space<vmem>>, vector<1x1x128x128xf32>
    %68 = vector.shape_cast %67 : vector<1x1x128x128xf32> to vector<128x128xf32>
    %cst_45 = arith.constant dense<0.000000e+00> : vector<192x128xf32>
    %69 = tpu.matmul %66, %68, %cst_45 {dimension_numbers = #tpu.dot_dimension_numbers<[1], [0], [0], [1], [0, 0, 1, 1], [], []>} : vector<192x128xf32>, vector<128x128xf32>, vector<192x128xf32> -> vector<192x128xf32>
    %70 = vector.shape_cast %69 : vector<192x128xf32> to vector<8x24x128xf32>
    %71 = vector.extract_strided_slice %70 {offsets = [0, 0, 0], sizes = [8, 16, 128], strides = [1, 1, 1]} : vector<8x24x128xf32> to vector<8x16x128xf32>
    %72 = arith.addf %65, %71 : vector<8x16x128xf32>
    %c2_46 = arith.constant 2 : index
    %c1_47 = arith.constant 1 : index
    %c0_48 = arith.constant 0 : index
    %c0_49 = arith.constant 0 : index
    %73 = vector.load %arg4[%c2_46, %c1_47, %c0_48, %c0_49] : memref<3x3x128x128xf32, #tpu.memory_space<vmem>>, vector<1x1x128x128xf32>
    %74 = vector.shape_cast %73 : vector<1x1x128x128xf32> to vector<128x128xf32>
    %cst_50 = arith.constant dense<0.000000e+00> : vector<192x128xf32>
    %75 = tpu.matmul %66, %74, %cst_50 {dimension_numbers = #tpu.dot_dimension_numbers<[1], [0], [0], [1], [0, 0, 1, 1], [], []>} : vector<192x128xf32>, vector<128x128xf32>, vector<192x128xf32> -> vector<192x128xf32>
    %76 = vector.shape_cast %75 : vector<192x128xf32> to vector<8x24x128xf32>
    %77 = vector.extract_strided_slice %76 {offsets = [0, 1, 0], sizes = [8, 16, 128], strides = [1, 1, 1]} : vector<8x24x128xf32> to vector<8x16x128xf32>
    %78 = arith.addf %72, %77 : vector<8x16x128xf32>
    %c2_51 = arith.constant 2 : index
    %c2_52 = arith.constant 2 : index
    %c0_53 = arith.constant 0 : index
    %c0_54 = arith.constant 0 : index
    %79 = vector.load %arg4[%c2_51, %c2_52, %c0_53, %c0_54] : memref<3x3x128x128xf32, #tpu.memory_space<vmem>>, vector<1x1x128x128xf32>
    %80 = vector.shape_cast %79 : vector<1x1x128x128xf32> to vector<128x128xf32>
    %cst_55 = arith.constant dense<0.000000e+00> : vector<192x128xf32>
    %81 = tpu.matmul %66, %80, %cst_55 {dimension_numbers = #tpu.dot_dimension_numbers<[1], [0], [0], [1], [0, 0, 1, 1], [], []>} : vector<192x128xf32>, vector<128x128xf32>, vector<192x128xf32> -> vector<192x128xf32>
    %82 = vector.shape_cast %81 : vector<192x128xf32> to vector<8x24x128xf32>
    %83 = vector.extract_strided_slice %82 {offsets = [0, 2, 0], sizes = [8, 16, 128], strides = [1, 1, 1]} : vector<8x24x128xf32> to vector<8x16x128xf32>
    %84 = arith.addf %78, %83 : vector<8x16x128xf32>
    %85 = vector.shape_cast %84 : vector<8x16x128xf32> to vector<1x8x16x128xf32>
    %c0_56 = arith.constant 0 : index
    %c0_57 = arith.constant 0 : index
    %c0_58 = arith.constant 0 : index
    %c0_59 = arith.constant 0 : index
    %86 = vector.load %arg5[%c0_56, %c0_57, %c0_58, %c0_59] : memref<1x8x16x128xf32, #tpu.memory_space<vmem>>, vector<1x8x16x128xf32>
    tpu.vector_store %arg5[%c0_56, %c0_57, %c0_58, %c0_59], %85 {strides = array<i32>} : memref<1x8x16x128xf32, #tpu.memory_space<vmem>>, vector<1x8x16x128xf32>,
    %cst_60 = arith.constant dense<0.000000e+00> : vector<128xf32>
    %87 = vector.multi_reduction <add>, %84, %cst_60 [0, 1] : vector<8x16x128xf32> to vector<128xf32>
    %88 = vector.shape_cast %87 : vector<128xf32> to vector<1x1x128xf32>
    %cst_61 = arith.constant 7.812500e-03 : f32
    %89 = vector.broadcast %cst_61 : f32 to vector<1x1x128xf32>
    %90 = arith.mulf %88, %89 : vector<1x1x128xf32>
    %91 = vector.broadcast %90 : vector<1x1x128xf32> to vector<8x16x128xf32>
    %92 = arith.subf %84, %91 : vector<8x16x128xf32>
    %93 = arith.mulf %92, %92 : vector<8x16x128xf32>
    %cst_62 = arith.constant dense<0.000000e+00> : vector<128xf32>
    %94 = vector.multi_reduction <add>, %93, %cst_62 [0, 1] : vector<8x16x128xf32> to vector<128xf32>
    %95 = vector.shape_cast %94 : vector<128xf32> to vector<1x1x128xf32>
    %96 = vector.shape_cast %88 : vector<1x1x128xf32> to vector<1x128xf32>
    %97 = vector.shape_cast %95 : vector<1x1x128xf32> to vector<1x128xf32>
    %98 = tpu.concatenate %96, %97 in 0 : vector<1x128xf32>, vector<1x128xf32> -> vector<2x128xf32>
    %99 = vector.shape_cast %98 : vector<2x128xf32> to vector<1x1x2x128xf32>
    %c0_63 = arith.constant 0 : index
    %c0_64 = arith.constant 0 : index
    %c0_65 = arith.constant 0 : index
    %c0_66 = arith.constant 0 : index
    %100 = vector.load %arg6[%c0_63, %c0_64, %c0_65, %c0_66] : memref<1x1x2x128xf32, #tpu.memory_space<vmem>>, vector<1x1x2x128xf32>
    tpu.vector_store %arg6[%c0_63, %c0_64, %c0_65, %c0_66], %99 {strides = array<i32>} : memref<1x1x2x128xf32, #tpu.memory_space<vmem>>, vector<1x1x2x128xf32>,
    return
  }
  func.func @transform_1(%arg0: i32, %arg1: i32, %arg2: i32) -> (i32, i32, i32, i32) {
    %c0_i32 = arith.constant 0 : i32
    %c0_i32_0 = arith.constant 0 : i32
    %c0_i32_1 = arith.constant 0 : i32
    %c0_i32_2 = arith.constant 0 : i32
    return %c0_i32, %c0_i32_0, %c0_i32_1, %arg2 : i32, i32, i32, i32
  }
  func.func @transform_2(%arg0: i32, %arg1: i32, %arg2: i32) -> (i32, i32, i32, i32) {
    %c0_i32 = arith.constant 0 : i32
    %c0_i32_0 = arith.constant 0 : i32
    return %arg0, %arg1, %c0_i32, %arg2 : i32, i32, i32, i32
  }
  func.func @transform_3(%arg0: i32, %arg1: i32, %arg2: i32) -> (i32, i32, i32, i32) {
    %c0_i32 = arith.constant 0 : i32
    %c0_i32_0 = arith.constant 0 : i32
    return %arg0, %arg1, %c0_i32, %arg2 : i32, i32, i32, i32
  }
}

module attributes {stable_mosaic.version = 11 : i64} {
  func.func @kernel(%arg0: i32, %arg1: i32, %arg2: i32, %arg3: memref<1x8x16x128xf32, #tpu.memory_space<vmem>>, %arg4: memref<1x128xf32, #tpu.memory_space<vmem>>, %arg5: memref<1x128xf32, #tpu.memory_space<vmem>>, %arg6: memref<1x8x16x128xf32, #tpu.memory_space<vmem>>) attributes {dimension_semantics = [#tpu.dimension_semantics<parallel>, #tpu.dimension_semantics<parallel>, #tpu.dimension_semantics<parallel>], iteration_bounds = array<i64: 2, 2, 1>, scalar_prefetch = 0 : i64, scratch_operands = 0 : i64, tpu.core_type = #tpu.core_type<tc>, window_params = [{transform_indices = @transform_0, window_bounds = array<i64: 1, 8, 16, 128>}, {transform_indices = @transform_1, window_bounds = array<i64: 1, 128>}, {transform_indices = @transform_2, window_bounds = array<i64: 1, 128>}, {transform_indices = @transform_3, window_bounds = array<i64: 1, 8, 16, 128>}]} {
    %c0 = arith.constant 0 : index
    %c0_0 = arith.constant 0 : index
    %c0_1 = arith.constant 0 : index
    %c0_2 = arith.constant 0 : index
    %0 = vector.load %arg3[%c0, %c0_0, %c0_1, %c0_2] : memref<1x8x16x128xf32, #tpu.memory_space<vmem>>, vector<1x8x16x128xf32>
    %c0_3 = arith.constant 0 : index
    %c0_4 = arith.constant 0 : index
    %1 = vector.load %arg4[%c0_3, %c0_4] : memref<1x128xf32, #tpu.memory_space<vmem>>, vector<1x128xf32>
    %2 = vector.shape_cast %1 : vector<1x128xf32> to vector<1x1x1x128xf32>
    %c0_5 = arith.constant 0 : index
    %c0_6 = arith.constant 0 : index
    %3 = vector.load %arg5[%c0_5, %c0_6] : memref<1x128xf32, #tpu.memory_space<vmem>>, vector<1x128xf32>
    %4 = vector.shape_cast %3 : vector<1x128xf32> to vector<1x1x1x128xf32>
    %5 = vector.broadcast %2 : vector<1x1x1x128xf32> to vector<1x8x16x128xf32>
    %6 = arith.mulf %0, %5 : vector<1x8x16x128xf32>
    %7 = vector.broadcast %4 : vector<1x1x1x128xf32> to vector<1x8x16x128xf32>
    %8 = arith.addf %6, %7 : vector<1x8x16x128xf32>
    %cst = arith.constant 0.000000e+00 : f32
    %9 = vector.broadcast %cst : f32 to vector<1x8x16x128xf32>
    %10 = arith.cmpf ogt, %8, %9 : vector<1x8x16x128xf32>
    %cst_7 = arith.constant 1.000000e-01 : f32
    %11 = vector.broadcast %cst_7 : f32 to vector<1x8x16x128xf32>
    %12 = arith.mulf %11, %8 : vector<1x8x16x128xf32>
    %13 = arith.select %10, %8, %12 : vector<1x8x16x128xi1>, vector<1x8x16x128xf32>
    %c0_8 = arith.constant 0 : index
    %c0_9 = arith.constant 0 : index
    %c0_10 = arith.constant 0 : index
    %c0_11 = arith.constant 0 : index
    %14 = vector.load %arg6[%c0_8, %c0_9, %c0_10, %c0_11] : memref<1x8x16x128xf32, #tpu.memory_space<vmem>>, vector<1x8x16x128xf32>
    tpu.vector_store %arg6[%c0_8, %c0_9, %c0_10, %c0_11], %13 {strides = array<i32>} : memref<1x8x16x128xf32, #tpu.memory_space<vmem>>, vector<1x8x16x128xf32>,
    return
  }
  func.func @transform_0(%arg0: i32, %arg1: i32, %arg2: i32) -> (i32, i32, i32, i32) {
    %c0_i32 = arith.constant 0 : i32
    %c0_i32_0 = arith.constant 0 : i32
    return %arg0, %arg1, %c0_i32, %arg2 : i32, i32, i32, i32
  }
  func.func @transform_1(%arg0: i32, %arg1: i32, %arg2: i32) -> (i32, i32) {
    %c0_i32 = arith.constant 0 : i32
    %c0_i32_0 = arith.constant 0 : i32
    return %c0_i32, %arg2 : i32, i32
  }
  func.func @transform_2(%arg0: i32, %arg1: i32, %arg2: i32) -> (i32, i32) {
    %c0_i32 = arith.constant 0 : i32
    %c0_i32_0 = arith.constant 0 : i32
    return %c0_i32, %arg2 : i32, i32
  }
  func.func @transform_3(%arg0: i32, %arg1: i32, %arg2: i32) -> (i32, i32, i32, i32) {
    %c0_i32 = arith.constant 0 : i32
    %c0_i32_0 = arith.constant 0 : i32
    return %arg0, %arg1, %c0_i32, %arg2 : i32, i32, i32, i32
  }
}

</mosaic_0001>

<llo_original>
// kernel: cnn_block.3
$region0: #{cnn_block.3}
  #allocation0 [shape = 'u32[]', space=smem, size = 0x4, offset = 0x4, fixed_abs, tag = 'smem constant byte address 0x4 - core index']
  #allocation1 [shape = 'u32[144,128]{1,0:T(1,128)}', space=vmem, size = 0x12000, scoped, tag = 'internal scratch']
  %s0 = inlined_call_operand.vmem [shape: f32[2,16,16,128], index: 0, kind: input, shape index: {}]
  %s1 = inlined_call_operand.vmem [shape: f32[1,128], index: 1, kind: input, shape index: {}]
  %s2 = inlined_call_operand.vmem [shape: f32[1,128], index: 2, kind: input, shape index: {}]
  %s3 = inlined_call_operand.vmem [shape: f32[2,16,16,128], index: 3, kind: output, shape index: {}]
  %s4 = sld [smem:[#allocation0]]
  $region45: #{cnn_block.3} parent=0
    _
  %s6 = ssub.s32 1, %s4
  %s7 = scalar_select 0, %s6, %s4
  loop: start=0, step=1, limit=6
  $region2: #{cnn_block.3} parent=0 // loop_pre_header
    _
  $region3: #{cnn_block.3} parent=0 // loop_header
    %s9 = sphi 0, %s13
    %p10 = scmp.ge.s32.totalorder %s9, 6
    %s16 = sphi 0, %s35
    %s17 = sphi 0, %s31
    %s18 = sphi 0, %s27
    %s19 = sphi 0, %s16
    %s20 = sphi 0, %s17
    %s21 = sphi 0, %s18
    %s22 = sphi 0, %s19
    %s23 = sphi 0, %s20
    %s24 = sphi 0, %s21
    %s42 = sphi 0, %s44
    %s45 = sphi 0, %s42
    %s46 = sphi 0, %s45
    %s62 = sphi 0, %s46
    %s68 = sphi 0, %s70
    %s71 = sphi 0, %s68
    %s72 = sphi 0, %s71
    %s88 = sphi 0, %s72
    %s94 = sphi 0, %s96
    %s97 = sphi 0, %s94
    %s98 = sphi 0, %s97
    %s114 = sphi 0, %s98
    %s124 = sphi 0, %s126
    %s127 = sphi 0, %s124
    %s128 = sphi 0, %s127
    %s144 = sphi 0, %s128
  $region4: #{cnn_block.3} parent=0 // loop_header_branch
    %12 = sbr.rel (%p10) target = $region8
  $region5: #{cnn_block.3} parent=0 // loop_body
    %s14 = ssub.s32 %s9, 1
    %s15 = ssub.s32 %s9, 2
    %s25 = sadd.s32 1, %s18
    %p26 = scmp.ge.s32.totalorder %s25, 1
    %s27 = scalar_select %p26, 0, %s25
    %s28 = sadd.s32 1, %s17
    %s29 = scalar_select %p26, %s28, %s17
    %p30 = scmp.ge.s32.totalorder %s29, 2
    %s31 = scalar_select %p30, 0, %s29
    %s32 = sadd.s32 1, %s16
    %s33 = scalar_select %p30, %s32, %s16
    %p34 = scmp.ge.s32.totalorder %s33, 2
    %s35 = scalar_select %p34, 0, %s33
    %s36 = ssub.s32 %s16, %s35
    %s37 = ssub.s32 %s17, %s31
    %s38 = sor.u32 %s36, %s37
    %s39 = ssub.s32 %s18, %s27
    %s40 = sor.u32 %s38, %s39
    %p41 = scmp.eq.s32.totalorder %s40, 0
    %s43 = sadd.s32 %s42, 1
    %s44 = scalar_select %p41, %s42, %s43
    %p47 = pneg %p41
    %p48 = scmp.eq.s32.totalorder %s9, 3
    %p49 = por %p47, %p48
    %p50 = scmp.ne.s32.totalorder %s42, %s45
    %p51 = scmp.eq.s32.totalorder %s9, 0
    %p52 = por %p50, %p51
    %p53 = scmp.ne.s32.totalorder %s42, %s45
    %p54 = scmp.eq.s32.totalorder %s14, 3
    %p55 = por %p53, %p54
    %p56 = scmp.ne.s32.totalorder %s45, %s46
    %p57 = scmp.eq.s32.totalorder %s14, 0
    %p58 = por %p56, %p57
    %p59 = scmp.ne.s32.totalorder %s45, %s46
    %p60 = scmp.eq.s32.totalorder %s15, 3
    %p61 = por %p59, %p60
    %p63 = scmp.ne.s32.totalorder %s46, %s62
    %p64 = scmp.eq.s32.totalorder %s15, 0
    %p65 = por %p63, %p64
    %s66 = ssub.s32 %s18, %s27
    %p67 = scmp.eq.s32.totalorder %s66, 0
    %s69 = sadd.s32 %s68, 1
    %s70 = scalar_select %p67, %s68, %s69
    %p73 = pneg %p67
    %p74 = scmp.eq.s32.totalorder %s9, 3
    %p75 = por %p73, %p74
    %p76 = scmp.ne.s32.totalorder %s68, %s71
    %p77 = scmp.eq.s32.totalorder %s9, 0
    %p78 = por %p76, %p77
    %p79 = scmp.ne.s32.totalorder %s68, %s71
    %p80 = scmp.eq.s32.totalorder %s14, 3
    %p81 = por %p79, %p80
    %p82 = scmp.ne.s32.totalorder %s71, %s72
    %p83 = scmp.eq.s32.totalorder %s14, 0
    %p84 = por %p82, %p83
    %p85 = scmp.ne.s32.totalorder %s71, %s72
    %p86 = scmp.eq.s32.totalorder %s15, 3
    %p87 = por %p85, %p86
    %p89 = scmp.ne.s32.totalorder %s72, %s88
    %p90 = scmp.eq.s32.totalorder %s15, 0
    %p91 = por %p89, %p90
    %s92 = ssub.s32 %s18, %s27
    %p93 = scmp.eq.s32.totalorder %s92, 0
    %s95 = sadd.s32 %s94, 1
    %s96 = scalar_select %p93, %s94, %s95
    %p99 = pneg %p93
    %p100 = scmp.eq.s32.totalorder %s9, 3
    %p101 = por %p99, %p100
    %p102 = scmp.ne.s32.totalorder %s94, %s97
    %p103 = scmp.eq.s32.totalorder %s9, 0
    %p104 = por %p102, %p103
    %p105 = scmp.ne.s32.totalorder %s94, %s97
    %p106 = scmp.eq.s32.totalorder %s14, 3
    %p107 = por %p105, %p106
    %p108 = scmp.ne.s32.totalorder %s97, %s98
    %p109 = scmp.eq.s32.totalorder %s14, 0
    %p110 = por %p108, %p109
    %p111 = scmp.ne.s32.totalorder %s97, %s98
    %p112 = scmp.eq.s32.totalorder %s15, 3
    %p113 = por %p111, %p112
    %p115 = scmp.ne.s32.totalorder %s98, %s114
    %p116 = scmp.eq.s32.totalorder %s15, 0
    %p117 = por %p115, %p116
    %s118 = ssub.s32 %s16, %s35
    %s119 = ssub.s32 %s17, %s31
    %s120 = sor.u32 %s118, %s119
    %s121 = ssub.s32 %s18, %s27
    %s122 = sor.u32 %s120, %s121
    %p123 = scmp.eq.s32.totalorder %s122, 0
    %s125 = sadd.s32 %s124, 1
    %s126 = scalar_select %p123, %s124, %s125
    %p129 = pneg %p123
    %p130 = scmp.eq.s32.totalorder %s9, 3
    %p131 = por %p129, %p130
    %p132 = scmp.ne.s32.totalorder %s124, %s127
    %p133 = scmp.eq.s32.totalorder %s9, 0
    %p134 = por %p132, %p133
    %p135 = scmp.ne.s32.totalorder %s124, %s127
    %p136 = scmp.eq.s32.totalorder %s14, 3
    %p137 = por %p135, %p136
    %p138 = scmp.ne.s32.totalorder %s127, %s128
    %p139 = scmp.eq.s32.totalorder %s14, 0
    %p140 = por %p138, %p139
    %p141 = scmp.ne.s32.totalorder %s127, %s128
    %p142 = scmp.eq.s32.totalorder %s15, 3
    %p143 = por %p141, %p142
    %p145 = scmp.ne.s32.totalorder %s128, %s144
    %p146 = scmp.eq.s32.totalorder %s15, 0
    %p147 = por %p145, %p146
    %p148 = scmp.le.s32.totalorder 1, %s9
    %p149 = scmp.lt.s32.totalorder %s9, 5
    %p150 = pnand %p148, %p149
    %p151 = pneg %p150
    // Predicated region
    $region9: #{cnn_block.3} parent=5 // pred_check
      _
    $region10: #{cnn_block.3} parent=5 // pred_check_branch
      %153 = sbr.rel (%p150) target = $region12
    $region11: #{cnn_block.3} parent=5 // pred_region
      %s154 = ssub.s32 %s9, 1
      // Predicated region
      $region13: #{cnn_block.3} parent=11 // pred_check
        %p155 = pneg %p84
      $region14: #{cnn_block.3} parent=11 // pred_check_branch
        %157 = sbr.rel (%p155) target = $region16
      $region15: #{cnn_block.3} parent=11 // pred_region
        %p158 = scmp.lt.s32.totalorder %s21, 0
        %s159 = scalar_select %p158, %s21, 0
        %s160 = scalar_lea.vmem %s1, %s159
      $region16: #{cnn_block.3} parent=11 // pred_fallthru
        _
      // Predicated region
      $region17: #{cnn_block.3} parent=11 // pred_check
        %p161 = pneg %p110
      $region18: #{cnn_block.3} parent=11 // pred_check_branch
        %163 = sbr.rel (%p161) target = $region20
      $region19: #{cnn_block.3} parent=11 // pred_region
        %p164 = scmp.lt.s32.totalorder %s21, 0
        %s165 = scalar_select %p164, %s21, 0
        %s166 = scalar_lea.vmem %s2, %s165
      $region20: #{cnn_block.3} parent=11 // pred_fallthru
        _
    $region12: #{cnn_block.3} parent=5 // pred_fallthru
      _
    %p167 = scmp.lt.s32.totalorder %s9, 4
    // Predicated region
    $region21: #{cnn_block.3} parent=5 // pred_check
      %p168 = pneg %p167
    $region22: #{cnn_block.3} parent=5 // pred_check_branch
      %170 = sbr.rel (%p168) target = $region24
    $region23: #{cnn_block.3} parent=5 // pred_region
      // Predicated region
      $region25: #{cnn_block.3} parent=23 // pred_check
        %p171 = pneg %p52
      $region26: #{cnn_block.3} parent=23 // pred_check_branch
        %173 = sbr.rel (%p171) target = $region28
      $region27: #{cnn_block.3} parent=23 // pred_region
        %s174 = smul.u32 8, %s17
        %p175 = scmp.lt.s32.totalorder %s16, 1
        %s176 = scalar_select %p175, %s16, 1
        %p177 = scmp.lt.s32.totalorder %s174, 15
        %s178 = scalar_select %p177, %s174, 15
        %p179 = scmp.lt.s32.totalorder %s18, 0
        %s180 = scalar_select %p179, %s18, 0
        %s181 = smul.addr %s178, 2
        %s182 = sadd.s32 %s180, %s181
        %s183 = smul.addr %s176, 32
        %s184 = sadd.s32 %s182, %s183
        %s185 = smul.addr %s184, 8
        %s186 = scalar_lea.vmem %s0, %s185
        %s187 = smul.u32 8, %s17
      $region28: #{cnn_block.3} parent=23 // pred_fallthru
        _
    $region24: #{cnn_block.3} parent=5 // pred_fallthru
      _
    %p188 = scmp.le.s32.totalorder 1, %s9
    %p189 = scmp.lt.s32.totalorder %s9, 5
    %p190 = pnand %p188, %p189
    %p191 = pneg %p190
    // Predicated region
    $region29: #{cnn_block.3} parent=5 // pred_check
      _
    $region30: #{cnn_block.3} parent=5 // pred_check_branch
      %193 = sbr.rel (%p190) target = $region32
    $region31: #{cnn_block.3} parent=5 // pred_region
      %s194 = ssub.s32 %s9, 1
      %s195 = smul.u32 8, %s20
      %p196 = scmp.lt.s32.totalorder %s19, 1
      %s197 = scalar_select %p196, %s19, 1
      %p198 = scmp.lt.s32.totalorder %s195, 15
      %s199 = scalar_select %p198, %s195, 15
      %p200 = scmp.lt.s32.totalorder %s21, 0
      %s201 = scalar_select %p200, %s21, 0
      %s202 = smul.addr %s199, 2
      %s203 = sadd.s32 %s201, %s202
      %s204 = smul.addr %s197, 32
      %s205 = sadd.s32 %s203, %s204
      %s206 = smul.addr %s205, 8
      %s207 = scalar_lea.vmem %s0, %s206
      %p208 = pneg %p58
      %p209 = pneg %p55
      %p210 = scmp.lt.s32.totalorder %s21, 0
      %s211 = scalar_select %p210, %s21, 0
      %s212 = scalar_lea.vmem %s1, %s211
      %p213 = pneg %p84
      %p214 = pneg %p81
      %p215 = scmp.lt.s32.totalorder %s21, 0
      %s216 = scalar_select %p215, %s21, 0
      %s217 = scalar_lea.vmem %s2, %s216
      %p218 = pneg %p110
      %p219 = pneg %p107
      %p220 = pneg %p140
      %p221 = pneg %p137
      %s222 = smul.u32 8, %s20
      %p223 = scmp.lt.s32.totalorder %s19, 1
      %s224 = scalar_select %p223, %s19, 1
      %p225 = scmp.lt.s32.totalorder %s222, 15
      %s226 = scalar_select %p225, %s222, 15
      %p227 = scmp.lt.s32.totalorder %s21, 0
      %s228 = scalar_select %p227, %s21, 0
      %s229 = smul.addr %s226, 2
      %s230 = sadd.s32 %s228, %s229
      %s231 = smul.addr %s224, 32
      %s232 = sadd.s32 %s230, %s231
      %s233 = smul.addr %s232, 8
      %s234 = scalar_lea.vmem %s3, %s233
      %s235 = smul.u32 8, %s20
      %p236 = scmp.lt.s32.totalorder %s19, 1
      %s237 = scalar_select %p236, %s19, 1
      %p238 = scmp.lt.s32.totalorder %s235, 15
      %s239 = scalar_select %p238, %s235, 15
      %p240 = scmp.lt.s32.totalorder %s21, 0
      %s241 = scalar_select %p240, %s21, 0
      %s242 = smul.addr %s239, 2
      %s243 = sadd.s32 %s241, %s242
      %s244 = smul.addr %s237, 32
      %s245 = sadd.s32 %s243, %s244
      %s246 = smul.addr %s245, 8
      %s247 = scalar_lea.vmem %s0, %s246
      %s248 = smul.u32 8, %s20
      %p249 = scmp.lt.s32.totalorder %s21, 0
      %s250 = scalar_select %p249, %s21, 0
      %s251 = scalar_lea.vmem %s1, %s250
      %p252 = scmp.lt.s32.totalorder %s21, 0
      %s253 = scalar_select %p252, %s21, 0
      %s254 = scalar_lea.vmem %s2, %s253
      %s255 = smul.u32 8, %s20
      %p256 = scmp.lt.s32.totalorder %s19, 1
      %s257 = scalar_select %p256, %s19, 1
      %p258 = scmp.lt.s32.totalorder %s255, 15
      %s259 = scalar_select %p258, %s255, 15
      %p260 = scmp.lt.s32.totalorder %s21, 0
      %s261 = scalar_select %p260, %s21, 0
      %s262 = smul.addr %s259, 2
      %s263 = sadd.s32 %s261, %s262
      %s264 = smul.addr %s257, 32
      %s265 = sadd.s32 %s263, %s264
      %s266 = smul.addr %s265, 8
      %s267 = scalar_lea.vmem %s3, %s266
      %s268 = smul.u32 8, %s20
      %v269 = vld [vmem:[%s247] sm:$0xff]
      %v270 = vld [vmem:[%s247 + $0x8] sm:$0xff]
      %v271 = vld [vmem:[%s247 + $0x10] sm:$0xff]
      %v272 = vld [vmem:[%s247 + $0x18] sm:$0xff]
      %v273 = vld [vmem:[%s247 + $0x20] sm:$0xff]
      %v274 = vld [vmem:[%s247 + $0x28] sm:$0xff]
      %v275 = vld [vmem:[%s247 + $0x30] sm:$0xff]
      %v276 = vld [vmem:[%s247 + $0x38] sm:$0xff]
      %v277 = vld [vmem:[%s247 + $0x40] sm:$0xff]
      %v278 = vld [vmem:[%s247 + $0x48] sm:$0xff]
      %v279 = vld [vmem:[%s247 + $0x50] sm:$0xff]
      %v280 = vld [vmem:[%s247 + $0x58] sm:$0xff]
      %v281 = vld [vmem:[%s247 + $0x60] sm:$0xff]
      %v282 = vld [vmem:[%s247 + $0x68] sm:$0xff]
      %v283 = vld [vmem:[%s247 + $0x70] sm:$0xff]
      %v284 = vld [vmem:[%s247 + $0x78] sm:$0xff]
      %v285 = vld [vmem:[%s251] sm:$0x1]
      %v286 = vld [vmem:[%s254] sm:$0x1]
      %v288 = vlaneseq
      %v289 = vshrl.u32 %v288, 7
      %v290 = vsub.s32 0, %v289
      %v291 = vrot.slane %v285, %v290
      %v293 = vmul.f32 %v269, %v291
      %v294 = vmul.f32 %v270, %v291
      %v295 = vmul.f32 %v271, %v291
      %v296 = vmul.f32 %v272, %v291
      %v297 = vmul.f32 %v273, %v291
      %v298 = vmul.f32 %v274, %v291
      %v299 = vmul.f32 %v275, %v291
      %v300 = vmul.f32 %v276, %v291
      %v301 = vmul.f32 %v277, %v291
      %v302 = vmul.f32 %v278, %v291
      %v303 = vmul.f32 %v279, %v291
      %v304 = vmul.f32 %v280, %v291
      %v305 = vmul.f32 %v281, %v291
      %v306 = vmul.f32 %v282, %v291
      %v307 = vmul.f32 %v283, %v291
      %v308 = vmul.f32 %v284, %v291
      %v310 = vlaneseq
      %v311 = vshrl.u32 %v310, 7
      %v312 = vsub.s32 0, %v311
      %v313 = vrot.slane %v286, %v312
      %v315 = vadd.f32 %v293, %v313
      %v316 = vadd.f32 %v294, %v313
      %v317 = vadd.f32 %v295, %v313
      %v318 = vadd.f32 %v296, %v313
      %v319 = vadd.f32 %v297, %v313
      %v320 = vadd.f32 %v298, %v313
      %v321 = vadd.f32 %v299, %v313
      %v322 = vadd.f32 %v300, %v313
      %v323 = vadd.f32 %v301, %v313
      %v324 = vadd.f32 %v302, %v313
      %v325 = vadd.f32 %v303, %v313
      %v326 = vadd.f32 %v304, %v313
      %v327 = vadd.f32 %v305, %v313
      %v328 = vadd.f32 %v306, %v313
      %v329 = vadd.f32 %v307, %v313
      %v330 = vadd.f32 %v308, %v313
      %vm331 = vcmp.gt.f32.partialorder %v315, 0.0
      %vm332 = vcmp.gt.f32.partialorder %v316, 0.0
      %vm333 = vcmp.gt.f32.partialorder %v317, 0.0
      %vm334 = vcmp.gt.f32.partialorder %v318, 0.0
      %vm335 = vcmp.gt.f32.partialorder %v319, 0.0
      %vm336 = vcmp.gt.f32.partialorder %v320, 0.0
      %vm337 = vcmp.gt.f32.partialorder %v321, 0.0
      %vm338 = vcmp.gt.f32.partialorder %v322, 0.0
      %vm339 = vcmp.gt.f32.partialorder %v323, 0.0
      %vm340 = vcmp.gt.f32.partialorder %v324, 0.0
      %vm341 = vcmp.gt.f32.partialorder %v325, 0.0
      %vm342 = vcmp.gt.f32.partialorder %v326, 0.0
      %vm343 = vcmp.gt.f32.partialorder %v327, 0.0
      %vm344 = vcmp.gt.f32.partialorder %v328, 0.0
      %vm345 = vcmp.gt.f32.partialorder %v329, 0.0
      %vm346 = vcmp.gt.f32.partialorder %v330, 0.0
      %v347 = vmul.f32 %v315, 0.1
      %v348 = vmul.f32 %v316, 0.1
      %v349 = vmul.f32 %v317, 0.1
      %v350 = vmul.f32 %v318, 0.1
      %v351 = vmul.f32 %v319, 0.1
      %v352 = vmul.f32 %v320, 0.1
      %v353 = vmul.f32 %v321, 0.1
      %v354 = vmul.f32 %v322, 0.1
      %v355 = vmul.f32 %v323, 0.1
      %v356 = vmul.f32 %v324, 0.1
      %v357 = vmul.f32 %v325, 0.1
      %v358 = vmul.f32 %v326, 0.1
      %v359 = vmul.f32 %v327, 0.1
      %v360 = vmul.f32 %v328, 0.1
      %v361 = vmul.f32 %v329, 0.1
      %v362 = vmul.f32 %v330, 0.1
      %v363 = vsel %vm331, %v315, %v347
      %v364 = vsel %vm332, %v316, %v348
      %v365 = vsel %vm333, %v317, %v349
      %v366 = vsel %vm334, %v318, %v350
      %v367 = vsel %vm335, %v319, %v351
      %v368 = vsel %vm336, %v320, %v352
      %v369 = vsel %vm337, %v321, %v353
      %v370 = vsel %vm338, %v322, %v354
      %v371 = vsel %vm339, %v323, %v355
      %v372 = vsel %vm340, %v324, %v356
      %v373 = vsel %vm341, %v325, %v357
      %v374 = vsel %vm342, %v326, %v358
      %v375 = vsel %vm343, %v327, %v359
      %v376 = vsel %vm344, %v328, %v360
      %v377 = vsel %vm345, %v329, %v361
      %v378 = vsel %vm346, %v330, %v362
      %379 = vst [vmem:[%s267] sm:$0xff] %v363
      %380 = vst [vmem:[%s267 + $0x8] sm:$0xff] %v364
      %381 = vst [vmem:[%s267 + $0x10] sm:$0xff] %v365
      %382 = vst [vmem:[%s267 + $0x18] sm:$0xff] %v366
      %383 = vst [vmem:[%s267 + $0x20] sm:$0xff] %v367
      %384 = vst [vmem:[%s267 + $0x28] sm:$0xff] %v368
      %385 = vst [vmem:[%s267 + $0x30] sm:$0xff] %v369
      %386 = vst [vmem:[%s267 + $0x38] sm:$0xff] %v370
      %387 = vst [vmem:[%s267 + $0x40] sm:$0xff] %v371
      %388 = vst [vmem:[%s267 + $0x48] sm:$0xff] %v372
      %389 = vst [vmem:[%s267 + $0x50] sm:$0xff] %v373
      %390 = vst [vmem:[%s267 + $0x58] sm:$0xff] %v374
      %391 = vst [vmem:[%s267 + $0x60] sm:$0xff] %v375
      %392 = vst [vmem:[%s267 + $0x68] sm:$0xff] %v376
      %393 = vst [vmem:[%s267 + $0x70] sm:$0xff] %v377
      %394 = vst [vmem:[%s267 + $0x78] sm:$0xff] %v378
      %s395 = smul.u32 8, %s20
      %p396 = scmp.lt.s32.totalorder %s19, 1
      %s397 = scalar_select %p396, %s19, 1
      %p398 = scmp.lt.s32.totalorder %s395, 15
      %s399 = scalar_select %p398, %s395, 15
      %p400 = scmp.lt.s32.totalorder %s21, 0
      %s401 = scalar_select %p400, %s21, 0
      %s402 = smul.addr %s399, 2
      %s403 = sadd.s32 %s401, %s402
      %s404 = smul.addr %s397, 32
      %s405 = sadd.s32 %s403, %s404
      %s406 = smul.addr %s405, 8
      %s407 = scalar_lea.vmem %s3, %s406
      // Predicated region
      $region33: #{cnn_block.3} parent=31 // pred_check
        %p408 = pneg %p137
      $region34: #{cnn_block.3} parent=31 // pred_check_branch
        %410 = sbr.rel (%p408) target = $region36
      $region35: #{cnn_block.3} parent=31 // pred_region
        %s411 = smul.u32 8, %s20
      $region36: #{cnn_block.3} parent=31 // pred_fallthru
        _
    $region32: #{cnn_block.3} parent=5 // pred_fallthru
      _
    %p412 = scmp.le.s32.totalorder 2, %s9
    // Predicated region
    $region37: #{cnn_block.3} parent=5 // pred_check
      %p413 = pneg %p412
    $region38: #{cnn_block.3} parent=5 // pred_check_branch
      %415 = sbr.rel (%p413) target = $region40
    $region39: #{cnn_block.3} parent=5 // pred_region
      %s416 = ssub.s32 %s9, 2
      // Predicated region
      $region41: #{cnn_block.3} parent=39 // pred_check
        %p417 = pneg %p143
      $region42: #{cnn_block.3} parent=39 // pred_check_branch
        %419 = sbr.rel (%p417) target = $region44
      $region43: #{cnn_block.3} parent=39 // pred_region
        %s420 = smul.u32 8, %s23
        %p421 = scmp.lt.s32.totalorder %s22, 1
        %s422 = scalar_select %p421, %s22, 1
        %p423 = scmp.lt.s32.totalorder %s420, 15
        %s424 = scalar_select %p423, %s420, 15
        %p425 = scmp.lt.s32.totalorder %s24, 0
        %s426 = scalar_select %p425, %s24, 0
        %s427 = smul.addr %s424, 2
        %s428 = sadd.s32 %s426, %s427
        %s429 = smul.addr %s422, 32
        %s430 = sadd.s32 %s428, %s429
        %s431 = smul.addr %s430, 8
        %s432 = scalar_lea.vmem %s3, %s431
      $region44: #{cnn_block.3} parent=39 // pred_fallthru
        _
    $region40: #{cnn_block.3} parent=5 // pred_fallthru
      _
  $region6: #{cnn_block.3} parent=0 // loop_footer
    %s13 = sadd.s32 1, %s9
  $region7: #{cnn_block.3} parent=0 // loop_footer_branch
    %8 = sbr.rel target = $region3
  $region8: #{cnn_block.3} parent=0 // loop_exit
    _

// kernel: cnn_block.2
$region0: #{cnn_block.2}
  #allocation0 [shape = 'u32[]', space=smem, size = 0x4, offset = 0x4, fixed_abs, tag = 'smem constant byte address 0x4 - core index']
  #allocation1 [shape = 'u32[144,128]{1,0:T(1,128)}', space=vmem, size = 0x12000, scoped, tag = 'internal scratch']
  #allocation2 [shape = 'f32[2,240,128]{2,1,0:T(8,128)}', space=vmem, size = 0x3c000, scoped, tag = 'scratch operand']
  #allocation3 [shape = 's32[2]{0}', space=sflag, size = 0x8, scoped, tag = 'scratch operand']
  #allocation4 [shape = 's32[]', space=sflag, size = 0x4, offset = 0, fixed_abs, tag = 'sflag constant byte address 0x0 - dummy sync flag']
  #allocation5 [shape = 's32[]', space=sflag, size = 0x4, offset = 0, fixed_abs, tag = 'sflag constant byte address 0x0 - dummy sync flag']
  %s0 = inlined_call_operand.vmem [shape: f32[864,128], index: 0, kind: input, shape index: {}]
  %s1 = inlined_call_operand.vmem [shape: f32[3,3,128,128], index: 1, kind: input, shape index: {}]
  %s2 = inlined_call_operand.vmem [shape: f32[2,16,16,128], index: 2, kind: output, shape index: {0}]
  %s3 = inlined_call_operand.vmem [shape: f32[2,2,2,128], index: 3, kind: output, shape index: {1}]
  %4 = xla_tuple %s2, %s3
  %s5 = sld [smem:[#allocation0]]
  $region125: #{cnn_block.2} parent=0
    _
  %s7 = ssub.s32 1, %s5
  %s8 = scalar_select 0, %s7, %s5
  loop: start=0, step=1, limit=6
  $region2: #{cnn_block.2} parent=0 // loop_pre_header
    _
  $region3: #{cnn_block.2} parent=0 // loop_header
    %s10 = sphi 0, %s14
    %p11 = scmp.ge.s32.totalorder %s10, 6
    %s17 = sphi 0, %s36
    %s18 = sphi 0, %s32
    %s19 = sphi 0, %s28
    %s20 = sphi 0, %s17
    %s21 = sphi 0, %s18
    %s22 = sphi 0, %s19
    %s23 = sphi 0, %s20
    %s24 = sphi 0, %s21
    %s25 = sphi 0, %s22
    %s39 = sphi 0, %s41
    %s42 = sphi 0, %s39
    %s43 = sphi 0, %s42
    %s59 = sphi 0, %s43
    %s69 = sphi 0, %s71
    %s72 = sphi 0, %s69
    %s73 = sphi 0, %s72
    %s89 = sphi 0, %s73
    %s99 = sphi 0, %s101
    %s102 = sphi 0, %s99
    %s103 = sphi 0, %s102
    %s119 = sphi 0, %s103
  $region4: #{cnn_block.2} parent=0 // loop_header_branch
    %13 = sbr.rel (%p11) target = $region8
  $region5: #{cnn_block.2} parent=0 // loop_body
    %s15 = ssub.s32 %s10, 1
    %s16 = ssub.s32 %s10, 2
    %s26 = sadd.s32 1, %s19
    %p27 = scmp.ge.s32.totalorder %s26, 1
    %s28 = scalar_select %p27, 0, %s26
    %s29 = sadd.s32 1, %s18
    %s30 = scalar_select %p27, %s29, %s18
    %p31 = scmp.ge.s32.totalorder %s30, 2
    %s32 = scalar_select %p31, 0, %s30
    %s33 = sadd.s32 1, %s17
    %s34 = scalar_select %p31, %s33, %s17
    %p35 = scmp.ge.s32.totalorder %s34, 2
    %s36 = scalar_select %p35, 0, %s34
    %s37 = ssub.s32 %s19, %s28
    %p38 = scmp.eq.s32.totalorder %s37, 0
    %s40 = sadd.s32 %s39, 1
    %s41 = scalar_select %p38, %s39, %s40
    %p44 = pneg %p38
    %p45 = scmp.eq.s32.totalorder %s10, 3
    %p46 = por %p44, %p45
    %p47 = scmp.ne.s32.totalorder %s39, %s42
    %p48 = scmp.eq.s32.totalorder %s10, 0
    %p49 = por %p47, %p48
    %p50 = scmp.ne.s32.totalorder %s39, %s42
    %p51 = scmp.eq.s32.totalorder %s15, 3
    %p52 = por %p50, %p51
    %p53 = scmp.ne.s32.totalorder %s42, %s43
    %p54 = scmp.eq.s32.totalorder %s15, 0
    %p55 = por %p53, %p54
    %p56 = scmp.ne.s32.totalorder %s42, %s43
    %p57 = scmp.eq.s32.totalorder %s16, 3
    %p58 = por %p56, %p57
    %p60 = scmp.ne.s32.totalorder %s43, %s59
    %p61 = scmp.eq.s32.totalorder %s16, 0
    %p62 = por %p60, %p61
    %s63 = ssub.s32 %s17, %s36
    %s64 = ssub.s32 %s18, %s32
    %s65 = sor.u32 %s63, %s64
    %s66 = ssub.s32 %s19, %s28
    %s67 = sor.u32 %s65, %s66
    %p68 = scmp.eq.s32.totalorder %s67, 0
    %s70 = sadd.s32 %s69, 1
    %s71 = scalar_select %p68, %s69, %s70
    %p74 = pneg %p68
    %p75 = scmp.eq.s32.totalorder %s10, 3
    %p76 = por %p74, %p75
    %p77 = scmp.ne.s32.totalorder %s69, %s72
    %p78 = scmp.eq.s32.totalorder %s10, 0
    %p79 = por %p77, %p78
    %p80 = scmp.ne.s32.totalorder %s69, %s72
    %p81 = scmp.eq.s32.totalorder %s15, 3
    %p82 = por %p80, %p81
    %p83 = scmp.ne.s32.totalorder %s72, %s73
    %p84 = scmp.eq.s32.totalorder %s15, 0
    %p85 = por %p83, %p84
    %p86 = scmp.ne.s32.totalorder %s72, %s73
    %p87 = scmp.eq.s32.totalorder %s16, 3
    %p88 = por %p86, %p87
    %p90 = scmp.ne.s32.totalorder %s73, %s89
    %p91 = scmp.eq.s32.totalorder %s16, 0
    %p92 = por %p90, %p91
    %s93 = ssub.s32 %s17, %s36
    %s94 = ssub.s32 %s18, %s32
    %s95 = sor.u32 %s93, %s94
    %s96 = ssub.s32 %s19, %s28
    %s97 = sor.u32 %s95, %s96
    %p98 = scmp.eq.s32.totalorder %s97, 0
    %s100 = sadd.s32 %s99, 1
    %s101 = scalar_select %p98, %s99, %s100
    %p104 = pneg %p98
    %p105 = scmp.eq.s32.totalorder %s10, 3
    %p106 = por %p104, %p105
    %p107 = scmp.ne.s32.totalorder %s99, %s102
    %p108 = scmp.eq.s32.totalorder %s10, 0
    %p109 = por %p107, %p108
    %p110 = scmp.ne.s32.totalorder %s99, %s102
    %p111 = scmp.eq.s32.totalorder %s15, 3
    %p112 = por %p110, %p111
    %p113 = scmp.ne.s32.totalorder %s102, %s103
    %p114 = scmp.eq.s32.totalorder %s15, 0
    %p115 = por %p113, %p114
    %p116 = scmp.ne.s32.totalorder %s102, %s103
    %p117 = scmp.eq.s32.totalorder %s16, 3
    %p118 = por %p116, %p117
    %p120 = scmp.ne.s32.totalorder %s103, %s119
    %p121 = scmp.eq.s32.totalorder %s16, 0
    %p122 = por %p120, %p121
    %p123 = scmp.le.s32.totalorder 1, %s10
    %p124 = scmp.lt.s32.totalorder %s10, 5
    %p125 = pnand %p123, %p124
    %p126 = pneg %p125
    // Predicated region
    $region9: #{cnn_block.2} parent=5 // pred_check
      _
    $region10: #{cnn_block.2} parent=5 // pred_check_branch
      %128 = sbr.rel (%p125) target = $region12
    $region11: #{cnn_block.2} parent=5 // pred_region
      %s129 = ssub.s32 %s10, 1
      // Predicated region
      $region13: #{cnn_block.2} parent=11 // pred_check
        %p130 = pneg %p55
      $region14: #{cnn_block.2} parent=11 // pred_check_branch
        %132 = sbr.rel (%p130) target = $region16
      $region15: #{cnn_block.2} parent=11 // pred_region
        %p133 = scmp.lt.s32.totalorder %s22, 0
        %s134 = scalar_select %p133, %s22, 0
        %s135 = smul.addr %s134, 8
        %s136 = scalar_lea.vmem %s1, %s135
      $region16: #{cnn_block.2} parent=11 // pred_fallthru
        _
    $region12: #{cnn_block.2} parent=5 // pred_fallthru
      _
    %p137 = scmp.lt.s32.totalorder %s10, 4
    // Predicated region
    $region17: #{cnn_block.2} parent=5 // pred_check
      %p138 = pneg %p137
    $region18: #{cnn_block.2} parent=5 // pred_check_branch
      %140 = sbr.rel (%p138) target = $region20
    $region19: #{cnn_block.2} parent=5 // pred_region
      _
    $region20: #{cnn_block.2} parent=5 // pred_fallthru
      _
    %p141 = scmp.le.s32.totalorder 1, %s10
    %p142 = scmp.lt.s32.totalorder %s10, 5
    %p143 = pnand %p141, %p142
    %p144 = pneg %p143
    // Predicated region
    $region21: #{cnn_block.2} parent=5 // pred_check
      _
    $region22: #{cnn_block.2} parent=5 // pred_check_branch
      %146 = sbr.rel (%p143) target = $region24
    $region23: #{cnn_block.2} parent=5 // pred_region
      %s147 = ssub.s32 %s10, 1
      %p148 = scmp.lt.s32.totalorder %s22, 0
      %s149 = scalar_select %p148, %s22, 0
      %s150 = smul.addr %s149, 8
      %s151 = scalar_lea.vmem %s1, %s150
      %p152 = pneg %p55
      %p153 = pneg %p52
      %p154 = pneg %p85
      %p155 = pneg %p82
      %s156 = smul.u32 8, %s21
      %p157 = scmp.lt.s32.totalorder %s20, 1
      %s158 = scalar_select %p157, %s20, 1
      %p159 = scmp.lt.s32.totalorder %s156, 15
      %s160 = scalar_select %p159, %s156, 15
      %p161 = scmp.lt.s32.totalorder %s22, 0
      %s162 = scalar_select %p161, %s22, 0
      %s163 = smul.addr %s160, 2
      %s164 = sadd.s32 %s162, %s163
      %s165 = smul.addr %s158, 32
      %s166 = sadd.s32 %s164, %s165
      %s167 = smul.addr %s166, 8
      %s168 = scalar_lea.vmem %s2, %s167
      %p169 = pneg %p115
      %p170 = pneg %p112
      %p171 = scmp.lt.s32.totalorder %s20, 1
      %s172 = scalar_select %p171, %s20, 1
      %p173 = scmp.lt.s32.totalorder %s21, 1
      %s174 = scalar_select %p173, %s21, 1
      %p175 = scmp.lt.s32.totalorder %s22, 0
      %s176 = scalar_select %p175, %s22, 0
      %s177 = sadd.s32 %s176, %s174
      %s178 = smul.addr %s172, 2
      %s179 = sadd.s32 %s177, %s178
      %s180 = smul.addr %s179, 2
      %s181 = scalar_lea.vmem %s3, %s180
      %p182 = scmp.lt.s32.totalorder %s22, 0
      %s183 = scalar_select %p182, %s22, 0
      %s184 = smul.addr %s183, 8
      %s185 = scalar_lea.vmem %s1, %s184
      %s186 = smul.u32 8, %s21
      %p187 = scmp.lt.s32.totalorder %s20, 1
      %s188 = scalar_select %p187, %s20, 1
      %p189 = scmp.lt.s32.totalorder %s186, 15
      %s190 = scalar_select %p189, %s186, 15
      %p191 = scmp.lt.s32.totalorder %s22, 0
      %s192 = scalar_select %p191, %s22, 0
      %s193 = smul.addr %s190, 2
      %s194 = sadd.s32 %s192, %s193
      %s195 = smul.addr %s188, 32
      %s196 = sadd.s32 %s194, %s195
      %s197 = smul.addr %s196, 8
      %s198 = scalar_lea.vmem %s2, %s197
      %s199 = smul.u32 8, %s21
      %p200 = scmp.lt.s32.totalorder %s20, 1
      %s201 = scalar_select %p200, %s20, 1
      %p202 = scmp.lt.s32.totalorder %s21, 1
      %s203 = scalar_select %p202, %s21, 1
      %p204 = scmp.lt.s32.totalorder %s22, 0
      %s205 = scalar_select %p204, %s22, 0
      %s206 = sadd.s32 %s205, %s203
      %s207 = smul.addr %s201, 2
      %s208 = sadd.s32 %s206, %s207
      %s209 = smul.addr %s208, 2
      %s210 = scalar_lea.vmem %s3, %s209
      %p211 = scmp.lt.s32.totalorder %s21, 0
      %s212 = ssub.s32 0, %s21
      %s213 = scalar_select %p211, %s212, %s21
      %s214 = sand.u32 %s213, 1
      %s215 = ssub.s32 0, %s214
      %s216 = scalar_select %p211, %s215, %s214
      %p217 = scmp.ne.s32.totalorder %s216, 0
      %p218 = scmp.lt.s32.totalorder %s216, 0
      %p219 = pnand %p218, %p217
      %p220 = pneg %p219
      %s221 = sadd.s32 %s216, 2
      %s222 = scalar_select %p220, %s221, %s216
      %p223 = scmp.eq.s32.totalorder %s21, 0
      %p224 = scmp.eq.s32.totalorder %s22, 0
      %p225 = pnand %p223, %p224
      %p226 = pneg %p225
      // Predicated region
      $region25: #{cnn_block.2} parent=23 // pred_check
        _
      $region26: #{cnn_block.2} parent=23 // pred_check_branch
        %228 = sbr.rel (%p225) target = $region28
      $region27: #{cnn_block.2} parent=23 // pred_region
        %s229 = smul.u32 %s20, 432
        %s230 = scalar_lea.vmem %s0, %s229
        %p232 = scmp.lt.u32.totalorder 240, 8
        %p233 = pneg %p232
        // Predicated region
        $region29: #{cnn_block.2} parent=27 // pred_check
          _
        $region30: #{cnn_block.2} parent=27 // pred_check_branch
          %235 = sbr.rel (%p232) target = $region32
        $region31: #{cnn_block.2} parent=27 // pred_region
          %s250 = sand.u32 240, 7
          %p251 = scmp.eq.s32.totalorder %s250, 0
          // Predicated region
          $region44: #{cnn_block.2} parent=31 // pred_check
            %p252 = pneg %p251
          $region45: #{cnn_block.2} parent=31 // pred_check_branch
            %254 = sbr.rel (%p252) target = $region47
          $region46: #{cnn_block.2} parent=31 // pred_region
            loop: start=0, step=1, limit=1
            $region48: #{cnn_block.2} parent=46 // loop_pre_header
              _
            $region49: #{cnn_block.2} parent=46 // loop_header
              %s256 = sphi 0, %s260
              %p257 = scmp.ge.s32.totalorder %s256, 1
              %s261 = sphi %s230, %s230
              %s262 = sphi [#allocation2], [#allocation2]
            $region50: #{cnn_block.2} parent=46 // loop_header_branch
              %259 = sbr.rel (%p257) target = $region54
            $region51: #{cnn_block.2} parent=46 // loop_body
              %v263 = vld [vmem:[%s261] sm:$0xff]
              %264 = vst [vmem:[%s262] sm:$0xff] %v263
              %v265 = vld [vmem:[%s261 + $0x8] sm:$0xff]
              %266 = vst [vmem:[%s262 + $0x8] sm:$0xff] %v265
              %v267 = vld [vmem:[%s261 + $0x10] sm:$0xff]
              %268 = vst [vmem:[%s262 + $0x10] sm:$0xff] %v267
              %v269 = vld [vmem:[%s261 + $0x18] sm:$0xff]
              %270 = vst [vmem:[%s262 + $0x18] sm:$0xff] %v269
              %v271 = vld [vmem:[%s261 + $0x20] sm:$0xff]
              %272 = vst [vmem:[%s262 + $0x20] sm:$0xff] %v271
              %v273 = vld [vmem:[%s261 + $0x28] sm:$0xff]
              %274 = vst [vmem:[%s262 + $0x28] sm:$0xff] %v273
              %v275 = vld [vmem:[%s261 + $0x30] sm:$0xff]
              %276 = vst [vmem:[%s262 + $0x30] sm:$0xff] %v275
              %v277 = vld [vmem:[%s261 + $0x38] sm:$0xff]
              %278 = vst [vmem:[%s262 + $0x38] sm:$0xff] %v277
              %v279 = vld [vmem:[%s261 + $0x40] sm:$0xff]
              %280 = vst [vmem:[%s262 + $0x40] sm:$0xff] %v279
              %v281 = vld [vmem:[%s261 + $0x48] sm:$0xff]
              %282 = vst [vmem:[%s262 + $0x48] sm:$0xff] %v281
              %v283 = vld [vmem:[%s261 + $0x50] sm:$0xff]
              %284 = vst [vmem:[%s262 + $0x50] sm:$0xff] %v283
              %v285 = vld [vmem:[%s261 + $0x58] sm:$0xff]
              %286 = vst [vmem:[%s262 + $0x58] sm:$0xff] %v285
              %v287 = vld [vmem:[%s261 + $0x60] sm:$0xff]
              %288 = vst [vmem:[%s262 + $0x60] sm:$0xff] %v287
              %v289 = vld [vmem:[%s261 + $0x68] sm:$0xff]
              %290 = vst [vmem:[%s262 + $0x68] sm:$0xff] %v289
              %v291 = vld [vmem:[%s261 + $0x70] sm:$0xff]
              %292 = vst [vmem:[%s262 + $0x70] sm:$0xff] %v291
              %v293 = vld [vmem:[%s261 + $0x78] sm:$0xff]
              %294 = vst [vmem:[%s262 + $0x78] sm:$0xff] %v293
              %v295 = vld [vmem:[%s261 + $0x80] sm:$0xff]
              %296 = vst [vmem:[%s262 + $0x80] sm:$0xff] %v295
              %v297 = vld [vmem:[%s261 + $0x88] sm:$0xff]
              %298 = vst [vmem:[%s262 + $0x88] sm:$0xff] %v297
              %v299 = vld [vmem:[%s261 + $0x90] sm:$0xff]
              %300 = vst [vmem:[%s262 + $0x90] sm:$0xff] %v299
              %v301 = vld [vmem:[%s261 + $0x98] sm:$0xff]
              %302 = vst [vmem:[%s262 + $0x98] sm:$0xff] %v301
              %v303 = vld [vmem:[%s261 + $0xa0] sm:$0xff]
              %304 = vst [vmem:[%s262 + $0xa0] sm:$0xff] %v303
              %v305 = vld [vmem:[%s261 + $0xa8] sm:$0xff]
              %306 = vst [vmem:[%s262 + $0xa8] sm:$0xff] %v305
              %v307 = vld [vmem:[%s261 + $0xb0] sm:$0xff]
              %308 = vst [vmem:[%s262 + $0xb0] sm:$0xff] %v307
              %v309 = vld [vmem:[%s261 + $0xb8] sm:$0xff]
              %310 = vst [vmem:[%s262 + $0xb8] sm:$0xff] %v309
              %v311 = vld [vmem:[%s261 + $0xc0] sm:$0xff]
              %312 = vst [vmem:[%s262 + $0xc0] sm:$0xff] %v311
              %v313 = vld [vmem:[%s261 + $0xc8] sm:$0xff]
              %314 = vst [vmem:[%s262 + $0xc8] sm:$0xff] %v313
              %v315 = vld [vmem:[%s261 + $0xd0] sm:$0xff]
              %316 = vst [vmem:[%s262 + $0xd0] sm:$0xff] %v315
              %v317 = vld [vmem:[%s261 + $0xd8] sm:$0xff]
              %318 = vst [vmem:[%s262 + $0xd8] sm:$0xff] %v317
              %v319 = vld [vmem:[%s261 + $0xe0] sm:$0xff]
              %320 = vst [vmem:[%s262 + $0xe0] sm:$0xff] %v319
              %v321 = vld [vmem:[%s261 + $0xe8] sm:$0xff]
              %322 = vst [vmem:[%s262 + $0xe8] sm:$0xff] %v321
            $region52: #{cnn_block.2} parent=46 // loop_footer
              %s260 = sadd.s32 1, %s256
            $region53: #{cnn_block.2} parent=46 // loop_footer_branch
              %255 = sbr.rel target = $region49
            $region54: #{cnn_block.2} parent=46 // loop_exit
              _
          $region47: #{cnn_block.2} parent=31 // pred_fallthru
            _
          %p323 = pneg %p251
          // Predicated region
          $region55: #{cnn_block.2} parent=31 // pred_check
            _
          $region56: #{cnn_block.2} parent=31 // pred_check_branch
            %325 = sbr.rel (%p251) target = $region58
          $region57: #{cnn_block.2} parent=31 // pred_region
            %s326 = sand.u32 240, 7
          $region58: #{cnn_block.2} parent=31 // pred_fallthru
            _
        $region32: #{cnn_block.2} parent=27 // pred_fallthru
          _
        // Predicated region
        $region33: #{cnn_block.2} parent=27 // pred_check
          %p236 = pneg %p232
        $region34: #{cnn_block.2} parent=27 // pred_check_branch
          %238 = sbr.rel (%p236) target = $region36
        $region35: #{cnn_block.2} parent=27 // pred_region
          %s239 = sshllo.u32 0, 240
          loop: start=0, step=1, limit=1
          $region37: #{cnn_block.2} parent=35 // loop_pre_header
            _
          $region38: #{cnn_block.2} parent=35 // loop_header
            %s241 = sphi 0, %s245
            %p242 = scmp.ge.s32.totalorder %s241, 1
            %s246 = sphi %s230, %s230
            %s247 = sphi [#allocation2], [#allocation2]
          $region39: #{cnn_block.2} parent=35 // loop_header_branch
            %244 = sbr.rel (%p242) target = $region43
          $region40: #{cnn_block.2} parent=35 // loop_body
            %v248 = vld [vmem:[%s246] sm:%s239]
            %249 = vst [vmem:[%s247] sm:%s239] %v248
          $region41: #{cnn_block.2} parent=35 // loop_footer
            %s245 = sadd.s32 1, %s241
          $region42: #{cnn_block.2} parent=35 // loop_footer_branch
            %240 = sbr.rel target = $region38
          $region43: #{cnn_block.2} parent=35 // loop_exit
            _
        $region36: #{cnn_block.2} parent=27 // pred_fallthru
          _
        // Predicated region
        $region59: #{cnn_block.2} parent=27 // pred_check
          _
        $region60: #{cnn_block.2} parent=27 // pred_check_branch
          %329 = sbr.rel (0) target = $region62
        $region61: #{cnn_block.2} parent=27 // pred_region
          %330 = vsyncadd [#allocation3], 3840
        $region62: #{cnn_block.2} parent=27 // pred_fallthru
          _
      $region28: #{cnn_block.2} parent=23 // pred_fallthru
        _
      // Predicated region
      $region63: #{cnn_block.2} parent=23 // pred_check
        %p331 = pneg %p224
      $region64: #{cnn_block.2} parent=23 // pred_check_branch
        %333 = sbr.rel (%p331) target = $region66
      $region65: #{cnn_block.2} parent=23 // pred_region
        %s334 = scalar_lea.sflag [#allocation3], %s222
        %s335 = smul.u32 240, 1
        %s336 = sshll.u32 %s335, 4
        %337 = dma.done %s334, %s336
      $region66: #{cnn_block.2} parent=23 // pred_fallthru
        _
      %s338 = sadd.s32 %s21, 1
      %p339 = scmp.lt.s32.totalorder %s338, 2
      %p340 = pnand %p224, %p339
      %p341 = pneg %p340
      // Predicated region
      $region67: #{cnn_block.2} parent=23 // pred_check
        _
      $region68: #{cnn_block.2} parent=23 // pred_check_branch
        %343 = sbr.rel (%p340) target = $region70
      $region69: #{cnn_block.2} parent=23 // pred_region
        %s344 = ssub.s32 1, %s222
        %s345 = smul.u32 %s20, 18
        %s346 = smul.u32 %s338, 8
        %s347 = sadd.s32 %s345, %s346
        %s348 = smul.u32 %s347, 24
        %s349 = scalar_lea.vmem %s0, %s348
        %s350 = smul.u32 %s344, 240
        %s351 = scalar_lea.vmem [#allocation2], %s350
        %s352 = scalar_lea.sflag [#allocation3], %s344
        %p354 = scmp.lt.u32.totalorder 240, 8
        %p355 = pneg %p354
        // Predicated region
        $region71: #{cnn_block.2} parent=69 // pred_check
          _
        $region72: #{cnn_block.2} parent=69 // pred_check_branch
          %357 = sbr.rel (%p354) target = $region74
        $region73: #{cnn_block.2} parent=69 // pred_region
          %s372 = sand.u32 240, 7
          %p373 = scmp.eq.s32.totalorder %s372, 0
          // Predicated region
          $region86: #{cnn_block.2} parent=73 // pred_check
            %p374 = pneg %p373
          $region87: #{cnn_block.2} parent=73 // pred_check_branch
            %376 = sbr.rel (%p374) target = $region89
          $region88: #{cnn_block.2} parent=73 // pred_region
            loop: start=0, step=1, limit=1
            $region90: #{cnn_block.2} parent=88 // loop_pre_header
              _
            $region91: #{cnn_block.2} parent=88 // loop_header
              %s378 = sphi 0, %s382
              %p379 = scmp.ge.s32.totalorder %s378, 1
              %s383 = sphi %s349, %s349
              %s384 = sphi %s351, %s351
            $region92: #{cnn_block.2} parent=88 // loop_header_branch
              %381 = sbr.rel (%p379) target = $region96
            $region93: #{cnn_block.2} parent=88 // loop_body
              %v385 = vld [vmem:[%s383] sm:$0xff]
              %386 = vst [vmem:[%s384] sm:$0xff] %v385
              %v387 = vld [vmem:[%s383 + $0x8] sm:$0xff]
              %388 = vst [vmem:[%s384 + $0x8] sm:$0xff] %v387
              %v389 = vld [vmem:[%s383 + $0x10] sm:$0xff]
              %390 = vst [vmem:[%s384 + $0x10] sm:$0xff] %v389
              %v391 = vld [vmem:[%s383 + $0x18] sm:$0xff]
              %392 = vst [vmem:[%s384 + $0x18] sm:$0xff] %v391
              %v393 = vld [vmem:[%s383 + $0x20] sm:$0xff]
              %394 = vst [vmem:[%s384 + $0x20] sm:$0xff] %v393
              %v395 = vld [vmem:[%s383 + $0x28] sm:$0xff]
              %396 = vst [vmem:[%s384 + $0x28] sm:$0xff] %v395
              %v397 = vld [vmem:[%s383 + $0x30] sm:$0xff]
              %398 = vst [vmem:[%s384 + $0x30] sm:$0xff] %v397
              %v399 = vld [vmem:[%s383 + $0x38] sm:$0xff]
              %400 = vst [vmem:[%s384 + $0x38] sm:$0xff] %v399
              %v401 = vld [vmem:[%s383 + $0x40] sm:$0xff]
              %402 = vst [vmem:[%s384 + $0x40] sm:$0xff] %v401
              %v403 = vld [vmem:[%s383 + $0x48] sm:$0xff]
              %404 = vst [vmem:[%s384 + $0x48] sm:$0xff] %v403
              %v405 = vld [vmem:[%s383 + $0x50] sm:$0xff]
              %406 = vst [vmem:[%s384 + $0x50] sm:$0xff] %v405
              %v407 = vld [vmem:[%s383 + $0x58] sm:$0xff]
              %408 = vst [vmem:[%s384 + $0x58] sm:$0xff] %v407
              %v409 = vld [vmem:[%s383 + $0x60] sm:$0xff]
              %410 = vst [vmem:[%s384 + $0x60] sm:$0xff] %v409
              %v411 = vld [vmem:[%s383 + $0x68] sm:$0xff]
              %412 = vst [vmem:[%s384 + $0x68] sm:$0xff] %v411
              %v413 = vld [vmem:[%s383 + $0x70] sm:$0xff]
              %414 = vst [vmem:[%s384 + $0x70] sm:$0xff] %v413
              %v415 = vld [vmem:[%s383 + $0x78] sm:$0xff]
              %416 = vst [vmem:[%s384 + $0x78] sm:$0xff] %v415
              %v417 = vld [vmem:[%s383 + $0x80] sm:$0xff]
              %418 = vst [vmem:[%s384 + $0x80] sm:$0xff] %v417
              %v419 = vld [vmem:[%s383 + $0x88] sm:$0xff]
              %420 = vst [vmem:[%s384 + $0x88] sm:$0xff] %v419
              %v421 = vld [vmem:[%s383 + $0x90] sm:$0xff]
              %422 = vst [vmem:[%s384 + $0x90] sm:$0xff] %v421
              %v423 = vld [vmem:[%s383 + $0x98] sm:$0xff]
              %424 = vst [vmem:[%s384 + $0x98] sm:$0xff] %v423
              %v425 = vld [vmem:[%s383 + $0xa0] sm:$0xff]
              %426 = vst [vmem:[%s384 + $0xa0] sm:$0xff] %v425
              %v427 = vld [vmem:[%s383 + $0xa8] sm:$0xff]
              %428 = vst [vmem:[%s384 + $0xa8] sm:$0xff] %v427
              %v429 = vld [vmem:[%s383 + $0xb0] sm:$0xff]
              %430 = vst [vmem:[%s384 + $0xb0] sm:$0xff] %v429
              %v431 = vld [vmem:[%s383 + $0xb8] sm:$0xff]
              %432 = vst [vmem:[%s384 + $0xb8] sm:$0xff] %v431
              %v433 = vld [vmem:[%s383 + $0xc0] sm:$0xff]
              %434 = vst [vmem:[%s384 + $0xc0] sm:$0xff] %v433
              %v435 = vld [vmem:[%s383 + $0xc8] sm:$0xff]
              %436 = vst [vmem:[%s384 + $0xc8] sm:$0xff] %v435
              %v437 = vld [vmem:[%s383 + $0xd0] sm:$0xff]
              %438 = vst [vmem:[%s384 + $0xd0] sm:$0xff] %v437
              %v439 = vld [vmem:[%s383 + $0xd8] sm:$0xff]
              %440 = vst [vmem:[%s384 + $0xd8] sm:$0xff] %v439
              %v441 = vld [vmem:[%s383 + $0xe0] sm:$0xff]
              %442 = vst [vmem:[%s384 + $0xe0] sm:$0xff] %v441
              %v443 = vld [vmem:[%s383 + $0xe8] sm:$0xff]
              %444 = vst [vmem:[%s384 + $0xe8] sm:$0xff] %v443
            $region94: #{cnn_block.2} parent=88 // loop_footer
              %s382 = sadd.s32 1, %s378
            $region95: #{cnn_block.2} parent=88 // loop_footer_branch
              %377 = sbr.rel target = $region91
            $region96: #{cnn_block.2} parent=88 // loop_exit
              _
          $region89: #{cnn_block.2} parent=73 // pred_fallthru
            _
          %p445 = pneg %p373
          // Predicated region
          $region97: #{cnn_block.2} parent=73 // pred_check
            _
          $region98: #{cnn_block.2} parent=73 // pred_check_branch
            %447 = sbr.rel (%p373) target = $region100
          $region99: #{cnn_block.2} parent=73 // pred_region
            %s448 = sand.u32 240, 7
          $region100: #{cnn_block.2} parent=73 // pred_fallthru
            _
        $region74: #{cnn_block.2} parent=69 // pred_fallthru
          _
        // Predicated region
        $region75: #{cnn_block.2} parent=69 // pred_check
          %p358 = pneg %p354
        $region76: #{cnn_block.2} parent=69 // pred_check_branch
          %360 = sbr.rel (%p358) target = $region78
        $region77: #{cnn_block.2} parent=69 // pred_region
          %s361 = sshllo.u32 0, 240
          loop: start=0, step=1, limit=1
          $region79: #{cnn_block.2} parent=77 // loop_pre_header
            _
          $region80: #{cnn_block.2} parent=77 // loop_header
            %s363 = sphi 0, %s367
            %p364 = scmp.ge.s32.totalorder %s363, 1
            %s368 = sphi %s349, %s349
            %s369 = sphi %s351, %s351
          $region81: #{cnn_block.2} parent=77 // loop_header_branch
            %366 = sbr.rel (%p364) target = $region85
          $region82: #{cnn_block.2} parent=77 // loop_body
            %v370 = vld [vmem:[%s368] sm:%s361]
            %371 = vst [vmem:[%s369] sm:%s361] %v370
          $region83: #{cnn_block.2} parent=77 // loop_footer
            %s367 = sadd.s32 1, %s363
          $region84: #{cnn_block.2} parent=77 // loop_footer_branch
            %362 = sbr.rel target = $region80
          $region85: #{cnn_block.2} parent=77 // loop_exit
            _
        $region78: #{cnn_block.2} parent=69 // pred_fallthru
          _
        // Predicated region
        $region101: #{cnn_block.2} parent=69 // pred_check
          _
        $region102: #{cnn_block.2} parent=69 // pred_check_branch
          %451 = sbr.rel (0) target = $region104
        $region103: #{cnn_block.2} parent=69 // pred_region
          %452 = vsyncadd %s352, 3840
        $region104: #{cnn_block.2} parent=69 // pred_fallthru
          _
      $region70: #{cnn_block.2} parent=23 // pred_fallthru
        _
      %s453 = smul.u32 %s222, 240
      %s454 = scalar_lea.vmem [#allocation2], %s453
      %v455 = vld [vmem:[%s454] sm:$0xff]
      %v456 = vld [vmem:[%s454 + $0x8] sm:$0xff]
      %v457 = vld [vmem:[%s454 + $0x10] sm:$0xff]
      %v458 = vld [vmem:[%s454 + $0x18] sm:$0xff]
      %v459 = vld [vmem:[%s454 + $0x20] sm:$0xff]
      %v460 = vld [vmem:[%s454 + $0x28] sm:$0xff]
      %v461 = vld [vmem:[%s454 + $0x30] sm:$0xff]
      %v462 = vld [vmem:[%s454 + $0x38] sm:$0xff]
      %v463 = vld [vmem:[%s454 + $0x40] sm:$0xff]
      %v464 = vld [vmem:[%s454 + $0x48] sm:$0xff]
      %v465 = vld [vmem:[%s454 + $0x50] sm:$0xff]
      %v466 = vld [vmem:[%s454 + $0x58] sm:$0xff]
      %v467 = vld [vmem:[%s454 + $0x60] sm:$0xff]
      %v468 = vld [vmem:[%s454 + $0x68] sm:$0xff]
      %v469 = vld [vmem:[%s454 + $0x70] sm:$0xff]
      %v470 = vld [vmem:[%s454 + $0x78] sm:$0xff]
      %v471 = vld [vmem:[%s454 + $0x80] sm:$0xff]
      %v472 = vld [vmem:[%s454 + $0x88] sm:$0xff]
      %v473 = vld [vmem:[%s454 + $0x90] sm:$0xff]
      %v474 = vld [vmem:[%s454 + $0x98] sm:$0xff]
      %v475 = vld [vmem:[%s454 + $0xa0] sm:$0xff]
      %v476 = vld [vmem:[%s454 + $0xa8] sm:$0xff]
      %v477 = vld [vmem:[%s454 + $0xb0] sm:$0xff]
      %v478 = vld [vmem:[%s454 + $0xb8] sm:$0xff]
      %v479 = vld [vmem:[%s454 + $0xc0] sm:$0xff]
      %v480 = vld [vmem:[%s454 + $0xc8] sm:$0xff]
      %v481 = vld [vmem:[%s454 + $0xd0] sm:$0xff]
      %v482 = vld [vmem:[%s454 + $0xd8] sm:$0xff]
      %v483 = vld [vmem:[%s454 + $0xe0] sm:$0xff]
      %v484 = vld [vmem:[%s454 + $0xe8] sm:$0xff]
      %v485 = vld [vmem:[%s185] sm:$0xff]
      %v486 = vld [vmem:[%s185 + $0x8] sm:$0xff]
      %v487 = vld [vmem:[%s185 + $0x10] sm:$0xff]
      %v488 = vld [vmem:[%s185 + $0x18] sm:$0xff]
      %v489 = vld [vmem:[%s185 + $0x20] sm:$0xff]
      %v490 = vld [vmem:[%s185 + $0x28] sm:$0xff]
      %v491 = vld [vmem:[%s185 + $0x30] sm:$0xff]
      %v492 = vld [vmem:[%s185 + $0x38] sm:$0xff]
      %v493 = vld [vmem:[%s185 + $0x40] sm:$0xff]
      %v494 = vld [vmem:[%s185 + $0x48] sm:$0xff]
      %v495 = vld [vmem:[%s185 + $0x50] sm:$0xff]
      %v496 = vld [vmem:[%s185 + $0x58] sm:$0xff]
      %v497 = vld [vmem:[%s185 + $0x60] sm:$0xff]
      %v498 = vld [vmem:[%s185 + $0x68] sm:$0xff]
      %v499 = vld [vmem:[%s185 + $0x70] sm:$0xff]
      %v500 = vld [vmem:[%s185 + $0x78] sm:$0xff]
      %501 = vmatprep.subr.mxu0 0.0
      %502 = vmatpush1.msra.mxu0 %v485
      %503 = vmatprep.subr.mxu0 0.0
      %504 = vmatpush1.msra.mxu0 %v486
      %505 = vmatprep.subr.mxu0 0.0
      %506 = vmatpush1.msra.mxu0 %v487
      %507 = vmatprep.subr.mxu0 0.0
      %508 = vmatpush1.msra.mxu0 %v488
      %509 = vmatprep.subr.mxu0 0.0
      %510 = vmatpush1.msra.mxu0 %v489
      %511 = vmatprep.subr.mxu0 0.0
      %512 = vmatpush1.msra.mxu0 %v490
      %513 = vmatprep.subr.mxu0 0.0
      %514 = vmatpush1.msra.mxu0 %v491
      %515 = vmatprep.subr.mxu0 0.0
      %516 = vmatpush1.msra.mxu0 %v492
      %517 = vmatprep.subr.mxu0 0.0
      %518 = vmatpush1.msra.mxu0 %v493
      %519 = vmatprep.subr.mxu0 0.0
      %520 = vmatpush1.msra.mxu0 %v494
      %521 = vmatprep.subr.mxu0 0.0
      %522 = vmatpush1.msra.mxu0 %v495
      %523 = vmatprep.subr.mxu0 0.0
      %524 = vmatpush1.msra.mxu0 %v496
      %525 = vmatprep.subr.mxu0 0.0
      %526 = vmatpush1.msra.mxu0 %v497
      %527 = vmatprep.subr.mxu0 0.0
      %528 = vmatpush1.msra.mxu0 %v498
      %529 = vmatprep.subr.mxu0 0.0
      %530 = vmatpush1.msra.mxu0 %v499
      %531 = vmatprep.subr.mxu0 0.0
      %532 = vmatpush1.msra.mxu0 %v500
      %533 = vmatprep.subr.mxu0 0.0
      %534 = vmatpush1.msra.mxu0 0.0
      %535 = vmatprep.subr.mxu0 0.0
      %536 = vmatpush1.msra.mxu0 0.0
      %537 = vmatprep.subr.mxu0 0.0
      %538 = vmatpush1.msra.mxu0 0.0
      %539 = vmatprep.subr.mxu0 0.0
      %540 = vmatpush1.msra.mxu0 0.0
      %541 = vmatprep.subr.mxu0 0.0
      %542 = vmatpush1.msra.mxu0 0.0
      %543 = vmatprep.subr.mxu0 0.0
      %544 = vmatpush1.msra.mxu0 0.0
      %545 = vmatprep.subr.mxu0 0.0
      %546 = vmatpush1.msra.mxu0 0.0
      %547 = vmatprep.subr.mxu0 0.0
      %548 = vmatpush1.msra.mxu0 0.0
      %549 = vmatprep.subr.mxu0 0.0
      %550 = vmatpush1.msra.mxu0 0.0
      %551 = vmatprep.subr.mxu0 0.0
      %552 = vmatpush1.msra.mxu0 0.0
      %553 = vmatprep.subr.mxu0 0.0
      %554 = vmatpush1.msra.mxu0 0.0
      %555 = vmatprep.subr.mxu0 0.0
      %556 = vmatpush1.msra.mxu0 0.0
      %557 = vmatprep.subr.mxu0 0.0
      %558 = vmatpush1.msra.mxu0 0.0
      %559 = vmatprep.subr.mxu0 0.0
      %560 = vmatpush1.msra.mxu0 0.0
      %561 = vmatprep.subr.mxu0 0.0
      %562 = vmatpush1.msra.mxu0 0.0
      %563 = vmatprep.subr.mxu0 0.0
      %564 = vmatpush1.msra.mxu0 0.0
      %565 = vmatprep.mubr.f32.mxu0 0.0
      %566 = vmatmul.mubr.f32.gmra.mrb[0].mxu0 %v455
      %v567 = vpop.f32.mrb[0].mxu0
      %v568 = vadd.f32 0.0, %v567
      %v569 = vpop.f32.mrb[0].mxu0
      %570 = vmatprep.mubr.f32.mxu0 0.0
      %571 = vmatmul.mubr.f32.gmra.mrb[0].mxu0 %v456
      %v572 = vpop.f32.mrb[0].mxu0
      %v573 = vadd.f32 0.0, %v572
      %v574 = vpop.f32.mrb[0].mxu0
      %575 = vmatprep.mubr.f32.mxu0 0.0
      %576 = vmatmul.mubr.f32.gmra.mrb[0].mxu0 %v457
      %v577 = vpop.f32.mrb[0].mxu0
      %v578 = vpop.f32.mrb[0].mxu0
      %579 = vmatprep.mubr.f32.mxu0 0.0
      %580 = vmatmul.mubr.f32.gmra.mrb[0].mxu0 %v458
      %v581 = vpop.f32.mrb[0].mxu0
      %v582 = vadd.f32 0.0, %v581
      %v583 = vpop.f32.mrb[0].mxu0
      %584 = vmatprep.mubr.f32.mxu0 0.0
      %585 = vmatmul.mubr.f32.gmra.mrb[0].mxu0 %v459
      %v586 = vpop.f32.mrb[0].mxu0
      %v587 = vadd.f32 0.0, %v586
      %v588 = vpop.f32.mrb[0].mxu0
      %589 = vmatprep.mubr.f32.mxu0 0.0
      %590 = vmatmul.mubr.f32.gmra.mrb[0].mxu0 %v460
      %v591 = vpop.f32.mrb[0].mxu0
      %v592 = vpop.f32.mrb[0].mxu0
      %593 = vmatprep.mubr.f32.mxu0 0.0
      %594 = vmatmul.mubr.f32.gmra.mrb[0].mxu0 %v461
      %v595 = vpop.f32.mrb[0].mxu0
      %v596 = vadd.f32 0.0, %v595
      %v597 = vpop.f32.mrb[0].mxu0
      %598 = vmatprep.mubr.f32.mxu0 0.0
      %599 = vmatmul.mubr.f32.gmra.mrb[0].mxu0 %v462
      %v600 = vpop.f32.mrb[0].mxu0
      %v601 = vadd.f32 0.0, %v600
      %v602 = vpop.f32.mrb[0].mxu0
      %603 = vmatprep.mubr.f32.mxu0 0.0
      %604 = vmatmul.mubr.f32.gmra.mrb[0].mxu0 %v463
      %v605 = vpop.f32.mrb[0].mxu0
      %v606 = vpop.f32.mrb[0].mxu0
      %607 = vmatprep.mubr.f32.mxu0 0.0
      %608 = vmatmul.mubr.f32.gmra.mrb[0].mxu0 %v464
      %v609 = vpop.f32.mrb[0].mxu0
      %v610 = vadd.f32 0.0, %v609
      %v611 = vpop.f32.mrb[0].mxu0
      %612 = vmatprep.mubr.f32.mxu0 0.0
      %613 = vmatmul.mubr.f32.gmra.mrb[0].mxu0 %v465
      %v614 = vpop.f32.mrb[0].mxu0
      %v615 = vadd.f32 0.0, %v614
      %v616 = vpop.f32.mrb[0].mxu0
      %617 = vmatprep.mubr.f32.mxu0 0.0
      %618 = vmatmul.mubr.f32.gmra.mrb[0].mxu0 %v466
      %v619 = vpop.f32.mrb[0].mxu0
      %v620 = vpop.f32.mrb[0].mxu0
      %621 = vmatprep.mubr.f32.mxu0 0.0
      %622 = vmatmul.mubr.f32.gmra.mrb[0].mxu0 %v467
      %v623 = vpop.f32.mrb[0].mxu0
      %v624 = vadd.f32 0.0, %v623
      %v625 = vpop.f32.mrb[0].mxu0
      %626 = vmatprep.mubr.f32.mxu0 0.0
      %627 = vmatmul.mubr.f32.gmra.mrb[0].mxu0 %v468
      %v628 = vpop.f32.mrb[0].mxu0
      %v629 = vadd.f32 0.0, %v628
      %v630 = vpop.f32.mrb[0].mxu0
      %631 = vmatprep.mubr.f32.mxu0 0.0
      %632 = vmatmul.mubr.f32.gmra.mrb[0].mxu0 %v469
      %v633 = vpop.f32.mrb[0].mxu0
      %v634 = vpop.f32.mrb[0].mxu0
      %635 = vmatprep.mubr.f32.mxu0 0.0
      %636 = vmatmul.mubr.f32.gmra.mrb[0].mxu0 %v470
      %v637 = vpop.f32.mrb[0].mxu0
      %v638 = vadd.f32 0.0, %v637
      %v639 = vpop.f32.mrb[0].mxu0
      %640 = vmatprep.mubr.f32.mxu0 0.0
      %641 = vmatmul.mubr.f32.gmra.mrb[0].mxu0 %v471
      %v642 = vpop.f32.mrb[0].mxu0
      %v643 = vadd.f32 0.0, %v642
      %v644 = vpop.f32.mrb[0].mxu0
      %645 = vmatprep.mubr.f32.mxu0 0.0
      %646 = vmatmul.mubr.f32.gmra.mrb[0].mxu0 %v472
      %v647 = vpop.f32.mrb[0].mxu0
      %v648 = vpop.f32.mrb[0].mxu0
      %649 = vmatprep.mubr.f32.mxu0 0.0
      %650 = vmatmul.mubr.f32.gmra.mrb[0].mxu0 %v473
      %v651 = vpop.f32.mrb[0].mxu0
      %v652 = vadd.f32 0.0, %v651
      %v653 = vpop.f32.mrb[0].mxu0
      %654 = vmatprep.mubr.f32.mxu0 0.0
      %655 = vmatmul.mubr.f32.gmra.mrb[0].mxu0 %v474
      %v656 = vpop.f32.mrb[0].mxu0
      %v657 = vadd.f32 0.0, %v656
      %v658 = vpop.f32.mrb[0].mxu0
      %659 = vmatprep.mubr.f32.mxu0 0.0
      %660 = vmatmul.mubr.f32.gmra.mrb[0].mxu0 %v475
      %v661 = vpop.f32.mrb[0].mxu0
      %v662 = vpop.f32.mrb[0].mxu0
      %663 = vmatprep.mubr.f32.mxu0 0.0
      %664 = vmatmul.mubr.f32.gmra.mrb[0].mxu0 %v476
      %v665 = vpop.f32.mrb[0].mxu0
      %v666 = vadd.f32 0.0, %v665
      %v667 = vpop.f32.mrb[0].mxu0
      %668 = vmatprep.mubr.f32.mxu0 0.0
      %669 = vmatmul.mubr.f32.gmra.mrb[0].mxu0 %v477
      %v670 = vpop.f32.mrb[0].mxu0
      %v671 = vadd.f32 0.0, %v670
      %v672 = vpop.f32.mrb[0].mxu0
      %673 = vmatprep.mubr.f32.mxu0 0.0
      %674 = vmatmul.mubr.f32.gmra.mrb[0].mxu0 %v478
      %v675 = vpop.f32.mrb[0].mxu0
      %v676 = vpop.f32.mrb[0].mxu0
      %677 = vdwg.mxu0
      %v678 = vadd.f32 %v568, 0.0
      %v679 = vadd.f32 %v573, 0.0
      %v680 = vadd.f32 %v582, 0.0
      %v681 = vadd.f32 %v587, 0.0
      %v682 = vadd.f32 %v596, 0.0
      %v683 = vadd.f32 %v601, 0.0
      %v684 = vadd.f32 %v610, 0.0
      %v685 = vadd.f32 %v615, 0.0
      %v686 = vadd.f32 %v624, 0.0
      %v687 = vadd.f32 %v629, 0.0
      %v688 = vadd.f32 %v638, 0.0
      %v689 = vadd.f32 %v643, 0.0
      %v690 = vadd.f32 %v652, 0.0
      %v691 = vadd.f32 %v657, 0.0
      %v692 = vadd.f32 %v666, 0.0
      %v693 = vadd.f32 %v671, 0.0
      %s694 = scalar_lea.vmem %s185, 128
      %v695 = vld [vmem:[%s694] sm:$0xff]
      %v696 = vld [vmem:[%s694 + $0x8] sm:$0xff]
      %v697 = vld [vmem:[%s694 + $0x10] sm:$0xff]
      %v698 = vld [vmem:[%s694 + $0x18] sm:$0xff]
      %v699 = vld [vmem:[%s694 + $0x20] sm:$0xff]
      %v700 = vld [vmem:[%s694 + $0x28] sm:$0xff]
      %v701 = vld [vmem:[%s694 + $0x30] sm:$0xff]
      %v702 = vld [vmem:[%s694 + $0x38] sm:$0xff]
      %v703 = vld [vmem:[%s694 + $0x40] sm:$0xff]
      %v704 = vld [vmem:[%s694 + $0x48] sm:$0xff]
      %v705 = vld [vmem:[%s694 + $0x50] sm:$0xff]
      %v706 = vld [vmem:[%s694 + $0x58] sm:$0xff]
      %v707 = vld [vmem:[%s694 + $0x60] sm:$0xff]
      %v708 = vld [vmem:[%s694 + $0x68] sm:$0xff]
      %v709 = vld [vmem:[%s694 + $0x70] sm:$0xff]
      %v710 = vld [vmem:[%s694 + $0x78] sm:$0xff]
      %711 = vmatprep.subr.mxu0 0.0
      %712 = vmatpush1.msra.mxu0 %v695
      %713 = vmatprep.subr.mxu0 0.0
      %714 = vmatpush1.msra.mxu0 %v696
      %715 = vmatprep.subr.mxu0 0.0
      %716 = vmatpush1.msra.mxu0 %v697
      %717 = vmatprep.subr.mxu0 0.0
      %718 = vmatpush1.msra.mxu0 %v698
      %719 = vmatprep.subr.mxu0 0.0
      %720 = vmatpush1.msra.mxu0 %v699
      %721 = vmatprep.subr.mxu0 0.0
      %722 = vmatpush1.msra.mxu0 %v700
      %723 = vmatprep.subr.mxu0 0.0
      %724 = vmatpush1.msra.mxu0 %v701
      %725 = vmatprep.subr.mxu0 0.0
      %726 = vmatpush1.msra.mxu0 %v702
      %727 = vmatprep.subr.mxu0 0.0
      %728 = vmatpush1.msra.mxu0 %v703
      %729 = vmatprep.subr.mxu0 0.0
      %730 = vmatpush1.msra.mxu0 %v704
      %731 = vmatprep.subr.mxu0 0.0
      %732 = vmatpush1.msra.mxu0 %v705
      %733 = vmatprep.subr.mxu0 0.0
      %734 = vmatpush1.msra.mxu0 %v706
      %735 = vmatprep.subr.mxu0 0.0
      %736 = vmatpush1.msra.mxu0 %v707
      %737 = vmatprep.subr.mxu0 0.0
      %738 = vmatpush1.msra.mxu0 %v708
      %739 = vmatprep.subr.mxu0 0.0
      %740 = vmatpush1.msra.mxu0 %v709
      %741 = vmatprep.subr.mxu0 0.0
      %742 = vmatpush1.msra.mxu0 %v710
      %743 = vmatprep.subr.mxu0 0.0
      %744 = vmatpush1.msra.mxu0 0.0
      %745 = vmatprep.subr.mxu0 0.0
      %746 = vmatpush1.msra.mxu0 0.0
      %747 = vmatprep.subr.mxu0 0.0
      %748 = vmatpush1.msra.mxu0 0.0
      %749 = vmatprep.subr.mxu0 0.0
      %750 = vmatpush1.msra.mxu0 0.0
      %751 = vmatprep.subr.mxu0 0.0
      %752 = vmatpush1.msra.mxu0 0.0
      %753 = vmatprep.subr.mxu0 0.0
      %754 = vmatpush1.msra.mxu0 0.0
      %755 = vmatprep.subr.mxu0 0.0
      %756 = vmatpush1.msra.mxu0 0.0
      %757 = vmatprep.subr.mxu0 0.0
      %758 = vmatpush1.msra.mxu0 0.0
      %759 = vmatprep.subr.mxu0 0.0
      %760 = vmatpush1.msra.mxu0 0.0
      %761 = vmatprep.subr.mxu0 0.0
      %762 = vmatpush1.msra.mxu0 0.0
      %763 = vmatprep.subr.mxu0 0.0
      %764 = vmatpush1.msra.mxu0 0.0
      %765 = vmatprep.subr.mxu0 0.0
      %766 = vmatpush1.msra.mxu0 0.0
      %767 = vmatprep.subr.mxu0 0.0
      %768 = vmatpush1.msra.mxu0 0.0
      %769 = vmatprep.subr.mxu0 0.0
      %770 = vmatpush1.msra.mxu0 0.0
      %771 = vmatprep.subr.mxu0 0.0
      %772 = vmatpush1.msra.mxu0 0.0
      %773 = vmatprep.subr.mxu0 0.0
      %774 = vmatpush1.msra.mxu0 0.0
      %775 = vmatprep.mubr.f32.mxu0 0.0
      %776 = vmatmul.mubr.f32.gmra.mrb[0].mxu0 %v455
      %v777 = vpop.f32.mrb[0].mxu0
      %v778 = vadd.f32 0.0, %v777
      %v779 = vpop.f32.mrb[0].mxu0
      %780 = vmatprep.mubr.f32.mxu0 0.0
      %781 = vmatmul.mubr.f32.gmra.mrb[0].mxu0 %v456
      %v782 = vpop.f32.mrb[0].mxu0
      %v783 = vadd.f32 0.0, %v782
      %v784 = vpop.f32.mrb[0].mxu0
      %785 = vmatprep.mubr.f32.mxu0 0.0
      %786 = vmatmul.mubr.f32.gmra.mrb[0].mxu0 %v457
      %v787 = vpop.f32.mrb[0].mxu0
      %v788 = vadd.f32 0.0, %v787
      %v789 = vpop.f32.mrb[0].mxu0
      %790 = vmatprep.mubr.f32.mxu0 0.0
      %791 = vmatmul.mubr.f32.gmra.mrb[0].mxu0 %v458
      %v792 = vpop.f32.mrb[0].mxu0
      %v793 = vadd.f32 0.0, %v792
      %v794 = vpop.f32.mrb[0].mxu0
      %795 = vmatprep.mubr.f32.mxu0 0.0
      %796 = vmatmul.mubr.f32.gmra.mrb[0].mxu0 %v459
      %v797 = vpop.f32.mrb[0].mxu0
      %v798 = vadd.f32 0.0, %v797
      %v799 = vpop.f32.mrb[0].mxu0
      %800 = vmatprep.mubr.f32.mxu0 0.0
      %801 = vmatmul.mubr.f32.gmra.mrb[0].mxu0 %v460
      %v802 = vpop.f32.mrb[0].mxu0
      %v803 = vadd.f32 0.0, %v802
      %v804 = vpop.f32.mrb[0].mxu0
      %805 = vmatprep.mubr.f32.mxu0 0.0
      %806 = vmatmul.mubr.f32.gmra.mrb[0].mxu0 %v461
      %v807 = vpop.f32.mrb[0].mxu0
      %v808 = vadd.f32 0.0, %v807
      %v809 = vpop.f32.mrb[0].mxu0
      %810 = vmatprep.mubr.f32.mxu0 0.0
      %811 = vmatmul.mubr.f32.gmra.mrb[0].mxu0 %v462
      %v812 = vpop.f32.mrb[0].mxu0
      %v813 = vadd.f32 0.0, %v812
      %v814 = vpop.f32.mrb[0].mxu0
      %815 = vmatprep.mubr.f32.mxu0 0.0
      %816 = vmatmul.mubr.f32.gmra.mrb[0].mxu0 %v463
      %v817 = vpop.f32.mrb[0].mxu0
      %v818 = vadd.f32 0.0, %v817
      %v819 = vpop.f32.mrb[0].mxu0
      %820 = vmatprep.mubr.f32.mxu0 0.0
      %821 = vmatmul.mubr.f32.gmra.mrb[0].mxu0 %v464
      %v822 = vpop.f32.mrb[0].mxu0
      %v823 = vadd.f32 0.0, %v822
      %v824 = vpop.f32.mrb[0].mxu0
      %825 = vmatprep.mubr.f32.mxu0 0.0
      %826 = vmatmul.mubr.f32.gmra.mrb[0].mxu0 %v465
      %v827 = vpop.f32.mrb[0].mxu0
      %v828 = vadd.f32 0.0, %v827
      %v829 = vpop.f32.mrb[0].mxu0
      %830 = vmatprep.mubr.f32.mxu0 0.0
      %831 = vmatmul.mubr.f32.gmra.mrb[0].mxu0 %v466
      %v832 = vpop.f32.mrb[0].mxu0
      %v833 = vadd.f32 0.0, %v832
      %v834 = vpop.f32.mrb[0].mxu0
      %835 = vmatprep.mubr.f32.mxu0 0.0
      %836 = vmatmul.mubr.f32.gmra.mrb[0].mxu0 %v467
      %v837 = vpop.f32.mrb[0].mxu0
      %v838 = vadd.f32 0.0, %v837
      %v839 = vpop.f32.mrb[0].mxu0
      %840 = vmatprep.mubr.f32.mxu0 0.0
      %841 = vmatmul.mubr.f32.gmra.mrb[0].mxu0 %v468
      %v842 = vpop.f32.mrb[0].mxu0
      %v843 = vadd.f32 0.0, %v842
      %v844 = vpop.f32.mrb[0].mxu0
      %845 = vmatprep.mubr.f32.mxu0 0.0
      %846 = vmatmul.mubr.f32.gmra.mrb[0].mxu0 %v469
      %v847 = vpop.f32.mrb[0].mxu0
      %v848 = vadd.f32 0.0, %v847
      %v849 = vpop.f32.mrb[0].mxu0
      %850 = vmatprep.mubr.f32.mxu0 0.0
      %851 = vmatmul.mubr.f32.gmra.mrb[0].mxu0 %v470
      %v852 = vpop.f32.mrb[0].mxu0
      %v853 = vadd.f32 0.0, %v852
      %v854 = vpop.f32.mrb[0].mxu0
      %855 = vmatprep.mubr.f32.mxu0 0.0
      %856 = vmatmul.mubr.f32.gmra.mrb[0].mxu0 %v471
      %v857 = vpop.f32.mrb[0].mxu0
      %v858 = vadd.f32 0.0, %v857
      %v859 = vpop.f32.mrb[0].mxu0
      %860 = vmatprep.mubr.f32.mxu0 0.0
      %861 = vmatmul.mubr.f32.gmra.mrb[0].mxu0 %v472
      %v862 = vpop.f32.mrb[0].mxu0
      %v863 = vadd.f32 0.0, %v862
      %v864 = vpop.f32.mrb[0].mxu0
      %865 = vmatprep.mubr.f32.mxu0 0.0
      %866 = vmatmul.mubr.f32.gmra.mrb[0].mxu0 %v473
      %v867 = vpop.f32.mrb[0].mxu0
      %v868 = vadd.f32 0.0, %v867
      %v869 = vpop.f32.mrb[0].mxu0
      %870 = vmatprep.mubr.f32.mxu0 0.0
      %871 = vmatmul.mubr.f32.gmra.mrb[0].mxu0 %v474
      %v872 = vpop.f32.mrb[0].mxu0
      %v873 = vadd.f32 0.0, %v872
      %v874 = vpop.f32.mrb[0].mxu0
      %875 = vmatprep.mubr.f32.mxu0 0.0
      %876 = vmatmul.mubr.f32.gmra.mrb[0].mxu0 %v475
      %v877 = vpop.f32.mrb[0].mxu0
      %v878 = vadd.f32 0.0, %v877
      %v879 = vpop.f32.mrb[0].mxu0
      %880 = vmatprep.mubr.f32.mxu0 0.0
      %881 = vmatmul.mubr.f32.gmra.mrb[0].mxu0 %v476
      %v882 = vpop.f32.mrb[0].mxu0
      %v883 = vadd.f32 0.0, %v882
      %v884 = vpop.f32.mrb[0].mxu0
      %885 = vmatprep.mubr.f32.mxu0 0.0
      %886 = vmatmul.mubr.f32.gmra.mrb[0].mxu0 %v477
      %v887 = vpop.f32.mrb[0].mxu0
      %v888 = vadd.f32 0.0, %v887
      %v889 = vpop.f32.mrb[0].mxu0
      %890 = vmatprep.mubr.f32.mxu0 0.0
      %891 = vmatmul.mubr.f32.gmra.mrb[0].mxu0 %v478
      %v892 = vpop.f32.mrb[0].mxu0
      %v893 = vadd.f32 0.0, %v892
      %v894 = vpop.f32.mrb[0].mxu0
      %895 = vdwg.mxu0
      %vm920 = vcmask 1046528
      %v921 = vrot.slane %v778, 1
      %v922 = vrot.slane %v783, 1
      %v923 = vsel %vm920, %v921, %v922
      %v924 = vrot.slane %v788, 1
      %v925 = vsel %vm920, %v922, %v924
      %v926 = vrot.slane %v793, 1
      %v927 = vrot.slane %v798, 1
      %v928 = vsel %vm920, %v926, %v927
      %v929 = vrot.slane %v803, 1
      %v930 = vsel %vm920, %v927, %v929
      %v931 = vrot.slane %v808, 1
      %v932 = vrot.slane %v813, 1
      %v933 = vsel %vm920, %v931, %v932
      %v934 = vrot.slane %v818, 1
      %v935 = vsel %vm920, %v932, %v934
      %v936 = vrot.slane %v823, 1
      %v937 = vrot.slane %v828, 1
      %v938 = vsel %vm920, %v936, %v937
      %v939 = vrot.slane %v833, 1
      %v940 = vsel %vm920, %v937, %v939
      %v941 = vrot.slane %v838, 1
      %v942 = vrot.slane %v843, 1
      %v943 = vsel %vm920, %v941, %v942
      %v944 = vrot.slane %v848, 1
      %v945 = vsel %vm920, %v942, %v944
      %v946 = vrot.slane %v853, 1
      %v947 = vrot.slane %v858, 1
      %v948 = vsel %vm920, %v946, %v947
      %v949 = vrot.slane %v863, 1
      %v950 = vsel %vm920, %v947, %v949
      %v951 = vrot.slane %v868, 1
      %v952 = vrot.slane %v873, 1
      %v953 = vsel %vm920, %v951, %v952
      %v954 = vrot.slane %v878, 1
      %v955 = vsel %vm920, %v952, %v954
      %v956 = vrot.slane %v883, 1
      %v957 = vrot.slane %v888, 1
      %v958 = vsel %vm920, %v956, %v957
      %v959 = vrot.slane %v893, 1
      %v960 = vsel %vm920, %v957, %v959
      %v977 = vadd.f32 %v678, %v923
      %v978 = vadd.f32 %v679, %v925
      %v979 = vadd.f32 %v680, %v928
      %v980 = vadd.f32 %v681, %v930
      %v981 = vadd.f32 %v682, %v933
      %v982 = vadd.f32 %v683, %v935
      %v983 = vadd.f32 %v684, %v938
      %v984 = vadd.f32 %v685, %v940
      %v985 = vadd.f32 %v686, %v943
      %v986 = vadd.f32 %v687, %v945
      %v987 = vadd.f32 %v688, %v948
      %v988 = vadd.f32 %v689, %v950
      %v989 = vadd.f32 %v690, %v953
      %v990 = vadd.f32 %v691, %v955
      %v991 = vadd.f32 %v692, %v958
      %v992 = vadd.f32 %v693, %v960
      %s993 = scalar_lea.vmem %s185, 256
      %v994 = vld [vmem:[%s993] sm:$0xff]
      %v995 = vld [vmem:[%s993 + $0x8] sm:$0xff]
      %v996 = vld [vmem:[%s993 + $0x10] sm:$0xff]
      %v997 = vld [vmem:[%s993 + $0x18] sm:$0xff]
      %v998 = vld [vmem:[%s993 + $0x20] sm:$0xff]
      %v999 = vld [vmem:[%s993 + $0x28] sm:$0xff]
      %v1000 = vld [vmem:[%s993 + $0x30] sm:$0xff]
      %v1001 = vld [vmem:[%s993 + $0x38] sm:$0xff]
      %v1002 = vld [vmem:[%s993 + $0x40] sm:$0xff]
      %v1003 = vld [vmem:[%s993 + $0x48] sm:$0xff]
      %v1004 = vld [vmem:[%s993 + $0x50] sm:$0xff]
      %v1005 = vld [vmem:[%s993 + $0x58] sm:$0xff]
      %v1006 = vld [vmem:[%s993 + $0x60] sm:$0xff]
      %v1007 = vld [vmem:[%s993 + $0x68] sm:$0xff]
      %v1008 = vld [vmem:[%s993 + $0x70] sm:$0xff]
      %v1009 = vld [vmem:[%s993 + $0x78] sm:$0xff]
      %1010 = vmatprep.subr.mxu0 0.0
      %1011 = vmatpush1.msra.mxu0 %v994
      %1012 = vmatprep.subr.mxu0 0.0
      %1013 = vmatpush1.msra.mxu0 %v995
      %1014 = vmatprep.subr.mxu0 0.0
      %1015 = vmatpush1.msra.mxu0 %v996
      %1016 = vmatprep.subr.mxu0 0.0
      %1017 = vmatpush1.msra.mxu0 %v997
      %1018 = vmatprep.subr.mxu0 0.0
      %1019 = vmatpush1.msra.mxu0 %v998
      %1020 = vmatprep.subr.mxu0 0.0
      %1021 = vmatpush1.msra.mxu0 %v999
      %1022 = vmatprep.subr.mxu0 0.0
      %1023 = vmatpush1.msra.mxu0 %v1000
      %1024 = vmatprep.subr.mxu0 0.0
      %1025 = vmatpush1.msra.mxu0 %v1001
      %1026 = vmatprep.subr.mxu0 0.0
      %1027 = vmatpush1.msra.mxu0 %v1002
      %1028 = vmatprep.subr.mxu0 0.0
      %1029 = vmatpush1.msra.mxu0 %v1003
      %1030 = vmatprep.subr.mxu0 0.0
      %1031 = vmatpush1.msra.mxu0 %v1004
      %1032 = vmatprep.subr.mxu0 0.0
      %1033 = vmatpush1.msra.mxu0 %v1005
      %1034 = vmatprep.subr.mxu0 0.0
      %1035 = vmatpush1.msra.mxu0 %v1006
      %1036 = vmatprep.subr.mxu0 0.0
      %1037 = vmatpush1.msra.mxu0 %v1007
      %1038 = vmatprep.subr.mxu0 0.0
      %1039 = vmatpush1.msra.mxu0 %v1008
      %1040 = vmatprep.subr.mxu0 0.0
      %1041 = vmatpush1.msra.mxu0 %v1009
      %1042 = vmatprep.subr.mxu0 0.0
      %1043 = vmatpush1.msra.mxu0 0.0
      %1044 = vmatprep.subr.mxu0 0.0
      %1045 = vmatpush1.msra.mxu0 0.0
      %1046 = vmatprep.subr.mxu0 0.0
      %1047 = vmatpush1.msra.mxu0 0.0
      %1048 = vmatprep.subr.mxu0 0.0
      %1049 = vmatpush1.msra.mxu0 0.0
      %1050 = vmatprep.subr.mxu0 0.0
      %1051 = vmatpush1.msra.mxu0 0.0
      %1052 = vmatprep.subr.mxu0 0.0
      %1053 = vmatpush1.msra.mxu0 0.0
      %1054 = vmatprep.subr.mxu0 0.0
      %1055 = vmatpush1.msra.mxu0 0.0
      %1056 = vmatprep.subr.mxu0 0.0
      %1057 = vmatpush1.msra.mxu0 0.0
      %1058 = vmatprep.subr.mxu0 0.0
      %1059 = vmatpush1.msra.mxu0 0.0
      %1060 = vmatprep.subr.mxu0 0.0
      %1061 = vmatpush1.msra.mxu0 0.0
      %1062 = vmatprep.subr.mxu0 0.0
      %1063 = vmatpush1.msra.mxu0 0.0
      %1064 = vmatprep.subr.mxu0 0.0
      %1065 = vmatpush1.msra.mxu0 0.0
      %1066 = vmatprep.subr.mxu0 0.0
      %1067 = vmatpush1.msra.mxu0 0.0
      %1068 = vmatprep.subr.mxu0 0.0
      %1069 = vmatpush1.msra.mxu0 0.0
      %1070 = vmatprep.subr.mxu0 0.0
      %1071 = vmatpush1.msra.mxu0 0.0
      %1072 = vmatprep.subr.mxu0 0.0
      %1073 = vmatpush1.msra.mxu0 0.0
      %1074 = vmatprep.mubr.f32.mxu0 0.0
      %1075 = vmatmul.mubr.f32.gmra.mrb[0].mxu0 %v455
      %v1076 = vpop.f32.mrb[0].mxu0
      %v1077 = vadd.f32 0.0, %v1076
      %v1078 = vpop.f32.mrb[0].mxu0
      %1079 = vmatprep.mubr.f32.mxu0 0.0
      %1080 = vmatmul.mubr.f32.gmra.mrb[0].mxu0 %v456
      %v1081 = vpop.f32.mrb[0].mxu0
      %v1082 = vadd.f32 0.0, %v1081
      %v1083 = vpop.f32.mrb[0].mxu0
      %1084 = vmatprep.mubr.f32.mxu0 0.0
      %1085 = vmatmul.mubr.f32.gmra.mrb[0].mxu0 %v457
      %v1086 = vpop.f32.mrb[0].mxu0
      %v1087 = vadd.f32 0.0, %v1086
      %v1088 = vpop.f32.mrb[0].mxu0
      %1089 = vmatprep.mubr.f32.mxu0 0.0
      %1090 = vmatmul.mubr.f32.gmra.mrb[0].mxu0 %v458
      %v1091 = vpop.f32.mrb[0].mxu0
      %v1092 = vadd.f32 0.0, %v1091
      %v1093 = vpop.f32.mrb[0].mxu0
      %1094 = vmatprep.mubr.f32.mxu0 0.0
      %1095 = vmatmul.mubr.f32.gmra.mrb[0].mxu0 %v459
      %v1096 = vpop.f32.mrb[0].mxu0
      %v1097 = vadd.f32 0.0, %v1096
      %v1098 = vpop.f32.mrb[0].mxu0
      %1099 = vmatprep.mubr.f32.mxu0 0.0
      %1100 = vmatmul.mubr.f32.gmra.mrb[0].mxu0 %v460
      %v1101 = vpop.f32.mrb[0].mxu0
      %v1102 = vadd.f32 0.0, %v1101
      %v1103 = vpop.f32.mrb[0].mxu0
      %1104 = vmatprep.mubr.f32.mxu0 0.0
      %1105 = vmatmul.mubr.f32.gmra.mrb[0].mxu0 %v461
      %v1106 = vpop.f32.mrb[0].mxu0
      %v1107 = vadd.f32 0.0, %v1106
      %v1108 = vpop.f32.mrb[0].mxu0
      %1109 = vmatprep.mubr.f32.mxu0 0.0
      %1110 = vmatmul.mubr.f32.gmra.mrb[0].mxu0 %v462
      %v1111 = vpop.f32.mrb[0].mxu0
      %v1112 = vadd.f32 0.0, %v1111
      %v1113 = vpop.f32.mrb[0].mxu0
      %1114 = vmatprep.mubr.f32.mxu0 0.0
      %1115 = vmatmul.mubr.f32.gmra.mrb[0].mxu0 %v463
      %v1116 = vpop.f32.mrb[0].mxu0
      %v1117 = vadd.f32 0.0, %v1116
      %v1118 = vpop.f32.mrb[0].mxu0
      %1119 = vmatprep.mubr.f32.mxu0 0.0
      %1120 = vmatmul.mubr.f32.gmra.mrb[0].mxu0 %v464
      %v1121 = vpop.f32.mrb[0].mxu0
      %v1122 = vadd.f32 0.0, %v1121
      %v1123 = vpop.f32.mrb[0].mxu0
      %1124 = vmatprep.mubr.f32.mxu0 0.0
      %1125 = vmatmul.mubr.f32.gmra.mrb[0].mxu0 %v465
      %v1126 = vpop.f32.mrb[0].mxu0
      %v1127 = vadd.f32 0.0, %v1126
      %v1128 = vpop.f32.mrb[0].mxu0
      %1129 = vmatprep.mubr.f32.mxu0 0.0
      %1130 = vmatmul.mubr.f32.gmra.mrb[0].mxu0 %v466
      %v1131 = vpop.f32.mrb[0].mxu0
      %v1132 = vadd.f32 0.0, %v1131
      %v1133 = vpop.f32.mrb[0].mxu0
      %1134 = vmatprep.mubr.f32.mxu0 0.0
      %1135 = vmatmul.mubr.f32.gmra.mrb[0].mxu0 %v467
      %v1136 = vpop.f32.mrb[0].mxu0
      %v1137 = vadd.f32 0.0, %v1136
      %v1138 = vpop.f32.mrb[0].mxu0
      %1139 = vmatprep.mubr.f32.mxu0 0.0
      %1140 = vmatmul.mubr.f32.gmra.mrb[0].mxu0 %v468
      %v1141 = vpop.f32.mrb[0].mxu0
      %v1142 = vadd.f32 0.0, %v1141
      %v1143 = vpop.f32.mrb[0].mxu0
      %1144 = vmatprep.mubr.f32.mxu0 0.0
      %1145 = vmatmul.mubr.f32.gmra.mrb[0].mxu0 %v469
      %v1146 = vpop.f32.mrb[0].mxu0
      %v1147 = vadd.f32 0.0, %v1146
      %v1148 = vpop.f32.mrb[0].mxu0
      %1149 = vmatprep.mubr.f32.mxu0 0.0
      %1150 = vmatmul.mubr.f32.gmra.mrb[0].mxu0 %v470
      %v1151 = vpop.f32.mrb[0].mxu0
      %v1152 = vadd.f32 0.0, %v1151
      %v1153 = vpop.f32.mrb[0].mxu0
      %1154 = vmatprep.mubr.f32.mxu0 0.0
      %1155 = vmatmul.mubr.f32.gmra.mrb[0].mxu0 %v471
      %v1156 = vpop.f32.mrb[0].mxu0
      %v1157 = vadd.f32 0.0, %v1156
      %v1158 = vpop.f32.mrb[0].mxu0
      %1159 = vmatprep.mubr.f32.mxu0 0.0
      %1160 = vmatmul.mubr.f32.gmra.mrb[0].mxu0 %v472
      %v1161 = vpop.f32.mrb[0].mxu0
      %v1162 = vadd.f32 0.0, %v1161
      %v1163 = vpop.f32.mrb[0].mxu0
      %1164 = vmatprep.mubr.f32.mxu0 0.0
      %1165 = vmatmul.mubr.f32.gmra.mrb[0].mxu0 %v473
      %v1166 = vpop.f32.mrb[0].mxu0
      %v1167 = vadd.f32 0.0, %v1166
      %v1168 = vpop.f32.mrb[0].mxu0
      %1169 = vmatprep.mubr.f32.mxu0 0.0
      %1170 = vmatmul.mubr.f32.gmra.mrb[0].mxu0 %v474
      %v1171 = vpop.f32.mrb[0].mxu0
      %v1172 = vadd.f32 0.0, %v1171
      %v1173 = vpop.f32.mrb[0].mxu0
      %1174 = vmatprep.mubr.f32.mxu0 0.0
      %1175 = vmatmul.mubr.f32.gmra.mrb[0].mxu0 %v475
      %v1176 = vpop.f32.mrb[0].mxu0
      %v1177 = vadd.f32 0.0, %v1176
      %v1178 = vpop.f32.mrb[0].mxu0
      %1179 = vmatprep.mubr.f32.mxu0 0.0
      %1180 = vmatmul.mubr.f32.gmra.mrb[0].mxu0 %v476
      %v1181 = vpop.f32.mrb[0].mxu0
      %v1182 = vadd.f32 0.0, %v1181
      %v1183 = vpop.f32.mrb[0].mxu0
      %1184 = vmatprep.mubr.f32.mxu0 0.0
      %1185 = vmatmul.mubr.f32.gmra.mrb[0].mxu0 %v477
      %v1186 = vpop.f32.mrb[0].mxu0
      %v1187 = vadd.f32 0.0, %v1186
      %v1188 = vpop.f32.mrb[0].mxu0
      %1189 = vmatprep.mubr.f32.mxu0 0.0
      %1190 = vmatmul.mubr.f32.gmra.mrb[0].mxu0 %v478
      %v1191 = vpop.f32.mrb[0].mxu0
      %v1192 = vadd.f32 0.0, %v1191
      %v1193 = vpop.f32.mrb[0].mxu0
      %1194 = vdwg.mxu0
      %vm1219 = vcmask 1045504
      %v1220 = vrot.slane %v1077, 2
      %v1221 = vrot.slane %v1082, 2
      %v1222 = vsel %vm1219, %v1220, %v1221
      %v1223 = vrot.slane %v1087, 2
      %v1224 = vsel %vm1219, %v1221, %v1223
      %v1225 = vrot.slane %v1092, 2
      %v1226 = vrot.slane %v1097, 2
      %v1227 = vsel %vm1219, %v1225, %v1226
      %v1228 = vrot.slane %v1102, 2
      %v1229 = vsel %vm1219, %v1226, %v1228
      %v1230 = vrot.slane %v1107, 2
      %v1231 = vrot.slane %v1112, 2
      %v1232 = vsel %vm1219, %v1230, %v1231
      %v1233 = vrot.slane %v1117, 2
      %v1234 = vsel %vm1219, %v1231, %v1233
      %v1235 = vrot.slane %v1122, 2
      %v1236 = vrot.slane %v1127, 2
      %v1237 = vsel %vm1219, %v1235, %v1236
      %v1238 = vrot.slane %v1132, 2
      %v1239 = vsel %vm1219, %v1236, %v1238
      %v1240 = vrot.slane %v1137, 2
      %v1241 = vrot.slane %v1142, 2
      %v1242 = vsel %vm1219, %v1240, %v1241
      %v1243 = vrot.slane %v1147, 2
      %v1244 = vsel %vm1219, %v1241, %v1243
      %v1245 = vrot.slane %v1152, 2
      %v1246 = vrot.slane %v1157, 2
      %v1247 = vsel %vm1219, %v1245, %v1246
      %v1248 = vrot.slane %v1162, 2
      %v1249 = vsel %vm1219, %v1246, %v1248
      %v1250 = vrot.slane %v1167, 2
      %v1251 = vrot.slane %v1172, 2
      %v1252 = vsel %vm1219, %v1250, %v1251
      %v1253 = vrot.slane %v1177, 2
      %v1254 = vsel %vm1219, %v1251, %v1253
      %v1255 = vrot.slane %v1182, 2
      %v1256 = vrot.slane %v1187, 2
      %v1257 = vsel %vm1219, %v1255, %v1256
      %v1258 = vrot.slane %v1192, 2
      %v1259 = vsel %vm1219, %v1256, %v1258
      %v1276 = vadd.f32 %v977, %v1222
      %v1277 = vadd.f32 %v978, %v1224
      %v1278 = vadd.f32 %v979, %v1227
      %v1279 = vadd.f32 %v980, %v1229
      %v1280 = vadd.f32 %v981, %v1232
      %v1281 = vadd.f32 %v982, %v1234
      %v1282 = vadd.f32 %v983, %v1237
      %v1283 = vadd.f32 %v984, %v1239
      %v1284 = vadd.f32 %v985, %v1242
      %v1285 = vadd.f32 %v986, %v1244
      %v1286 = vadd.f32 %v987, %v1247
      %v1287 = vadd.f32 %v988, %v1249
      %v1288 = vadd.f32 %v989, %v1252
      %v1289 = vadd.f32 %v990, %v1254
      %v1290 = vadd.f32 %v991, %v1257
      %v1291 = vadd.f32 %v992, %v1259
      %s1292 = scalar_lea.vmem %s185, 384
      %v1293 = vld [vmem:[%s1292] sm:$0xff]
      %v1294 = vld [vmem:[%s1292 + $0x8] sm:$0xff]
      %v1295 = vld [vmem:[%s1292 + $0x10] sm:$0xff]
      %v1296 = vld [vmem:[%s1292 + $0x18] sm:$0xff]
      %v1297 = vld [vmem:[%s1292 + $0x20] sm:$0xff]
      %v1298 = vld [vmem:[%s1292 + $0x28] sm:$0xff]
      %v1299 = vld [vmem:[%s1292 + $0x30] sm:$0xff]
      %v1300 = vld [vmem:[%s1292 + $0x38] sm:$0xff]
      %v1301 = vld [vmem:[%s1292 + $0x40] sm:$0xff]
      %v1302 = vld [vmem:[%s1292 + $0x48] sm:$0xff]
      %v1303 = vld [vmem:[%s1292 + $0x50] sm:$0xff]
      %v1304 = vld [vmem:[%s1292 + $0x58] sm:$0xff]
      %v1305 = vld [vmem:[%s1292 + $0x60] sm:$0xff]
      %v1306 = vld [vmem:[%s1292 + $0x68] sm:$0xff]
      %v1307 = vld [vmem:[%s1292 + $0x70] sm:$0xff]
      %v1308 = vld [vmem:[%s1292 + $0x78] sm:$0xff]
      %1309 = vmatprep.subr.mxu0 0.0
      %1310 = vmatpush1.msra.mxu0 %v1293
      %1311 = vmatprep.subr.mxu0 0.0
      %1312 = vmatpush1.msra.mxu0 %v1294
      %1313 = vmatprep.subr.mxu0 0.0
      %1314 = vmatpush1.msra.mxu0 %v1295
      %1315 = vmatprep.subr.mxu0 0.0
      %1316 = vmatpush1.msra.mxu0 %v1296
      %1317 = vmatprep.subr.mxu0 0.0
      %1318 = vmatpush1.msra.mxu0 %v1297
      %1319 = vmatprep.subr.mxu0 0.0
      %1320 = vmatpush1.msra.mxu0 %v1298
      %1321 = vmatprep.subr.mxu0 0.0
      %1322 = vmatpush1.msra.mxu0 %v1299
      %1323 = vmatprep.subr.mxu0 0.0
      %1324 = vmatpush1.msra.mxu0 %v1300
      %1325 = vmatprep.subr.mxu0 0.0
      %1326 = vmatpush1.msra.mxu0 %v1301
      %1327 = vmatprep.subr.mxu0 0.0
      %1328 = vmatpush1.msra.mxu0 %v1302
      %1329 = vmatprep.subr.mxu0 0.0
      %1330 = vmatpush1.msra.mxu0 %v1303
      %1331 = vmatprep.subr.mxu0 0.0
      %1332 = vmatpush1.msra.mxu0 %v1304
      %1333 = vmatprep.subr.mxu0 0.0
      %1334 = vmatpush1.msra.mxu0 %v1305
      %1335 = vmatprep.subr.mxu0 0.0
      %1336 = vmatpush1.msra.mxu0 %v1306
      %1337 = vmatprep.subr.mxu0 0.0
      %1338 = vmatpush1.msra.mxu0 %v1307
      %1339 = vmatprep.subr.mxu0 0.0
      %1340 = vmatpush1.msra.mxu0 %v1308
      %1341 = vmatprep.subr.mxu0 0.0
      %1342 = vmatpush1.msra.mxu0 0.0
      %1343 = vmatprep.subr.mxu0 0.0
      %1344 = vmatpush1.msra.mxu0 0.0
      %1345 = vmatprep.subr.mxu0 0.0
      %1346 = vmatpush1.msra.mxu0 0.0
      %1347 = vmatprep.subr.mxu0 0.0
      %1348 = vmatpush1.msra.mxu0 0.0
      %1349 = vmatprep.subr.mxu0 0.0
      %1350 = vmatpush1.msra.mxu0 0.0
      %1351 = vmatprep.subr.mxu0 0.0
      %1352 = vmatpush1.msra.mxu0 0.0
      %1353 = vmatprep.subr.mxu0 0.0
      %1354 = vmatpush1.msra.mxu0 0.0
      %1355 = vmatprep.subr.mxu0 0.0
      %1356 = vmatpush1.msra.mxu0 0.0
      %1357 = vmatprep.subr.mxu0 0.0
      %1358 = vmatpush1.msra.mxu0 0.0
      %1359 = vmatprep.subr.mxu0 0.0
      %1360 = vmatpush1.msra.mxu0 0.0
      %1361 = vmatprep.subr.mxu0 0.0
      %1362 = vmatpush1.msra.mxu0 0.0
      %1363 = vmatprep.subr.mxu0 0.0
      %1364 = vmatpush1.msra.mxu0 0.0
      %1365 = vmatprep.subr.mxu0 0.0
      %1366 = vmatpush1.msra.mxu0 0.0
      %1367 = vmatprep.subr.mxu0 0.0
      %1368 = vmatpush1.msra.mxu0 0.0
      %1369 = vmatprep.subr.mxu0 0.0
      %1370 = vmatpush1.msra.mxu0 0.0
      %1371 = vmatprep.subr.mxu0 0.0
      %1372 = vmatpush1.msra.mxu0 0.0
      %1373 = vmatprep.mubr.f32.mxu0 0.0
      %1374 = vmatmul.mubr.f32.gmra.mrb[0].mxu0 %v458
      %v1375 = vpop.f32.mrb[0].mxu0
      %v1376 = vadd.f32 0.0, %v1375
      %v1377 = vpop.f32.mrb[0].mxu0
      %1378 = vmatprep.mubr.f32.mxu0 0.0
      %1379 = vmatmul.mubr.f32.gmra.mrb[0].mxu0 %v459
      %v1380 = vpop.f32.mrb[0].mxu0
      %v1381 = vadd.f32 0.0, %v1380
      %v1382 = vpop.f32.mrb[0].mxu0
      %1383 = vmatprep.mubr.f32.mxu0 0.0
      %1384 = vmatmul.mubr.f32.gmra.mrb[0].mxu0 %v460
      %v1385 = vpop.f32.mrb[0].mxu0
      %v1386 = vpop.f32.mrb[0].mxu0
      %1387 = vmatprep.mubr.f32.mxu0 0.0
      %1388 = vmatmul.mubr.f32.gmra.mrb[0].mxu0 %v461
      %v1389 = vpop.f32.mrb[0].mxu0
      %v1390 = vadd.f32 0.0, %v1389
      %v1391 = vpop.f32.mrb[0].mxu0
      %1392 = vmatprep.mubr.f32.mxu0 0.0
      %1393 = vmatmul.mubr.f32.gmra.mrb[0].mxu0 %v462
      %v1394 = vpop.f32.mrb[0].mxu0
      %v1395 = vadd.f32 0.0, %v1394
      %v1396 = vpop.f32.mrb[0].mxu0
      %1397 = vmatprep.mubr.f32.mxu0 0.0
      %1398 = vmatmul.mubr.f32.gmra.mrb[0].mxu0 %v463
      %v1399 = vpop.f32.mrb[0].mxu0
      %v1400 = vpop.f32.mrb[0].mxu0
      %1401 = vmatprep.mubr.f32.mxu0 0.0
      %1402 = vmatmul.mubr.f32.gmra.mrb[0].mxu0 %v464
      %v1403 = vpop.f32.mrb[0].mxu0
      %v1404 = vadd.f32 0.0, %v1403
      %v1405 = vpop.f32.mrb[0].mxu0
      %1406 = vmatprep.mubr.f32.mxu0 0.0
      %1407 = vmatmul.mubr.f32.gmra.mrb[0].mxu0 %v465
      %v1408 = vpop.f32.mrb[0].mxu0
      %v1409 = vadd.f32 0.0, %v1408
      %v1410 = vpop.f32.mrb[0].mxu0
      %1411 = vmatprep.mubr.f32.mxu0 0.0
      %1412 = vmatmul.mubr.f32.gmra.mrb[0].mxu0 %v466
      %v1413 = vpop.f32.mrb[0].mxu0
      %v1414 = vpop.f32.mrb[0].mxu0
      %1415 = vmatprep.mubr.f32.mxu0 0.0
      %1416 = vmatmul.mubr.f32.gmra.mrb[0].mxu0 %v467
      %v1417 = vpop.f32.mrb[0].mxu0
      %v1418 = vadd.f32 0.0, %v1417
      %v1419 = vpop.f32.mrb[0].mxu0
      %1420 = vmatprep.mubr.f32.mxu0 0.0
      %1421 = vmatmul.mubr.f32.gmra.mrb[0].mxu0 %v468
      %v1422 = vpop.f32.mrb[0].mxu0
      %v1423 = vadd.f32 0.0, %v1422
      %v1424 = vpop.f32.mrb[0].mxu0
      %1425 = vmatprep.mubr.f32.mxu0 0.0
      %1426 = vmatmul.mubr.f32.gmra.mrb[0].mxu0 %v469
      %v1427 = vpop.f32.mrb[0].mxu0
      %v1428 = vpop.f32.mrb[0].mxu0
      %1429 = vmatprep.mubr.f32.mxu0 0.0
      %1430 = vmatmul.mubr.f32.gmra.mrb[0].mxu0 %v470
      %v1431 = vpop.f32.mrb[0].mxu0
      %v1432 = vadd.f32 0.0, %v1431
      %v1433 = vpop.f32.mrb[0].mxu0
      %1434 = vmatprep.mubr.f32.mxu0 0.0
      %1435 = vmatmul.mubr.f32.gmra.mrb[0].mxu0 %v471
      %v1436 = vpop.f32.mrb[0].mxu0
      %v1437 = vadd.f32 0.0, %v1436
      %v1438 = vpop.f32.mrb[0].mxu0
      %1439 = vmatprep.mubr.f32.mxu0 0.0
      %1440 = vmatmul.mubr.f32.gmra.mrb[0].mxu0 %v472
      %v1441 = vpop.f32.mrb[0].mxu0
      %v1442 = vpop.f32.mrb[0].mxu0
      %1443 = vmatprep.mubr.f32.mxu0 0.0
      %1444 = vmatmul.mubr.f32.gmra.mrb[0].mxu0 %v473
      %v1445 = vpop.f32.mrb[0].mxu0
      %v1446 = vadd.f32 0.0, %v1445
      %v1447 = vpop.f32.mrb[0].mxu0
      %1448 = vmatprep.mubr.f32.mxu0 0.0
      %1449 = vmatmul.mubr.f32.gmra.mrb[0].mxu0 %v474
      %v1450 = vpop.f32.mrb[0].mxu0
      %v1451 = vadd.f32 0.0, %v1450
      %v1452 = vpop.f32.mrb[0].mxu0
      %1453 = vmatprep.mubr.f32.mxu0 0.0
      %1454 = vmatmul.mubr.f32.gmra.mrb[0].mxu0 %v475
      %v1455 = vpop.f32.mrb[0].mxu0
      %v1456 = vpop.f32.mrb[0].mxu0
      %1457 = vmatprep.mubr.f32.mxu0 0.0
      %1458 = vmatmul.mubr.f32.gmra.mrb[0].mxu0 %v476
      %v1459 = vpop.f32.mrb[0].mxu0
      %v1460 = vadd.f32 0.0, %v1459
      %v1461 = vpop.f32.mrb[0].mxu0
      %1462 = vmatprep.mubr.f32.mxu0 0.0
      %1463 = vmatmul.mubr.f32.gmra.mrb[0].mxu0 %v477
      %v1464 = vpop.f32.mrb[0].mxu0
      %v1465 = vadd.f32 0.0, %v1464
      %v1466 = vpop.f32.mrb[0].mxu0
      %1467 = vmatprep.mubr.f32.mxu0 0.0
      %1468 = vmatmul.mubr.f32.gmra.mrb[0].mxu0 %v478
      %v1469 = vpop.f32.mrb[0].mxu0
      %v1470 = vpop.f32.mrb[0].mxu0
      %1471 = vmatprep.mubr.f32.mxu0 0.0
      %1472 = vmatmul.mubr.f32.gmra.mrb[0].mxu0 %v479
      %v1473 = vpop.f32.mrb[0].mxu0
      %v1474 = vadd.f32 0.0, %v1473
      %v1475 = vpop.f32.mrb[0].mxu0
      %1476 = vmatprep.mubr.f32.mxu0 0.0
      %1477 = vmatmul.mubr.f32.gmra.mrb[0].mxu0 %v480
      %v1478 = vpop.f32.mrb[0].mxu0
      %v1479 = vadd.f32 0.0, %v1478
      %v1480 = vpop.f32.mrb[0].mxu0
      %1481 = vmatprep.mubr.f32.mxu0 0.0
      %1482 = vmatmul.mubr.f32.gmra.mrb[0].mxu0 %v481
      %v1483 = vpop.f32.mrb[0].mxu0
      %v1484 = vpop.f32.mrb[0].mxu0
      %1485 = vdwg.mxu0
      %v1486 = vadd.f32 %v1276, %v1376
      %v1487 = vadd.f32 %v1277, %v1381
      %v1488 = vadd.f32 %v1278, %v1390
      %v1489 = vadd.f32 %v1279, %v1395
      %v1490 = vadd.f32 %v1280, %v1404
      %v1491 = vadd.f32 %v1281, %v1409
      %v1492 = vadd.f32 %v1282, %v1418
      %v1493 = vadd.f32 %v1283, %v1423
      %v1494 = vadd.f32 %v1284, %v1432
      %v1495 = vadd.f32 %v1285, %v1437
      %v1496 = vadd.f32 %v1286, %v1446
      %v1497 = vadd.f32 %v1287, %v1451
      %v1498 = vadd.f32 %v1288, %v1460
      %v1499 = vadd.f32 %v1289, %v1465
      %v1500 = vadd.f32 %v1290, %v1474
      %v1501 = vadd.f32 %v1291, %v1479
      %s1502 = scalar_lea.vmem %s185, 512
      %v1503 = vld [vmem:[%s1502] sm:$0xff]
      %v1504 = vld [vmem:[%s1502 + $0x8] sm:$0xff]
      %v1505 = vld [vmem:[%s1502 + $0x10] sm:$0xff]
      %v1506 = vld [vmem:[%s1502 + $0x18] sm:$0xff]
      %v1507 = vld [vmem:[%s1502 + $0x20] sm:$0xff]
      %v1508 = vld [vmem:[%s1502 + $0x28] sm:$0xff]
      %v1509 = vld [vmem:[%s1502 + $0x30] sm:$0xff]
      %v1510 = vld [vmem:[%s1502 + $0x38] sm:$0xff]
      %v1511 = vld [vmem:[%s1502 + $0x40] sm:$0xff]
      %v1512 = vld [vmem:[%s1502 + $0x48] sm:$0xff]
      %v1513 = vld [vmem:[%s1502 + $0x50] sm:$0xff]
      %v1514 = vld [vmem:[%s1502 + $0x58] sm:$0xff]
      %v1515 = vld [vmem:[%s1502 + $0x60] sm:$0xff]
      %v1516 = vld [vmem:[%s1502 + $0x68] sm:$0xff]
      %v1517 = vld [vmem:[%s1502 + $0x70] sm:$0xff]
      %v1518 = vld [vmem:[%s1502 + $0x78] sm:$0xff]
      %1519 = vmatprep.subr.mxu0 0.0
      %1520 = vmatpush1.msra.mxu0 %v1503
      %1521 = vmatprep.subr.mxu0 0.0
      %1522 = vmatpush1.msra.mxu0 %v1504
      %1523 = vmatprep.subr.mxu0 0.0
      %1524 = vmatpush1.msra.mxu0 %v1505
      %1525 = vmatprep.subr.mxu0 0.0
      %1526 = vmatpush1.msra.mxu0 %v1506
      %1527 = vmatprep.subr.mxu0 0.0
      %1528 = vmatpush1.msra.mxu0 %v1507
      %1529 = vmatprep.subr.mxu0 0.0
      %1530 = vmatpush1.msra.mxu0 %v1508
      %1531 = vmatprep.subr.mxu0 0.0
      %1532 = vmatpush1.msra.mxu0 %v1509
      %1533 = vmatprep.subr.mxu0 0.0
      %1534 = vmatpush1.msra.mxu0 %v1510
      %1535 = vmatprep.subr.mxu0 0.0
      %1536 = vmatpush1.msra.mxu0 %v1511
      %1537 = vmatprep.subr.mxu0 0.0
      %1538 = vmatpush1.msra.mxu0 %v1512
      %1539 = vmatprep.subr.mxu0 0.0
      %1540 = vmatpush1.msra.mxu0 %v1513
      %1541 = vmatprep.subr.mxu0 0.0
      %1542 = vmatpush1.msra.mxu0 %v1514
      %1543 = vmatprep.subr.mxu0 0.0
      %1544 = vmatpush1.msra.mxu0 %v1515
      %1545 = vmatprep.subr.mxu0 0.0
      %1546 = vmatpush1.msra.mxu0 %v1516
      %1547 = vmatprep.subr.mxu0 0.0
      %1548 = vmatpush1.msra.mxu0 %v1517
      %1549 = vmatprep.subr.mxu0 0.0
      %1550 = vmatpush1.msra.mxu0 %v1518
      %1551 = vmatprep.subr.mxu0 0.0
      %1552 = vmatpush1.msra.mxu0 0.0
      %1553 = vmatprep.subr.mxu0 0.0
      %1554 = vmatpush1.msra.mxu0 0.0
      %1555 = vmatprep.subr.mxu0 0.0
      %1556 = vmatpush1.msra.mxu0 0.0
      %1557 = vmatprep.subr.mxu0 0.0
      %1558 = vmatpush1.msra.mxu0 0.0
      %1559 = vmatprep.subr.mxu0 0.0
      %1560 = vmatpush1.msra.mxu0 0.0
      %1561 = vmatprep.subr.mxu0 0.0
      %1562 = vmatpush1.msra.mxu0 0.0
      %1563 = vmatprep.subr.mxu0 0.0
      %1564 = vmatpush1.msra.mxu0 0.0
      %1565 = vmatprep.subr.mxu0 0.0
      %1566 = vmatpush1.msra.mxu0 0.0
      %1567 = vmatprep.subr.mxu0 0.0
      %1568 = vmatpush1.msra.mxu0 0.0
      %1569 = vmatprep.subr.mxu0 0.0
      %1570 = vmatpush1.msra.mxu0 0.0
      %1571 = vmatprep.subr.mxu0 0.0
      %1572 = vmatpush1.msra.mxu0 0.0
      %1573 = vmatprep.subr.mxu0 0.0
      %1574 = vmatpush1.msra.mxu0 0.0
      %1575 = vmatprep.subr.mxu0 0.0
      %1576 = vmatpush1.msra.mxu0 0.0
      %1577 = vmatprep.subr.mxu0 0.0
      %1578 = vmatpush1.msra.mxu0 0.0
      %1579 = vmatprep.subr.mxu0 0.0
      %1580 = vmatpush1.msra.mxu0 0.0
      %1581 = vmatprep.subr.mxu0 0.0
      %1582 = vmatpush1.msra.mxu0 0.0
      %1583 = vmatprep.mubr.f32.mxu0 0.0
      %1584 = vmatmul.mubr.f32.gmra.mrb[0].mxu0 %v458
      %v1585 = vpop.f32.mrb[0].mxu0
      %v1586 = vadd.f32 0.0, %v1585
      %v1587 = vpop.f32.mrb[0].mxu0
      %1588 = vmatprep.mubr.f32.mxu0 0.0
      %1589 = vmatmul.mubr.f32.gmra.mrb[0].mxu0 %v459
      %v1590 = vpop.f32.mrb[0].mxu0
      %v1591 = vadd.f32 0.0, %v1590
      %v1592 = vpop.f32.mrb[0].mxu0
      %1593 = vmatprep.mubr.f32.mxu0 0.0
      %1594 = vmatmul.mubr.f32.gmra.mrb[0].mxu0 %v460
      %v1595 = vpop.f32.mrb[0].mxu0
      %v1596 = vadd.f32 0.0, %v1595
      %v1597 = vpop.f32.mrb[0].mxu0
      %1598 = vmatprep.mubr.f32.mxu0 0.0
      %1599 = vmatmul.mubr.f32.gmra.mrb[0].mxu0 %v461
      %v1600 = vpop.f32.mrb[0].mxu0
      %v1601 = vadd.f32 0.0, %v1600
      %v1602 = vpop.f32.mrb[0].mxu0
      %1603 = vmatprep.mubr.f32.mxu0 0.0
      %1604 = vmatmul.mubr.f32.gmra.mrb[0].mxu0 %v462
      %v1605 = vpop.f32.mrb[0].mxu0
      %v1606 = vadd.f32 0.0, %v1605
      %v1607 = vpop.f32.mrb[0].mxu0
      %1608 = vmatprep.mubr.f32.mxu0 0.0
      %1609 = vmatmul.mubr.f32.gmra.mrb[0].mxu0 %v463
      %v1610 = vpop.f32.mrb[0].mxu0
      %v1611 = vadd.f32 0.0, %v1610
      %v1612 = vpop.f32.mrb[0].mxu0
      %1613 = vmatprep.mubr.f32.mxu0 0.0
      %1614 = vmatmul.mubr.f32.gmra.mrb[0].mxu0 %v464
      %v1615 = vpop.f32.mrb[0].mxu0
      %v1616 = vadd.f32 0.0, %v1615
      %v1617 = vpop.f32.mrb[0].mxu0
      %1618 = vmatprep.mubr.f32.mxu0 0.0
      %1619 = vmatmul.mubr.f32.gmra.mrb[0].mxu0 %v465
      %v1620 = vpop.f32.mrb[0].mxu0
      %v1621 = vadd.f32 0.0, %v1620
      %v1622 = vpop.f32.mrb[0].mxu0
      %1623 = vmatprep.mubr.f32.mxu0 0.0
      %1624 = vmatmul.mubr.f32.gmra.mrb[0].mxu0 %v466
      %v1625 = vpop.f32.mrb[0].mxu0
      %v1626 = vadd.f32 0.0, %v1625
      %v1627 = vpop.f32.mrb[0].mxu0
      %1628 = vmatprep.mubr.f32.mxu0 0.0
      %1629 = vmatmul.mubr.f32.gmra.mrb[0].mxu0 %v467
      %v1630 = vpop.f32.mrb[0].mxu0
      %v1631 = vadd.f32 0.0, %v1630
      %v1632 = vpop.f32.mrb[0].mxu0
      %1633 = vmatprep.mubr.f32.mxu0 0.0
      %1634 = vmatmul.mubr.f32.gmra.mrb[0].mxu0 %v468
      %v1635 = vpop.f32.mrb[0].mxu0
      %v1636 = vadd.f32 0.0, %v1635
      %v1637 = vpop.f32.mrb[0].mxu0
      %1638 = vmatprep.mubr.f32.mxu0 0.0
      %1639 = vmatmul.mubr.f32.gmra.mrb[0].mxu0 %v469
      %v1640 = vpop.f32.mrb[0].mxu0
      %v1641 = vadd.f32 0.0, %v1640
      %v1642 = vpop.f32.mrb[0].mxu0
      %1643 = vmatprep.mubr.f32.mxu0 0.0
      %1644 = vmatmul.mubr.f32.gmra.mrb[0].mxu0 %v470
      %v1645 = vpop.f32.mrb[0].mxu0
      %v1646 = vadd.f32 0.0, %v1645
      %v1647 = vpop.f32.mrb[0].mxu0
      %1648 = vmatprep.mubr.f32.mxu0 0.0
      %1649 = vmatmul.mubr.f32.gmra.mrb[0].mxu0 %v471
      %v1650 = vpop.f32.mrb[0].mxu0
      %v1651 = vadd.f32 0.0, %v1650
      %v1652 = vpop.f32.mrb[0].mxu0
      %1653 = vmatprep.mubr.f32.mxu0 0.0
      %1654 = vmatmul.mubr.f32.gmra.mrb[0].mxu0 %v472
      %v1655 = vpop.f32.mrb[0].mxu0
      %v1656 = vadd.f32 0.0, %v1655
      %v1657 = vpop.f32.mrb[0].mxu0
      %1658 = vmatprep.mubr.f32.mxu0 0.0
      %1659 = vmatmul.mubr.f32.gmra.mrb[0].mxu0 %v473
      %v1660 = vpop.f32.mrb[0].mxu0
      %v1661 = vadd.f32 0.0, %v1660
      %v1662 = vpop.f32.mrb[0].mxu0
      %1663 = vmatprep.mubr.f32.mxu0 0.0
      %1664 = vmatmul.mubr.f32.gmra.mrb[0].mxu0 %v474
      %v1665 = vpop.f32.mrb[0].mxu0
      %v1666 = vadd.f32 0.0, %v1665
      %v1667 = vpop.f32.mrb[0].mxu0
      %1668 = vmatprep.mubr.f32.mxu0 0.0
      %1669 = vmatmul.mubr.f32.gmra.mrb[0].mxu0 %v475
      %v1670 = vpop.f32.mrb[0].mxu0
      %v1671 = vadd.f32 0.0, %v1670
      %v1672 = vpop.f32.mrb[0].mxu0
      %1673 = vmatprep.mubr.f32.mxu0 0.0
      %1674 = vmatmul.mubr.f32.gmra.mrb[0].mxu0 %v476
      %v1675 = vpop.f32.mrb[0].mxu0
      %v1676 = vadd.f32 0.0, %v1675
      %v1677 = vpop.f32.mrb[0].mxu0
      %1678 = vmatprep.mubr.f32.mxu0 0.0
      %1679 = vmatmul.mubr.f32.gmra.mrb[0].mxu0 %v477
      %v1680 = vpop.f32.mrb[0].mxu0
      %v1681 = vadd.f32 0.0, %v1680
      %v1682 = vpop.f32.mrb[0].mxu0
      %1683 = vmatprep.mubr.f32.mxu0 0.0
      %1684 = vmatmul.mubr.f32.gmra.mrb[0].mxu0 %v478
      %v1685 = vpop.f32.mrb[0].mxu0
      %v1686 = vadd.f32 0.0, %v1685
      %v1687 = vpop.f32.mrb[0].mxu0
      %1688 = vmatprep.mubr.f32.mxu0 0.0
      %1689 = vmatmul.mubr.f32.gmra.mrb[0].mxu0 %v479
      %v1690 = vpop.f32.mrb[0].mxu0
      %v1691 = vadd.f32 0.0, %v1690
      %v1692 = vpop.f32.mrb[0].mxu0
      %1693 = vmatprep.mubr.f32.mxu0 0.0
      %1694 = vmatmul.mubr.f32.gmra.mrb[0].mxu0 %v480
      %v1695 = vpop.f32.mrb[0].mxu0
      %v1696 = vadd.f32 0.0, %v1695
      %v1697 = vpop.f32.mrb[0].mxu0
      %1698 = vmatprep.mubr.f32.mxu0 0.0
      %1699 = vmatmul.mubr.f32.gmra.mrb[0].mxu0 %v481
      %v1700 = vpop.f32.mrb[0].mxu0
      %v1701 = vadd.f32 0.0, %v1700
      %v1702 = vpop.f32.mrb[0].mxu0
      %1703 = vdwg.mxu0
      %v1728 = vrot.slane %v1586, 1
      %v1729 = vrot.slane %v1591, 1
      %v1730 = vsel %vm920, %v1728, %v1729
      %v1731 = vrot.slane %v1596, 1
      %v1732 = vsel %vm920, %v1729, %v1731
      %v1733 = vrot.slane %v1601, 1
      %v1734 = vrot.slane %v1606, 1
      %v1735 = vsel %vm920, %v1733, %v1734
      %v1736 = vrot.slane %v1611, 1
      %v1737 = vsel %vm920, %v1734, %v1736
      %v1738 = vrot.slane %v1616, 1
      %v1739 = vrot.slane %v1621, 1
      %v1740 = vsel %vm920, %v1738, %v1739
      %v1741 = vrot.slane %v1626, 1
      %v1742 = vsel %vm920, %v1739, %v1741
      %v1743 = vrot.slane %v1631, 1
      %v1744 = vrot.slane %v1636, 1
      %v1745 = vsel %vm920, %v1743, %v1744
      %v1746 = vrot.slane %v1641, 1
      %v1747 = vsel %vm920, %v1744, %v1746
      %v1748 = vrot.slane %v1646, 1
      %v1749 = vrot.slane %v1651, 1
      %v1750 = vsel %vm920, %v1748, %v1749
      %v1751 = vrot.slane %v1656, 1
      %v1752 = vsel %vm920, %v1749, %v1751
      %v1753 = vrot.slane %v1661, 1
      %v1754 = vrot.slane %v1666, 1
      %v1755 = vsel %vm920, %v1753, %v1754
      %v1756 = vrot.slane %v1671, 1
      %v1757 = vsel %vm920, %v1754, %v1756
      %v1758 = vrot.slane %v1676, 1
      %v1759 = vrot.slane %v1681, 1
      %v1760 = vsel %vm920, %v1758, %v1759
      %v1761 = vrot.slane %v1686, 1
      %v1762 = vsel %vm920, %v1759, %v1761
      %v1763 = vrot.slane %v1691, 1
      %v1764 = vrot.slane %v1696, 1
      %v1765 = vsel %vm920, %v1763, %v1764
      %v1766 = vrot.slane %v1701, 1
      %v1767 = vsel %vm920, %v1764, %v1766
      %v1784 = vadd.f32 %v1486, %v1730
      %v1785 = vadd.f32 %v1487, %v1732
      %v1786 = vadd.f32 %v1488, %v1735
      %v1787 = vadd.f32 %v1489, %v1737
      %v1788 = vadd.f32 %v1490, %v1740
      %v1789 = vadd.f32 %v1491, %v1742
      %v1790 = vadd.f32 %v1492, %v1745
      %v1791 = vadd.f32 %v1493, %v1747
      %v1792 = vadd.f32 %v1494, %v1750
      %v1793 = vadd.f32 %v1495, %v1752
      %v1794 = vadd.f32 %v1496, %v1755
      %v1795 = vadd.f32 %v1497, %v1757
      %v1796 = vadd.f32 %v1498, %v1760
      %v1797 = vadd.f32 %v1499, %v1762
      %v1798 = vadd.f32 %v1500, %v1765
      %v1799 = vadd.f32 %v1501, %v1767
      %s1800 = scalar_lea.vmem %s185, 640
      %v1801 = vld [vmem:[%s1800] sm:$0xff]
      %v1802 = vld [vmem:[%s1800 + $0x8] sm:$0xff]
      %v1803 = vld [vmem:[%s1800 + $0x10] sm:$0xff]
      %v1804 = vld [vmem:[%s1800 + $0x18] sm:$0xff]
      %v1805 = vld [vmem:[%s1800 + $0x20] sm:$0xff]
      %v1806 = vld [vmem:[%s1800 + $0x28] sm:$0xff]
      %v1807 = vld [vmem:[%s1800 + $0x30] sm:$0xff]
      %v1808 = vld [vmem:[%s1800 + $0x38] sm:$0xff]
      %v1809 = vld [vmem:[%s1800 + $0x40] sm:$0xff]
      %v1810 = vld [vmem:[%s1800 + $0x48] sm:$0xff]
      %v1811 = vld [vmem:[%s1800 + $0x50] sm:$0xff]
      %v1812 = vld [vmem:[%s1800 + $0x58] sm:$0xff]
      %v1813 = vld [vmem:[%s1800 + $0x60] sm:$0xff]
      %v1814 = vld [vmem:[%s1800 + $0x68] sm:$0xff]
      %v1815 = vld [vmem:[%s1800 + $0x70] sm:$0xff]
      %v1816 = vld [vmem:[%s1800 + $0x78] sm:$0xff]
      %1817 = vmatprep.subr.mxu0 0.0
      %1818 = vmatpush1.msra.mxu0 %v1801
      %1819 = vmatprep.subr.mxu0 0.0
      %1820 = vmatpush1.msra.mxu0 %v1802
      %1821 = vmatprep.subr.mxu0 0.0
      %1822 = vmatpush1.msra.mxu0 %v1803
      %1823 = vmatprep.subr.mxu0 0.0
      %1824 = vmatpush1.msra.mxu0 %v1804
      %1825 = vmatprep.subr.mxu0 0.0
      %1826 = vmatpush1.msra.mxu0 %v1805
      %1827 = vmatprep.subr.mxu0 0.0
      %1828 = vmatpush1.msra.mxu0 %v1806
      %1829 = vmatprep.subr.mxu0 0.0
      %1830 = vmatpush1.msra.mxu0 %v1807
      %1831 = vmatprep.subr.mxu0 0.0
      %1832 = vmatpush1.msra.mxu0 %v1808
      %1833 = vmatprep.subr.mxu0 0.0
      %1834 = vmatpush1.msra.mxu0 %v1809
      %1835 = vmatprep.subr.mxu0 0.0
      %1836 = vmatpush1.msra.mxu0 %v1810
      %1837 = vmatprep.subr.mxu0 0.0
      %1838 = vmatpush1.msra.mxu0 %v1811
      %1839 = vmatprep.subr.mxu0 0.0
      %1840 = vmatpush1.msra.mxu0 %v1812
      %1841 = vmatprep.subr.mxu0 0.0
      %1842 = vmatpush1.msra.mxu0 %v1813
      %1843 = vmatprep.subr.mxu0 0.0
      %1844 = vmatpush1.msra.mxu0 %v1814
      %1845 = vmatprep.subr.mxu0 0.0
      %1846 = vmatpush1.msra.mxu0 %v1815
      %1847 = vmatprep.subr.mxu0 0.0
      %1848 = vmatpush1.msra.mxu0 %v1816
      %1849 = vmatprep.subr.mxu0 0.0
      %1850 = vmatpush1.msra.mxu0 0.0
      %1851 = vmatprep.subr.mxu0 0.0
      %1852 = vmatpush1.msra.mxu0 0.0
      %1853 = vmatprep.subr.mxu0 0.0
      %1854 = vmatpush1.msra.mxu0 0.0
      %1855 = vmatprep.subr.mxu0 0.0
      %1856 = vmatpush1.msra.mxu0 0.0
      %1857 = vmatprep.subr.mxu0 0.0
      %1858 = vmatpush1.msra.mxu0 0.0
      %1859 = vmatprep.subr.mxu0 0.0
      %1860 = vmatpush1.msra.mxu0 0.0
      %1861 = vmatprep.subr.mxu0 0.0
      %1862 = vmatpush1.msra.mxu0 0.0
      %1863 = vmatprep.subr.mxu0 0.0
      %1864 = vmatpush1.msra.mxu0 0.0
      %1865 = vmatprep.subr.mxu0 0.0
      %1866 = vmatpush1.msra.mxu0 0.0
      %1867 = vmatprep.subr.mxu0 0.0
      %1868 = vmatpush1.msra.mxu0 0.0
      %1869 = vmatprep.subr.mxu0 0.0
      %1870 = vmatpush1.msra.mxu0 0.0
      %1871 = vmatprep.subr.mxu0 0.0
      %1872 = vmatpush1.msra.mxu0 0.0
      %1873 = vmatprep.subr.mxu0 0.0
      %1874 = vmatpush1.msra.mxu0 0.0
      %1875 = vmatprep.subr.mxu0 0.0
      %1876 = vmatpush1.msra.mxu0 0.0
      %1877 = vmatprep.subr.mxu0 0.0
      %1878 = vmatpush1.msra.mxu0 0.0
      %1879 = vmatprep.subr.mxu0 0.0
      %1880 = vmatpush1.msra.mxu0 0.0
      %1881 = vmatprep.mubr.f32.mxu0 0.0
      %1882 = vmatmul.mubr.f32.gmra.mrb[0].mxu0 %v458
      %v1883 = vpop.f32.mrb[0].mxu0
      %v1884 = vadd.f32 0.0, %v1883
      %v1885 = vpop.f32.mrb[0].mxu0
      %1886 = vmatprep.mubr.f32.mxu0 0.0
      %1887 = vmatmul.mubr.f32.gmra.mrb[0].mxu0 %v459
      %v1888 = vpop.f32.mrb[0].mxu0
      %v1889 = vadd.f32 0.0, %v1888
      %v1890 = vpop.f32.mrb[0].mxu0
      %1891 = vmatprep.mubr.f32.mxu0 0.0
      %1892 = vmatmul.mubr.f32.gmra.mrb[0].mxu0 %v460
      %v1893 = vpop.f32.mrb[0].mxu0
      %v1894 = vadd.f32 0.0, %v1893
      %v1895 = vpop.f32.mrb[0].mxu0
      %1896 = vmatprep.mubr.f32.mxu0 0.0
      %1897 = vmatmul.mubr.f32.gmra.mrb[0].mxu0 %v461
      %v1898 = vpop.f32.mrb[0].mxu0
      %v1899 = vadd.f32 0.0, %v1898
      %v1900 = vpop.f32.mrb[0].mxu0
      %1901 = vmatprep.mubr.f32.mxu0 0.0
      %1902 = vmatmul.mubr.f32.gmra.mrb[0].mxu0 %v462
      %v1903 = vpop.f32.mrb[0].mxu0
      %v1904 = vadd.f32 0.0, %v1903
      %v1905 = vpop.f32.mrb[0].mxu0
      %1906 = vmatprep.mubr.f32.mxu0 0.0
      %1907 = vmatmul.mubr.f32.gmra.mrb[0].mxu0 %v463
      %v1908 = vpop.f32.mrb[0].mxu0
      %v1909 = vadd.f32 0.0, %v1908
      %v1910 = vpop.f32.mrb[0].mxu0
      %1911 = vmatprep.mubr.f32.mxu0 0.0
      %1912 = vmatmul.mubr.f32.gmra.mrb[0].mxu0 %v464
      %v1913 = vpop.f32.mrb[0].mxu0
      %v1914 = vadd.f32 0.0, %v1913
      %v1915 = vpop.f32.mrb[0].mxu0
      %1916 = vmatprep.mubr.f32.mxu0 0.0
      %1917 = vmatmul.mubr.f32.gmra.mrb[0].mxu0 %v465
      %v1918 = vpop.f32.mrb[0].mxu0
      %v1919 = vadd.f32 0.0, %v1918
      %v1920 = vpop.f32.mrb[0].mxu0
      %1921 = vmatprep.mubr.f32.mxu0 0.0
      %1922 = vmatmul.mubr.f32.gmra.mrb[0].mxu0 %v466
      %v1923 = vpop.f32.mrb[0].mxu0
      %v1924 = vadd.f32 0.0, %v1923
      %v1925 = vpop.f32.mrb[0].mxu0
      %1926 = vmatprep.mubr.f32.mxu0 0.0
      %1927 = vmatmul.mubr.f32.gmra.mrb[0].mxu0 %v467
      %v1928 = vpop.f32.mrb[0].mxu0
      %v1929 = vadd.f32 0.0, %v1928
      %v1930 = vpop.f32.mrb[0].mxu0
      %1931 = vmatprep.mubr.f32.mxu0 0.0
      %1932 = vmatmul.mubr.f32.gmra.mrb[0].mxu0 %v468
      %v1933 = vpop.f32.mrb[0].mxu0
      %v1934 = vadd.f32 0.0, %v1933
      %v1935 = vpop.f32.mrb[0].mxu0
      %1936 = vmatprep.mubr.f32.mxu0 0.0
      %1937 = vmatmul.mubr.f32.gmra.mrb[0].mxu0 %v469
      %v1938 = vpop.f32.mrb[0].mxu0
      %v1939 = vadd.f32 0.0, %v1938
      %v1940 = vpop.f32.mrb[0].mxu0
      %1941 = vmatprep.mubr.f32.mxu0 0.0
      %1942 = vmatmul.mubr.f32.gmra.mrb[0].mxu0 %v470
      %v1943 = vpop.f32.mrb[0].mxu0
      %v1944 = vadd.f32 0.0, %v1943
      %v1945 = vpop.f32.mrb[0].mxu0
      %1946 = vmatprep.mubr.f32.mxu0 0.0
      %1947 = vmatmul.mubr.f32.gmra.mrb[0].mxu0 %v471
      %v1948 = vpop.f32.mrb[0].mxu0
      %v1949 = vadd.f32 0.0, %v1948
      %v1950 = vpop.f32.mrb[0].mxu0
      %1951 = vmatprep.mubr.f32.mxu0 0.0
      %1952 = vmatmul.mubr.f32.gmra.mrb[0].mxu0 %v472
      %v1953 = vpop.f32.mrb[0].mxu0
      %v1954 = vadd.f32 0.0, %v1953
      %v1955 = vpop.f32.mrb[0].mxu0
      %1956 = vmatprep.mubr.f32.mxu0 0.0
      %1957 = vmatmul.mubr.f32.gmra.mrb[0].mxu0 %v473
      %v1958 = vpop.f32.mrb[0].mxu0
      %v1959 = vadd.f32 0.0, %v1958
      %v1960 = vpop.f32.mrb[0].mxu0
      %1961 = vmatprep.mubr.f32.mxu0 0.0
      %1962 = vmatmul.mubr.f32.gmra.mrb[0].mxu0 %v474
      %v1963 = vpop.f32.mrb[0].mxu0
      %v1964 = vadd.f32 0.0, %v1963
      %v1965 = vpop.f32.mrb[0].mxu0
      %1966 = vmatprep.mubr.f32.mxu0 0.0
      %1967 = vmatmul.mubr.f32.gmra.mrb[0].mxu0 %v475
      %v1968 = vpop.f32.mrb[0].mxu0
      %v1969 = vadd.f32 0.0, %v1968
      %v1970 = vpop.f32.mrb[0].mxu0
      %1971 = vmatprep.mubr.f32.mxu0 0.0
      %1972 = vmatmul.mubr.f32.gmra.mrb[0].mxu0 %v476
      %v1973 = vpop.f32.mrb[0].mxu0
      %v1974 = vadd.f32 0.0, %v1973
      %v1975 = vpop.f32.mrb[0].mxu0
      %1976 = vmatprep.mubr.f32.mxu0 0.0
      %1977 = vmatmul.mubr.f32.gmra.mrb[0].mxu0 %v477
      %v1978 = vpop.f32.mrb[0].mxu0
      %v1979 = vadd.f32 0.0, %v1978
      %v1980 = vpop.f32.mrb[0].mxu0
      %1981 = vmatprep.mubr.f32.mxu0 0.0
      %1982 = vmatmul.mubr.f32.gmra.mrb[0].mxu0 %v478
      %v1983 = vpop.f32.mrb[0].mxu0
      %v1984 = vadd.f32 0.0, %v1983
      %v1985 = vpop.f32.mrb[0].mxu0
      %1986 = vmatprep.mubr.f32.mxu0 0.0
      %1987 = vmatmul.mubr.f32.gmra.mrb[0].mxu0 %v479
      %v1988 = vpop.f32.mrb[0].mxu0
      %v1989 = vadd.f32 0.0, %v1988
      %v1990 = vpop.f32.mrb[0].mxu0
      %1991 = vmatprep.mubr.f32.mxu0 0.0
      %1992 = vmatmul.mubr.f32.gmra.mrb[0].mxu0 %v480
      %v1993 = vpop.f32.mrb[0].mxu0
      %v1994 = vadd.f32 0.0, %v1993
      %v1995 = vpop.f32.mrb[0].mxu0
      %1996 = vmatprep.mubr.f32.mxu0 0.0
      %1997 = vmatmul.mubr.f32.gmra.mrb[0].mxu0 %v481
      %v1998 = vpop.f32.mrb[0].mxu0
      %v1999 = vadd.f32 0.0, %v1998
      %v2000 = vpop.f32.mrb[0].mxu0
      %2001 = vdwg.mxu0
      %v2026 = vrot.slane %v1884, 2
      %v2027 = vrot.slane %v1889, 2
      %v2028 = vsel %vm1219, %v2026, %v2027
      %v2029 = vrot.slane %v1894, 2
      %v2030 = vsel %vm1219, %v2027, %v2029
      %v2031 = vrot.slane %v1899, 2
      %v2032 = vrot.slane %v1904, 2
      %v2033 = vsel %vm1219, %v2031, %v2032
      %v2034 = vrot.slane %v1909, 2
      %v2035 = vsel %vm1219, %v2032, %v2034
      %v2036 = vrot.slane %v1914, 2
      %v2037 = vrot.slane %v1919, 2
      %v2038 = vsel %vm1219, %v2036, %v2037
      %v2039 = vrot.slane %v1924, 2
      %v2040 = vsel %vm1219, %v2037, %v2039
      %v2041 = vrot.slane %v1929, 2
      %v2042 = vrot.slane %v1934, 2
      %v2043 = vsel %vm1219, %v2041, %v2042
      %v2044 = vrot.slane %v1939, 2
      %v2045 = vsel %vm1219, %v2042, %v2044
      %v2046 = vrot.slane %v1944, 2
      %v2047 = vrot.slane %v1949, 2
      %v2048 = vsel %vm1219, %v2046, %v2047
      %v2049 = vrot.slane %v1954, 2
      %v2050 = vsel %vm1219, %v2047, %v2049
      %v2051 = vrot.slane %v1959, 2
      %v2052 = vrot.slane %v1964, 2
      %v2053 = vsel %vm1219, %v2051, %v2052
      %v2054 = vrot.slane %v1969, 2
      %v2055 = vsel %vm1219, %v2052, %v2054
      %v2056 = vrot.slane %v1974, 2
      %v2057 = vrot.slane %v1979, 2
      %v2058 = vsel %vm1219, %v2056, %v2057
      %v2059 = vrot.slane %v1984, 2
      %v2060 = vsel %vm1219, %v2057, %v2059
      %v2061 = vrot.slane %v1989, 2
      %v2062 = vrot.slane %v1994, 2
      %v2063 = vsel %vm1219, %v2061, %v2062
      %v2064 = vrot.slane %v1999, 2
      %v2065 = vsel %vm1219, %v2062, %v2064
      %v2082 = vadd.f32 %v1784, %v2028
      %v2083 = vadd.f32 %v1785, %v2030
      %v2084 = vadd.f32 %v1786, %v2033
      %v2085 = vadd.f32 %v1787, %v2035
      %v2086 = vadd.f32 %v1788, %v2038
      %v2087 = vadd.f32 %v1789, %v2040
      %v2088 = vadd.f32 %v1790, %v2043
      %v2089 = vadd.f32 %v1791, %v2045
      %v2090 = vadd.f32 %v1792, %v2048
      %v2091 = vadd.f32 %v1793, %v2050
      %v2092 = vadd.f32 %v1794, %v2053
      %v2093 = vadd.f32 %v1795, %v2055
      %v2094 = vadd.f32 %v1796, %v2058
      %v2095 = vadd.f32 %v1797, %v2060
      %v2096 = vadd.f32 %v1798, %v2063
      %v2097 = vadd.f32 %v1799, %v2065
      %s2098 = scalar_lea.vmem %s185, 768
      %v2099 = vld [vmem:[%s2098] sm:$0xff]
      %v2100 = vld [vmem:[%s2098 + $0x8] sm:$0xff]
      %v2101 = vld [vmem:[%s2098 + $0x10] sm:$0xff]
      %v2102 = vld [vmem:[%s2098 + $0x18] sm:$0xff]
      %v2103 = vld [vmem:[%s2098 + $0x20] sm:$0xff]
      %v2104 = vld [vmem:[%s2098 + $0x28] sm:$0xff]
      %v2105 = vld [vmem:[%s2098 + $0x30] sm:$0xff]
      %v2106 = vld [vmem:[%s2098 + $0x38] sm:$0xff]
      %v2107 = vld [vmem:[%s2098 + $0x40] sm:$0xff]
      %v2108 = vld [vmem:[%s2098 + $0x48] sm:$0xff]
      %v2109 = vld [vmem:[%s2098 + $0x50] sm:$0xff]
      %v2110 = vld [vmem:[%s2098 + $0x58] sm:$0xff]
      %v2111 = vld [vmem:[%s2098 + $0x60] sm:$0xff]
      %v2112 = vld [vmem:[%s2098 + $0x68] sm:$0xff]
      %v2113 = vld [vmem:[%s2098 + $0x70] sm:$0xff]
      %v2114 = vld [vmem:[%s2098 + $0x78] sm:$0xff]
      %2115 = vmatprep.subr.mxu0 0.0
      %2116 = vmatpush1.msra.mxu0 %v2099
      %2117 = vmatprep.subr.mxu0 0.0
      %2118 = vmatpush1.msra.mxu0 %v2100
      %2119 = vmatprep.subr.mxu0 0.0
      %2120 = vmatpush1.msra.mxu0 %v2101
      %2121 = vmatprep.subr.mxu0 0.0
      %2122 = vmatpush1.msra.mxu0 %v2102
      %2123 = vmatprep.subr.mxu0 0.0
      %2124 = vmatpush1.msra.mxu0 %v2103
      %2125 = vmatprep.subr.mxu0 0.0
      %2126 = vmatpush1.msra.mxu0 %v2104
      %2127 = vmatprep.subr.mxu0 0.0
      %2128 = vmatpush1.msra.mxu0 %v2105
      %2129 = vmatprep.subr.mxu0 0.0
      %2130 = vmatpush1.msra.mxu0 %v2106
      %2131 = vmatprep.subr.mxu0 0.0
      %2132 = vmatpush1.msra.mxu0 %v2107
      %2133 = vmatprep.subr.mxu0 0.0
      %2134 = vmatpush1.msra.mxu0 %v2108
      %2135 = vmatprep.subr.mxu0 0.0
      %2136 = vmatpush1.msra.mxu0 %v2109
      %2137 = vmatprep.subr.mxu0 0.0
      %2138 = vmatpush1.msra.mxu0 %v2110
      %2139 = vmatprep.subr.mxu0 0.0
      %2140 = vmatpush1.msra.mxu0 %v2111
      %2141 = vmatprep.subr.mxu0 0.0
      %2142 = vmatpush1.msra.mxu0 %v2112
      %2143 = vmatprep.subr.mxu0 0.0
      %2144 = vmatpush1.msra.mxu0 %v2113
      %2145 = vmatprep.subr.mxu0 0.0
      %2146 = vmatpush1.msra.mxu0 %v2114
      %2147 = vmatprep.subr.mxu0 0.0
      %2148 = vmatpush1.msra.mxu0 0.0
      %2149 = vmatprep.subr.mxu0 0.0
      %2150 = vmatpush1.msra.mxu0 0.0
      %2151 = vmatprep.subr.mxu0 0.0
      %2152 = vmatpush1.msra.mxu0 0.0
      %2153 = vmatprep.subr.mxu0 0.0
      %2154 = vmatpush1.msra.mxu0 0.0
      %2155 = vmatprep.subr.mxu0 0.0
      %2156 = vmatpush1.msra.mxu0 0.0
      %2157 = vmatprep.subr.mxu0 0.0
      %2158 = vmatpush1.msra.mxu0 0.0
      %2159 = vmatprep.subr.mxu0 0.0
      %2160 = vmatpush1.msra.mxu0 0.0
      %2161 = vmatprep.subr.mxu0 0.0
      %2162 = vmatpush1.msra.mxu0 0.0
      %2163 = vmatprep.subr.mxu0 0.0
      %2164 = vmatpush1.msra.mxu0 0.0
      %2165 = vmatprep.subr.mxu0 0.0
      %2166 = vmatpush1.msra.mxu0 0.0
      %2167 = vmatprep.subr.mxu0 0.0
      %2168 = vmatpush1.msra.mxu0 0.0
      %2169 = vmatprep.subr.mxu0 0.0
      %2170 = vmatpush1.msra.mxu0 0.0
      %2171 = vmatprep.subr.mxu0 0.0
      %2172 = vmatpush1.msra.mxu0 0.0
      %2173 = vmatprep.subr.mxu0 0.0
      %2174 = vmatpush1.msra.mxu0 0.0
      %2175 = vmatprep.subr.mxu0 0.0
      %2176 = vmatpush1.msra.mxu0 0.0
      %2177 = vmatprep.subr.mxu0 0.0
      %2178 = vmatpush1.msra.mxu0 0.0
      %2179 = vmatprep.mubr.f32.mxu0 0.0
      %2180 = vmatmul.mubr.f32.gmra.mrb[0].mxu0 %v461
      %v2181 = vpop.f32.mrb[0].mxu0
      %v2182 = vadd.f32 0.0, %v2181
      %v2183 = vpop.f32.mrb[0].mxu0
      %2184 = vmatprep.mubr.f32.mxu0 0.0
      %2185 = vmatmul.mubr.f32.gmra.mrb[0].mxu0 %v462
      %v2186 = vpop.f32.mrb[0].mxu0
      %v2187 = vadd.f32 0.0, %v2186
      %v2188 = vpop.f32.mrb[0].mxu0
      %2189 = vmatprep.mubr.f32.mxu0 0.0
      %2190 = vmatmul.mubr.f32.gmra.mrb[0].mxu0 %v463
      %v2191 = vpop.f32.mrb[0].mxu0
      %v2192 = vpop.f32.mrb[0].mxu0
      %2193 = vmatprep.mubr.f32.mxu0 0.0
      %2194 = vmatmul.mubr.f32.gmra.mrb[0].mxu0 %v464
      %v2195 = vpop.f32.mrb[0].mxu0
      %v2196 = vadd.f32 0.0, %v2195
      %v2197 = vpop.f32.mrb[0].mxu0
      %2198 = vmatprep.mubr.f32.mxu0 0.0
      %2199 = vmatmul.mubr.f32.gmra.mrb[0].mxu0 %v465
      %v2200 = vpop.f32.mrb[0].mxu0
      %v2201 = vadd.f32 0.0, %v2200
      %v2202 = vpop.f32.mrb[0].mxu0
      %2203 = vmatprep.mubr.f32.mxu0 0.0
      %2204 = vmatmul.mubr.f32.gmra.mrb[0].mxu0 %v466
      %v2205 = vpop.f32.mrb[0].mxu0
      %v2206 = vpop.f32.mrb[0].mxu0
      %2207 = vmatprep.mubr.f32.mxu0 0.0
      %2208 = vmatmul.mubr.f32.gmra.mrb[0].mxu0 %v467
      %v2209 = vpop.f32.mrb[0].mxu0
      %v2210 = vadd.f32 0.0, %v2209
      %v2211 = vpop.f32.mrb[0].mxu0
      %2212 = vmatprep.mubr.f32.mxu0 0.0
      %2213 = vmatmul.mubr.f32.gmra.mrb[0].mxu0 %v468
      %v2214 = vpop.f32.mrb[0].mxu0
      %v2215 = vadd.f32 0.0, %v2214
      %v2216 = vpop.f32.mrb[0].mxu0
      %2217 = vmatprep.mubr.f32.mxu0 0.0
      %2218 = vmatmul.mubr.f32.gmra.mrb[0].mxu0 %v469
      %v2219 = vpop.f32.mrb[0].mxu0
      %v2220 = vpop.f32.mrb[0].mxu0
      %2221 = vmatprep.mubr.f32.mxu0 0.0
      %2222 = vmatmul.mubr.f32.gmra.mrb[0].mxu0 %v470
      %v2223 = vpop.f32.mrb[0].mxu0
      %v2224 = vadd.f32 0.0, %v2223
      %v2225 = vpop.f32.mrb[0].mxu0
      %2226 = vmatprep.mubr.f32.mxu0 0.0
      %2227 = vmatmul.mubr.f32.gmra.mrb[0].mxu0 %v471
      %v2228 = vpop.f32.mrb[0].mxu0
      %v2229 = vadd.f32 0.0, %v2228
      %v2230 = vpop.f32.mrb[0].mxu0
      %2231 = vmatprep.mubr.f32.mxu0 0.0
      %2232 = vmatmul.mubr.f32.gmra.mrb[0].mxu0 %v472
      %v2233 = vpop.f32.mrb[0].mxu0
      %v2234 = vpop.f32.mrb[0].mxu0
      %2235 = vmatprep.mubr.f32.mxu0 0.0
      %2236 = vmatmul.mubr.f32.gmra.mrb[0].mxu0 %v473
      %v2237 = vpop.f32.mrb[0].mxu0
      %v2238 = vadd.f32 0.0, %v2237
      %v2239 = vpop.f32.mrb[0].mxu0
      %2240 = vmatprep.mubr.f32.mxu0 0.0
      %2241 = vmatmul.mubr.f32.gmra.mrb[0].mxu0 %v474
      %v2242 = vpop.f32.mrb[0].mxu0
      %v2243 = vadd.f32 0.0, %v2242
      %v2244 = vpop.f32.mrb[0].mxu0
      %2245 = vmatprep.mubr.f32.mxu0 0.0
      %2246 = vmatmul.mubr.f32.gmra.mrb[0].mxu0 %v475
      %v2247 = vpop.f32.mrb[0].mxu0
      %v2248 = vpop.f32.mrb[0].mxu0
      %2249 = vmatprep.mubr.f32.mxu0 0.0
      %2250 = vmatmul.mubr.f32.gmra.mrb[0].mxu0 %v476
      %v2251 = vpop.f32.mrb[0].mxu0
      %v2252 = vadd.f32 0.0, %v2251
      %v2253 = vpop.f32.mrb[0].mxu0
      %2254 = vmatprep.mubr.f32.mxu0 0.0
      %2255 = vmatmul.mubr.f32.gmra.mrb[0].mxu0 %v477
      %v2256 = vpop.f32.mrb[0].mxu0
      %v2257 = vadd.f32 0.0, %v2256
      %v2258 = vpop.f32.mrb[0].mxu0
      %2259 = vmatprep.mubr.f32.mxu0 0.0
      %2260 = vmatmul.mubr.f32.gmra.mrb[0].mxu0 %v478
      %v2261 = vpop.f32.mrb[0].mxu0
      %v2262 = vpop.f32.mrb[0].mxu0
      %2263 = vmatprep.mubr.f32.mxu0 0.0
      %2264 = vmatmul.mubr.f32.gmra.mrb[0].mxu0 %v479
      %v2265 = vpop.f32.mrb[0].mxu0
      %v2266 = vadd.f32 0.0, %v2265
      %v2267 = vpop.f32.mrb[0].mxu0
      %2268 = vmatprep.mubr.f32.mxu0 0.0
      %2269 = vmatmul.mubr.f32.gmra.mrb[0].mxu0 %v480
      %v2270 = vpop.f32.mrb[0].mxu0
      %v2271 = vadd.f32 0.0, %v2270
      %v2272 = vpop.f32.mrb[0].mxu0
      %2273 = vmatprep.mubr.f32.mxu0 0.0
      %2274 = vmatmul.mubr.f32.gmra.mrb[0].mxu0 %v481
      %v2275 = vpop.f32.mrb[0].mxu0
      %v2276 = vpop.f32.mrb[0].mxu0
      %2277 = vmatprep.mubr.f32.mxu0 0.0
      %2278 = vmatmul.mubr.f32.gmra.mrb[0].mxu0 %v482
      %v2279 = vpop.f32.mrb[0].mxu0
      %v2280 = vadd.f32 0.0, %v2279
      %v2281 = vpop.f32.mrb[0].mxu0
      %2282 = vmatprep.mubr.f32.mxu0 0.0
      %2283 = vmatmul.mubr.f32.gmra.mrb[0].mxu0 %v483
      %v2284 = vpop.f32.mrb[0].mxu0
      %v2285 = vadd.f32 0.0, %v2284
      %v2286 = vpop.f32.mrb[0].mxu0
      %2287 = vmatprep.mubr.f32.mxu0 0.0
      %2288 = vmatmul.mubr.f32.gmra.mrb[0].mxu0 %v484
      %v2289 = vpop.f32.mrb[0].mxu0
      %v2290 = vpop.f32.mrb[0].mxu0
      %2291 = vdwg.mxu0
      %v2292 = vadd.f32 %v2082, %v2182
      %v2293 = vadd.f32 %v2083, %v2187
      %v2294 = vadd.f32 %v2084, %v2196
      %v2295 = vadd.f32 %v2085, %v2201
      %v2296 = vadd.f32 %v2086, %v2210
      %v2297 = vadd.f32 %v2087, %v2215
      %v2298 = vadd.f32 %v2088, %v2224
      %v2299 = vadd.f32 %v2089, %v2229
      %v2300 = vadd.f32 %v2090, %v2238
      %v2301 = vadd.f32 %v2091, %v2243
      %v2302 = vadd.f32 %v2092, %v2252
      %v2303 = vadd.f32 %v2093, %v2257
      %v2304 = vadd.f32 %v2094, %v2266
      %v2305 = vadd.f32 %v2095, %v2271
      %v2306 = vadd.f32 %v2096, %v2280
      %v2307 = vadd.f32 %v2097, %v2285
      %s2308 = scalar_lea.vmem %s185, 896
      %v2309 = vld [vmem:[%s2308] sm:$0xff]
      %v2310 = vld [vmem:[%s2308 + $0x8] sm:$0xff]
      %v2311 = vld [vmem:[%s2308 + $0x10] sm:$0xff]
      %v2312 = vld [vmem:[%s2308 + $0x18] sm:$0xff]
      %v2313 = vld [vmem:[%s2308 + $0x20] sm:$0xff]
      %v2314 = vld [vmem:[%s2308 + $0x28] sm:$0xff]
      %v2315 = vld [vmem:[%s2308 + $0x30] sm:$0xff]
      %v2316 = vld [vmem:[%s2308 + $0x38] sm:$0xff]
      %v2317 = vld [vmem:[%s2308 + $0x40] sm:$0xff]
      %v2318 = vld [vmem:[%s2308 + $0x48] sm:$0xff]
      %v2319 = vld [vmem:[%s2308 + $0x50] sm:$0xff]
      %v2320 = vld [vmem:[%s2308 + $0x58] sm:$0xff]
      %v2321 = vld [vmem:[%s2308 + $0x60] sm:$0xff]
      %v2322 = vld [vmem:[%s2308 + $0x68] sm:$0xff]
      %v2323 = vld [vmem:[%s2308 + $0x70] sm:$0xff]
      %v2324 = vld [vmem:[%s2308 + $0x78] sm:$0xff]
      %2325 = vmatprep.subr.mxu0 0.0
      %2326 = vmatpush1.msra.mxu0 %v2309
      %2327 = vmatprep.subr.mxu0 0.0
      %2328 = vmatpush1.msra.mxu0 %v2310
      %2329 = vmatprep.subr.mxu0 0.0
      %2330 = vmatpush1.msra.mxu0 %v2311
      %2331 = vmatprep.subr.mxu0 0.0
      %2332 = vmatpush1.msra.mxu0 %v2312
      %2333 = vmatprep.subr.mxu0 0.0
      %2334 = vmatpush1.msra.mxu0 %v2313
      %2335 = vmatprep.subr.mxu0 0.0
      %2336 = vmatpush1.msra.mxu0 %v2314
      %2337 = vmatprep.subr.mxu0 0.0
      %2338 = vmatpush1.msra.mxu0 %v2315
      %2339 = vmatprep.subr.mxu0 0.0
      %2340 = vmatpush1.msra.mxu0 %v2316
      %2341 = vmatprep.subr.mxu0 0.0
      %2342 = vmatpush1.msra.mxu0 %v2317
      %2343 = vmatprep.subr.mxu0 0.0
      %2344 = vmatpush1.msra.mxu0 %v2318
      %2345 = vmatprep.subr.mxu0 0.0
      %2346 = vmatpush1.msra.mxu0 %v2319
      %2347 = vmatprep.subr.mxu0 0.0
      %2348 = vmatpush1.msra.mxu0 %v2320
      %2349 = vmatprep.subr.mxu0 0.0
      %2350 = vmatpush1.msra.mxu0 %v2321
      %2351 = vmatprep.subr.mxu0 0.0
      %2352 = vmatpush1.msra.mxu0 %v2322
      %2353 = vmatprep.subr.mxu0 0.0
      %2354 = vmatpush1.msra.mxu0 %v2323
      %2355 = vmatprep.subr.mxu0 0.0
      %2356 = vmatpush1.msra.mxu0 %v2324
      %2357 = vmatprep.subr.mxu0 0.0
      %2358 = vmatpush1.msra.mxu0 0.0
      %2359 = vmatprep.subr.mxu0 0.0
      %2360 = vmatpush1.msra.mxu0 0.0
      %2361 = vmatprep.subr.mxu0 0.0
      %2362 = vmatpush1.msra.mxu0 0.0
      %2363 = vmatprep.subr.mxu0 0.0
      %2364 = vmatpush1.msra.mxu0 0.0
      %2365 = vmatprep.subr.mxu0 0.0
      %2366 = vmatpush1.msra.mxu0 0.0
      %2367 = vmatprep.subr.mxu0 0.0
      %2368 = vmatpush1.msra.mxu0 0.0
      %2369 = vmatprep.subr.mxu0 0.0
      %2370 = vmatpush1.msra.mxu0 0.0
      %2371 = vmatprep.subr.mxu0 0.0
      %2372 = vmatpush1.msra.mxu0 0.0
      %2373 = vmatprep.subr.mxu0 0.0
      %2374 = vmatpush1.msra.mxu0 0.0
      %2375 = vmatprep.subr.mxu0 0.0
      %2376 = vmatpush1.msra.mxu0 0.0
      %2377 = vmatprep.subr.mxu0 0.0
      %2378 = vmatpush1.msra.mxu0 0.0
      %2379 = vmatprep.subr.mxu0 0.0
      %2380 = vmatpush1.msra.mxu0 0.0
      %2381 = vmatprep.subr.mxu0 0.0
      %2382 = vmatpush1.msra.mxu0 0.0
      %2383 = vmatprep.subr.mxu0 0.0
      %2384 = vmatpush1.msra.mxu0 0.0
      %2385 = vmatprep.subr.mxu0 0.0
      %2386 = vmatpush1.msra.mxu0 0.0
      %2387 = vmatprep.subr.mxu0 0.0
      %2388 = vmatpush1.msra.mxu0 0.0
      %2389 = vmatprep.mubr.f32.mxu0 0.0
      %2390 = vmatmul.mubr.f32.gmra.mrb[0].mxu0 %v461
      %v2391 = vpop.f32.mrb[0].mxu0
      %v2392 = vadd.f32 0.0, %v2391
      %v2393 = vpop.f32.mrb[0].mxu0
      %2394 = vmatprep.mubr.f32.mxu0 0.0
      %2395 = vmatmul.mubr.f32.gmra.mrb[0].mxu0 %v462
      %v2396 = vpop.f32.mrb[0].mxu0
      %v2397 = vadd.f32 0.0, %v2396
      %v2398 = vpop.f32.mrb[0].mxu0
      %2399 = vmatprep.mubr.f32.mxu0 0.0
      %2400 = vmatmul.mubr.f32.gmra.mrb[0].mxu0 %v463
      %v2401 = vpop.f32.mrb[0].mxu0
      %v2402 = vadd.f32 0.0, %v2401
      %v2403 = vpop.f32.mrb[0].mxu0
      %2404 = vmatprep.mubr.f32.mxu0 0.0
      %2405 = vmatmul.mubr.f32.gmra.mrb[0].mxu0 %v464
      %v2406 = vpop.f32.mrb[0].mxu0
      %v2407 = vadd.f32 0.0, %v2406
      %v2408 = vpop.f32.mrb[0].mxu0
      %2409 = vmatprep.mubr.f32.mxu0 0.0
      %2410 = vmatmul.mubr.f32.gmra.mrb[0].mxu0 %v465
      %v2411 = vpop.f32.mrb[0].mxu0
      %v2412 = vadd.f32 0.0, %v2411
      %v2413 = vpop.f32.mrb[0].mxu0
      %2414 = vmatprep.mubr.f32.mxu0 0.0
      %2415 = vmatmul.mubr.f32.gmra.mrb[0].mxu0 %v466
      %v2416 = vpop.f32.mrb[0].mxu0
      %v2417 = vadd.f32 0.0, %v2416
      %v2418 = vpop.f32.mrb[0].mxu0
      %2419 = vmatprep.mubr.f32.mxu0 0.0
      %2420 = vmatmul.mubr.f32.gmra.mrb[0].mxu0 %v467
      %v2421 = vpop.f32.mrb[0].mxu0
      %v2422 = vadd.f32 0.0, %v2421
      %v2423 = vpop.f32.mrb[0].mxu0
      %2424 = vmatprep.mubr.f32.mxu0 0.0
      %2425 = vmatmul.mubr.f32.gmra.mrb[0].mxu0 %v468
      %v2426 = vpop.f32.mrb[0].mxu0
      %v2427 = vadd.f32 0.0, %v2426
      %v2428 = vpop.f32.mrb[0].mxu0
      %2429 = vmatprep.mubr.f32.mxu0 0.0
      %2430 = vmatmul.mubr.f32.gmra.mrb[0].mxu0 %v469
      %v2431 = vpop.f32.mrb[0].mxu0
      %v2432 = vadd.f32 0.0, %v2431
      %v2433 = vpop.f32.mrb[0].mxu0
      %2434 = vmatprep.mubr.f32.mxu0 0.0
      %2435 = vmatmul.mubr.f32.gmra.mrb[0].mxu0 %v470
      %v2436 = vpop.f32.mrb[0].mxu0
      %v2437 = vadd.f32 0.0, %v2436
      %v2438 = vpop.f32.mrb[0].mxu0
      %2439 = vmatprep.mubr.f32.mxu0 0.0
      %2440 = vmatmul.mubr.f32.gmra.mrb[0].mxu0 %v471
      %v2441 = vpop.f32.mrb[0].mxu0
      %v2442 = vadd.f32 0.0, %v2441
      %v2443 = vpop.f32.mrb[0].mxu0
      %2444 = vmatprep.mubr.f32.mxu0 0.0
      %2445 = vmatmul.mubr.f32.gmra.mrb[0].mxu0 %v472
      %v2446 = vpop.f32.mrb[0].mxu0
      %v2447 = vadd.f32 0.0, %v2446
      %v2448 = vpop.f32.mrb[0].mxu0
      %2449 = vmatprep.mubr.f32.mxu0 0.0
      %2450 = vmatmul.mubr.f32.gmra.mrb[0].mxu0 %v473
      %v2451 = vpop.f32.mrb[0].mxu0
      %v2452 = vadd.f32 0.0, %v2451
      %v2453 = vpop.f32.mrb[0].mxu0
      %2454 = vmatprep.mubr.f32.mxu0 0.0
      %2455 = vmatmul.mubr.f32.gmra.mrb[0].mxu0 %v474
      %v2456 = vpop.f32.mrb[0].mxu0
      %v2457 = vadd.f32 0.0, %v2456
      %v2458 = vpop.f32.mrb[0].mxu0
      %2459 = vmatprep.mubr.f32.mxu0 0.0
      %2460 = vmatmul.mubr.f32.gmra.mrb[0].mxu0 %v475
      %v2461 = vpop.f32.mrb[0].mxu0
      %v2462 = vadd.f32 0.0, %v2461
      %v2463 = vpop.f32.mrb[0].mxu0
      %2464 = vmatprep.mubr.f32.mxu0 0.0
      %2465 = vmatmul.mubr.f32.gmra.mrb[0].mxu0 %v476
      %v2466 = vpop.f32.mrb[0].mxu0
      %v2467 = vadd.f32 0.0, %v2466
      %v2468 = vpop.f32.mrb[0].mxu0
      %2469 = vmatprep.mubr.f32.mxu0 0.0
      %2470 = vmatmul.mubr.f32.gmra.mrb[0].mxu0 %v477
      %v2471 = vpop.f32.mrb[0].mxu0
      %v2472 = vadd.f32 0.0, %v2471
      %v2473 = vpop.f32.mrb[0].mxu0
      %2474 = vmatprep.mubr.f32.mxu0 0.0
      %2475 = vmatmul.mubr.f32.gmra.mrb[0].mxu0 %v478
      %v2476 = vpop.f32.mrb[0].mxu0
      %v2477 = vadd.f32 0.0, %v2476
      %v2478 = vpop.f32.mrb[0].mxu0
      %2479 = vmatprep.mubr.f32.mxu0 0.0
      %2480 = vmatmul.mubr.f32.gmra.mrb[0].mxu0 %v479
      %v2481 = vpop.f32.mrb[0].mxu0
      %v2482 = vadd.f32 0.0, %v2481
      %v2483 = vpop.f32.mrb[0].mxu0
      %2484 = vmatprep.mubr.f32.mxu0 0.0
      %2485 = vmatmul.mubr.f32.gmra.mrb[0].mxu0 %v480
      %v2486 = vpop.f32.mrb[0].mxu0
      %v2487 = vadd.f32 0.0, %v2486
      %v2488 = vpop.f32.mrb[0].mxu0
      %2489 = vmatprep.mubr.f32.mxu0 0.0
      %2490 = vmatmul.mubr.f32.gmra.mrb[0].mxu0 %v481
      %v2491 = vpop.f32.mrb[0].mxu0
      %v2492 = vadd.f32 0.0, %v2491
      %v2493 = vpop.f32.mrb[0].mxu0
      %2494 = vmatprep.mubr.f32.mxu0 0.0
      %2495 = vmatmul.mubr.f32.gmra.mrb[0].mxu0 %v482
      %v2496 = vpop.f32.mrb[0].mxu0
      %v2497 = vadd.f32 0.0, %v2496
      %v2498 = vpop.f32.mrb[0].mxu0
      %2499 = vmatprep.mubr.f32.mxu0 0.0
      %2500 = vmatmul.mubr.f32.gmra.mrb[0].mxu0 %v483
      %v2501 = vpop.f32.mrb[0].mxu0
      %v2502 = vadd.f32 0.0, %v2501
      %v2503 = vpop.f32.mrb[0].mxu0
      %2504 = vmatprep.mubr.f32.mxu0 0.0
      %2505 = vmatmul.mubr.f32.gmra.mrb[0].mxu0 %v484
      %v2506 = vpop.f32.mrb[0].mxu0
      %v2507 = vadd.f32 0.0, %v2506
      %v2508 = vpop.f32.mrb[0].mxu0
      %2509 = vdwg.mxu0
      %v2534 = vrot.slane %v2392, 1
      %v2535 = vrot.slane %v2397, 1
      %v2536 = vsel %vm920, %v2534, %v2535
      %v2537 = vrot.slane %v2402, 1
      %v2538 = vsel %vm920, %v2535, %v2537
      %v2539 = vrot.slane %v2407, 1
      %v2540 = vrot.slane %v2412, 1
      %v2541 = vsel %vm920, %v2539, %v2540
      %v2542 = vrot.slane %v2417, 1
      %v2543 = vsel %vm920, %v2540, %v2542
      %v2544 = vrot.slane %v2422, 1
      %v2545 = vrot.slane %v2427, 1
      %v2546 = vsel %vm920, %v2544, %v2545
      %v2547 = vrot.slane %v2432, 1
      %v2548 = vsel %vm920, %v2545, %v2547
      %v2549 = vrot.slane %v2437, 1
      %v2550 = vrot.slane %v2442, 1
      %v2551 = vsel %vm920, %v2549, %v2550
      %v2552 = vrot.slane %v2447, 1
      %v2553 = vsel %vm920, %v2550, %v2552
      %v2554 = vrot.slane %v2452, 1
      %v2555 = vrot.slane %v2457, 1
      %v2556 = vsel %vm920, %v2554, %v2555
      %v2557 = vrot.slane %v2462, 1
      %v2558 = vsel %vm920, %v2555, %v2557
      %v2559 = vrot.slane %v2467, 1
      %v2560 = vrot.slane %v2472, 1
      %v2561 = vsel %vm920, %v2559, %v2560
      %v2562 = vrot.slane %v2477, 1
      %v2563 = vsel %vm920, %v2560, %v2562
      %v2564 = vrot.slane %v2482, 1
      %v2565 = vrot.slane %v2487, 1
      %v2566 = vsel %vm920, %v2564, %v2565
      %v2567 = vrot.slane %v2492, 1
      %v2568 = vsel %vm920, %v2565, %v2567
      %v2569 = vrot.slane %v2497, 1
      %v2570 = vrot.slane %v2502, 1
      %v2571 = vsel %vm920, %v2569, %v2570
      %v2572 = vrot.slane %v2507, 1
      %v2573 = vsel %vm920, %v2570, %v2572
      %v2590 = vadd.f32 %v2292, %v2536
      %v2591 = vadd.f32 %v2293, %v2538
      %v2592 = vadd.f32 %v2294, %v2541
      %v2593 = vadd.f32 %v2295, %v2543
      %v2594 = vadd.f32 %v2296, %v2546
      %v2595 = vadd.f32 %v2297, %v2548
      %v2596 = vadd.f32 %v2298, %v2551
      %v2597 = vadd.f32 %v2299, %v2553
      %v2598 = vadd.f32 %v2300, %v2556
      %v2599 = vadd.f32 %v2301, %v2558
      %v2600 = vadd.f32 %v2302, %v2561
      %v2601 = vadd.f32 %v2303, %v2563
      %v2602 = vadd.f32 %v2304, %v2566
      %v2603 = vadd.f32 %v2305, %v2568
      %v2604 = vadd.f32 %v2306, %v2571
      %v2605 = vadd.f32 %v2307, %v2573
      %s2606 = scalar_lea.vmem %s185, 1024
      %v2607 = vld [vmem:[%s2606] sm:$0xff]
      %v2608 = vld [vmem:[%s2606 + $0x8] sm:$0xff]
      %v2609 = vld [vmem:[%s2606 + $0x10] sm:$0xff]
      %v2610 = vld [vmem:[%s2606 + $0x18] sm:$0xff]
      %v2611 = vld [vmem:[%s2606 + $0x20] sm:$0xff]
      %v2612 = vld [vmem:[%s2606 + $0x28] sm:$0xff]
      %v2613 = vld [vmem:[%s2606 + $0x30] sm:$0xff]
      %v2614 = vld [vmem:[%s2606 + $0x38] sm:$0xff]
      %v2615 = vld [vmem:[%s2606 + $0x40] sm:$0xff]
      %v2616 = vld [vmem:[%s2606 + $0x48] sm:$0xff]
      %v2617 = vld [vmem:[%s2606 + $0x50] sm:$0xff]
      %v2618 = vld [vmem:[%s2606 + $0x58] sm:$0xff]
      %v2619 = vld [vmem:[%s2606 + $0x60] sm:$0xff]
      %v2620 = vld [vmem:[%s2606 + $0x68] sm:$0xff]
      %v2621 = vld [vmem:[%s2606 + $0x70] sm:$0xff]
      %v2622 = vld [vmem:[%s2606 + $0x78] sm:$0xff]
      %2623 = vmatprep.subr.mxu0 0.0
      %2624 = vmatpush1.msra.mxu0 %v2607
      %2625 = vmatprep.subr.mxu0 0.0
      %2626 = vmatpush1.msra.mxu0 %v2608
      %2627 = vmatprep.subr.mxu0 0.0
      %2628 = vmatpush1.msra.mxu0 %v2609
      %2629 = vmatprep.subr.mxu0 0.0
      %2630 = vmatpush1.msra.mxu0 %v2610
      %2631 = vmatprep.subr.mxu0 0.0
      %2632 = vmatpush1.msra.mxu0 %v2611
      %2633 = vmatprep.subr.mxu0 0.0
      %2634 = vmatpush1.msra.mxu0 %v2612
      %2635 = vmatprep.subr.mxu0 0.0
      %2636 = vmatpush1.msra.mxu0 %v2613
      %2637 = vmatprep.subr.mxu0 0.0
      %2638 = vmatpush1.msra.mxu0 %v2614
      %2639 = vmatprep.subr.mxu0 0.0
      %2640 = vmatpush1.msra.mxu0 %v2615
      %2641 = vmatprep.subr.mxu0 0.0
      %2642 = vmatpush1.msra.mxu0 %v2616
      %2643 = vmatprep.subr.mxu0 0.0
      %2644 = vmatpush1.msra.mxu0 %v2617
      %2645 = vmatprep.subr.mxu0 0.0
      %2646 = vmatpush1.msra.mxu0 %v2618
      %2647 = vmatprep.subr.mxu0 0.0
      %2648 = vmatpush1.msra.mxu0 %v2619
      %2649 = vmatprep.subr.mxu0 0.0
      %2650 = vmatpush1.msra.mxu0 %v2620
      %2651 = vmatprep.subr.mxu0 0.0
      %2652 = vmatpush1.msra.mxu0 %v2621
      %2653 = vmatprep.subr.mxu0 0.0
      %2654 = vmatpush1.msra.mxu0 %v2622
      %2655 = vmatprep.subr.mxu0 0.0
      %2656 = vmatpush1.msra.mxu0 0.0
      %2657 = vmatprep.subr.mxu0 0.0
      %2658 = vmatpush1.msra.mxu0 0.0
      %2659 = vmatprep.subr.mxu0 0.0
      %2660 = vmatpush1.msra.mxu0 0.0
      %2661 = vmatprep.subr.mxu0 0.0
      %2662 = vmatpush1.msra.mxu0 0.0
      %2663 = vmatprep.subr.mxu0 0.0
      %2664 = vmatpush1.msra.mxu0 0.0
      %2665 = vmatprep.subr.mxu0 0.0
      %2666 = vmatpush1.msra.mxu0 0.0
      %2667 = vmatprep.subr.mxu0 0.0
      %2668 = vmatpush1.msra.mxu0 0.0
      %2669 = vmatprep.subr.mxu0 0.0
      %2670 = vmatpush1.msra.mxu0 0.0
      %2671 = vmatprep.subr.mxu0 0.0
      %2672 = vmatpush1.msra.mxu0 0.0
      %2673 = vmatprep.subr.mxu0 0.0
      %2674 = vmatpush1.msra.mxu0 0.0
      %2675 = vmatprep.subr.mxu0 0.0
      %2676 = vmatpush1.msra.mxu0 0.0
      %2677 = vmatprep.subr.mxu0 0.0
      %2678 = vmatpush1.msra.mxu0 0.0
      %2679 = vmatprep.subr.mxu0 0.0
      %2680 = vmatpush1.msra.mxu0 0.0
      %2681 = vmatprep.subr.mxu0 0.0
      %2682 = vmatpush1.msra.mxu0 0.0
      %2683 = vmatprep.subr.mxu0 0.0
      %2684 = vmatpush1.msra.mxu0 0.0
      %2685 = vmatprep.subr.mxu0 0.0
      %2686 = vmatpush1.msra.mxu0 0.0
      %2687 = vmatprep.mubr.f32.mxu0 0.0
      %2688 = vmatmul.mubr.f32.gmra.mrb[0].mxu0 %v461
      %v2689 = vpop.f32.mrb[0].mxu0
      %v2690 = vadd.f32 0.0, %v2689
      %v2691 = vpop.f32.mrb[0].mxu0
      %2692 = vmatprep.mubr.f32.mxu0 0.0
      %2693 = vmatmul.mubr.f32.gmra.mrb[0].mxu0 %v462
      %v2694 = vpop.f32.mrb[0].mxu0
      %v2695 = vadd.f32 0.0, %v2694
      %v2696 = vpop.f32.mrb[0].mxu0
      %2697 = vmatprep.mubr.f32.mxu0 0.0
      %2698 = vmatmul.mubr.f32.gmra.mrb[0].mxu0 %v463
      %v2699 = vpop.f32.mrb[0].mxu0
      %v2700 = vadd.f32 0.0, %v2699
      %v2701 = vpop.f32.mrb[0].mxu0
      %2702 = vmatprep.mubr.f32.mxu0 0.0
      %2703 = vmatmul.mubr.f32.gmra.mrb[0].mxu0 %v464
      %v2704 = vpop.f32.mrb[0].mxu0
      %v2705 = vadd.f32 0.0, %v2704
      %v2706 = vpop.f32.mrb[0].mxu0
      %2707 = vmatprep.mubr.f32.mxu0 0.0
      %2708 = vmatmul.mubr.f32.gmra.mrb[0].mxu0 %v465
      %v2709 = vpop.f32.mrb[0].mxu0
      %v2710 = vadd.f32 0.0, %v2709
      %v2711 = vpop.f32.mrb[0].mxu0
      %2712 = vmatprep.mubr.f32.mxu0 0.0
      %2713 = vmatmul.mubr.f32.gmra.mrb[0].mxu0 %v466
      %v2714 = vpop.f32.mrb[0].mxu0
      %v2715 = vadd.f32 0.0, %v2714
      %v2716 = vpop.f32.mrb[0].mxu0
      %2717 = vmatprep.mubr.f32.mxu0 0.0
      %2718 = vmatmul.mubr.f32.gmra.mrb[0].mxu0 %v467
      %v2719 = vpop.f32.mrb[0].mxu0
      %v2720 = vadd.f32 0.0, %v2719
      %v2721 = vpop.f32.mrb[0].mxu0
      %2722 = vmatprep.mubr.f32.mxu0 0.0
      %2723 = vmatmul.mubr.f32.gmra.mrb[0].mxu0 %v468
      %v2724 = vpop.f32.mrb[0].mxu0
      %v2725 = vadd.f32 0.0, %v2724
      %v2726 = vpop.f32.mrb[0].mxu0
      %2727 = vmatprep.mubr.f32.mxu0 0.0
      %2728 = vmatmul.mubr.f32.gmra.mrb[0].mxu0 %v469
      %v2729 = vpop.f32.mrb[0].mxu0
      %v2730 = vadd.f32 0.0, %v2729
      %v2731 = vpop.f32.mrb[0].mxu0
      %2732 = vmatprep.mubr.f32.mxu0 0.0
      %2733 = vmatmul.mubr.f32.gmra.mrb[0].mxu0 %v470
      %v2734 = vpop.f32.mrb[0].mxu0
      %v2735 = vadd.f32 0.0, %v2734
      %v2736 = vpop.f32.mrb[0].mxu0
      %2737 = vmatprep.mubr.f32.mxu0 0.0
      %2738 = vmatmul.mubr.f32.gmra.mrb[0].mxu0 %v471
      %v2739 = vpop.f32.mrb[0].mxu0
      %v2740 = vadd.f32 0.0, %v2739
      %v2741 = vpop.f32.mrb[0].mxu0
      %2742 = vmatprep.mubr.f32.mxu0 0.0
      %2743 = vmatmul.mubr.f32.gmra.mrb[0].mxu0 %v472
      %v2744 = vpop.f32.mrb[0].mxu0
      %v2745 = vadd.f32 0.0, %v2744
      %v2746 = vpop.f32.mrb[0].mxu0
      %2747 = vmatprep.mubr.f32.mxu0 0.0
      %2748 = vmatmul.mubr.f32.gmra.mrb[0].mxu0 %v473
      %v2749 = vpop.f32.mrb[0].mxu0
      %v2750 = vadd.f32 0.0, %v2749
      %v2751 = vpop.f32.mrb[0].mxu0
      %2752 = vmatprep.mubr.f32.mxu0 0.0
      %2753 = vmatmul.mubr.f32.gmra.mrb[0].mxu0 %v474
      %v2754 = vpop.f32.mrb[0].mxu0
      %v2755 = vadd.f32 0.0, %v2754
      %v2756 = vpop.f32.mrb[0].mxu0
      %2757 = vmatprep.mubr.f32.mxu0 0.0
      %2758 = vmatmul.mubr.f32.gmra.mrb[0].mxu0 %v475
      %v2759 = vpop.f32.mrb[0].mxu0
      %v2760 = vadd.f32 0.0, %v2759
      %v2761 = vpop.f32.mrb[0].mxu0
      %2762 = vmatprep.mubr.f32.mxu0 0.0
      %2763 = vmatmul.mubr.f32.gmra.mrb[0].mxu0 %v476
      %v2764 = vpop.f32.mrb[0].mxu0
      %v2765 = vadd.f32 0.0, %v2764
      %v2766 = vpop.f32.mrb[0].mxu0
      %2767 = vmatprep.mubr.f32.mxu0 0.0
      %2768 = vmatmul.mubr.f32.gmra.mrb[0].mxu0 %v477
      %v2769 = vpop.f32.mrb[0].mxu0
      %v2770 = vadd.f32 0.0, %v2769
      %v2771 = vpop.f32.mrb[0].mxu0
      %2772 = vmatprep.mubr.f32.mxu0 0.0
      %2773 = vmatmul.mubr.f32.gmra.mrb[0].mxu0 %v478
      %v2774 = vpop.f32.mrb[0].mxu0
      %v2775 = vadd.f32 0.0, %v2774
      %v2776 = vpop.f32.mrb[0].mxu0
      %2777 = vmatprep.mubr.f32.mxu0 0.0
      %2778 = vmatmul.mubr.f32.gmra.mrb[0].mxu0 %v479
      %v2779 = vpop.f32.mrb[0].mxu0
      %v2780 = vadd.f32 0.0, %v2779
      %v2781 = vpop.f32.mrb[0].mxu0
      %2782 = vmatprep.mubr.f32.mxu0 0.0
      %2783 = vmatmul.mubr.f32.gmra.mrb[0].mxu0 %v480
      %v2784 = vpop.f32.mrb[0].mxu0
      %v2785 = vadd.f32 0.0, %v2784
      %v2786 = vpop.f32.mrb[0].mxu0
      %2787 = vmatprep.mubr.f32.mxu0 0.0
      %2788 = vmatmul.mubr.f32.gmra.mrb[0].mxu0 %v481
      %v2789 = vpop.f32.mrb[0].mxu0
      %v2790 = vadd.f32 0.0, %v2789
      %v2791 = vpop.f32.mrb[0].mxu0
      %2792 = vmatprep.mubr.f32.mxu0 0.0
      %2793 = vmatmul.mubr.f32.gmra.mrb[0].mxu0 %v482
      %v2794 = vpop.f32.mrb[0].mxu0
      %v2795 = vadd.f32 0.0, %v2794
      %v2796 = vpop.f32.mrb[0].mxu0
      %2797 = vmatprep.mubr.f32.mxu0 0.0
      %2798 = vmatmul.mubr.f32.gmra.mrb[0].mxu0 %v483
      %v2799 = vpop.f32.mrb[0].mxu0
      %v2800 = vadd.f32 0.0, %v2799
      %v2801 = vpop.f32.mrb[0].mxu0
      %2802 = vmatprep.mubr.f32.mxu0 0.0
      %2803 = vmatmul.mubr.f32.gmra.mrb[0].mxu0 %v484
      %v2804 = vpop.f32.mrb[0].mxu0
      %v2805 = vadd.f32 0.0, %v2804
      %v2806 = vpop.f32.mrb[0].mxu0
      %2807 = vdwg.mxu0
      %v2832 = vrot.slane %v2690, 2
      %v2833 = vrot.slane %v2695, 2
      %v2834 = vsel %vm1219, %v2832, %v2833
      %v2835 = vrot.slane %v2700, 2
      %v2836 = vsel %vm1219, %v2833, %v2835
      %v2837 = vrot.slane %v2705, 2
      %v2838 = vrot.slane %v2710, 2
      %v2839 = vsel %vm1219, %v2837, %v2838
      %v2840 = vrot.slane %v2715, 2
      %v2841 = vsel %vm1219, %v2838, %v2840
      %v2842 = vrot.slane %v2720, 2
      %v2843 = vrot.slane %v2725, 2
      %v2844 = vsel %vm1219, %v2842, %v2843
      %v2845 = vrot.slane %v2730, 2
      %v2846 = vsel %vm1219, %v2843, %v2845
      %v2847 = vrot.slane %v2735, 2
      %v2848 = vrot.slane %v2740, 2
      %v2849 = vsel %vm1219, %v2847, %v2848
      %v2850 = vrot.slane %v2745, 2
      %v2851 = vsel %vm1219, %v2848, %v2850
      %v2852 = vrot.slane %v2750, 2
      %v2853 = vrot.slane %v2755, 2
      %v2854 = vsel %vm1219, %v2852, %v2853
      %v2855 = vrot.slane %v2760, 2
      %v2856 = vsel %vm1219, %v2853, %v2855
      %v2857 = vrot.slane %v2765, 2
      %v2858 = vrot.slane %v2770, 2
      %v2859 = vsel %vm1219, %v2857, %v2858
      %v2860 = vrot.slane %v2775, 2
      %v2861 = vsel %vm1219, %v2858, %v2860
      %v2862 = vrot.slane %v2780, 2
      %v2863 = vrot.slane %v2785, 2
      %v2864 = vsel %vm1219, %v2862, %v2863
      %v2865 = vrot.slane %v2790, 2
      %v2866 = vsel %vm1219, %v2863, %v2865
      %v2867 = vrot.slane %v2795, 2
      %v2868 = vrot.slane %v2800, 2
      %v2869 = vsel %vm1219, %v2867, %v2868
      %v2870 = vrot.slane %v2805, 2
      %v2871 = vsel %vm1219, %v2868, %v2870
      %v2888 = vadd.f32 %v2590, %v2834
      %v2889 = vadd.f32 %v2591, %v2836
      %v2890 = vadd.f32 %v2592, %v2839
      %v2891 = vadd.f32 %v2593, %v2841
      %v2892 = vadd.f32 %v2594, %v2844
      %v2893 = vadd.f32 %v2595, %v2846
      %v2894 = vadd.f32 %v2596, %v2849
      %v2895 = vadd.f32 %v2597, %v2851
      %v2896 = vadd.f32 %v2598, %v2854
      %v2897 = vadd.f32 %v2599, %v2856
      %v2898 = vadd.f32 %v2600, %v2859
      %v2899 = vadd.f32 %v2601, %v2861
      %v2900 = vadd.f32 %v2602, %v2864
      %v2901 = vadd.f32 %v2603, %v2866
      %v2902 = vadd.f32 %v2604, %v2869
      %v2903 = vadd.f32 %v2605, %v2871
      %2904 = vst [vmem:[%s198] sm:$0xff] %v2888
      %2905 = vst [vmem:[%s198 + $0x8] sm:$0xff] %v2889
      %2906 = vst [vmem:[%s198 + $0x10] sm:$0xff] %v2890
      %2907 = vst [vmem:[%s198 + $0x18] sm:$0xff] %v2891
      %2908 = vst [vmem:[%s198 + $0x20] sm:$0xff] %v2892
      %2909 = vst [vmem:[%s198 + $0x28] sm:$0xff] %v2893
      %2910 = vst [vmem:[%s198 + $0x30] sm:$0xff] %v2894
      %2911 = vst [vmem:[%s198 + $0x38] sm:$0xff] %v2895
      %2912 = vst [vmem:[%s198 + $0x40] sm:$0xff] %v2896
      %2913 = vst [vmem:[%s198 + $0x48] sm:$0xff] %v2897
      %2914 = vst [vmem:[%s198 + $0x50] sm:$0xff] %v2898
      %2915 = vst [vmem:[%s198 + $0x58] sm:$0xff] %v2899
      %2916 = vst [vmem:[%s198 + $0x60] sm:$0xff] %v2900
      %2917 = vst [vmem:[%s198 + $0x68] sm:$0xff] %v2901
      %2918 = vst [vmem:[%s198 + $0x70] sm:$0xff] %v2902
      %2919 = vst [vmem:[%s198 + $0x78] sm:$0xff] %v2903
      %v2920 = vadd.f32 %v2888, %v2889
      %v2921 = vadd.f32 %v2920, %v2890
      %v2922 = vadd.f32 %v2921, %v2891
      %v2923 = vadd.f32 %v2922, %v2892
      %v2924 = vadd.f32 %v2923, %v2893
      %v2925 = vadd.f32 %v2924, %v2894
      %v2926 = vadd.f32 %v2925, %v2895
      %v2927 = vadd.f32 %v2926, %v2896
      %v2928 = vadd.f32 %v2927, %v2897
      %v2929 = vadd.f32 %v2928, %v2898
      %v2930 = vadd.f32 %v2929, %v2899
      %v2931 = vadd.f32 %v2930, %v2900
      %v2932 = vadd.f32 %v2931, %v2901
      %v2933 = vadd.f32 %v2932, %v2902
      %v2934 = vadd.f32 %v2933, %v2903
      %v2935 = vrot.slane %v2934, 4
      %v2936 = vadd.f32 %v2934, %v2935
      %v2937 = vrot.slane %v2936, 2
      %v2938 = vadd.f32 %v2936, %v2937
      %v2939 = vrot.slane %v2938, 1
      %v2940 = vadd.f32 %v2938, %v2939
      %v2941 = vmul.f32 %v2940, 0.0078125
      %v2942 = vsub.f32 %v2888, %v2941
      %v2943 = vsub.f32 %v2889, %v2941
      %v2944 = vsub.f32 %v2890, %v2941
      %v2945 = vsub.f32 %v2891, %v2941
      %v2946 = vsub.f32 %v2892, %v2941
      %v2947 = vsub.f32 %v2893, %v2941
      %v2948 = vsub.f32 %v2894, %v2941
      %v2949 = vsub.f32 %v2895, %v2941
      %v2950 = vsub.f32 %v2896, %v2941
      %v2951 = vsub.f32 %v2897, %v2941
      %v2952 = vsub.f32 %v2898, %v2941
      %v2953 = vsub.f32 %v2899, %v2941
      %v2954 = vsub.f32 %v2900, %v2941
      %v2955 = vsub.f32 %v2901, %v2941
      %v2956 = vsub.f32 %v2902, %v2941
      %v2957 = vsub.f32 %v2903, %v2941
      %v2958 = vmul.f32 %v2942, %v2942
      %v2959 = vmul.f32 %v2943, %v2943
      %v2960 = vmul.f32 %v2944, %v2944
      %v2961 = vmul.f32 %v2945, %v2945
      %v2962 = vmul.f32 %v2946, %v2946
      %v2963 = vmul.f32 %v2947, %v2947
      %v2964 = vmul.f32 %v2948, %v2948
      %v2965 = vmul.f32 %v2949, %v2949
      %v2966 = vmul.f32 %v2950, %v2950
      %v2967 = vmul.f32 %v2951, %v2951
      %v2968 = vmul.f32 %v2952, %v2952
      %v2969 = vmul.f32 %v2953, %v2953
      %v2970 = vmul.f32 %v2954, %v2954
      %v2971 = vmul.f32 %v2955, %v2955
      %v2972 = vmul.f32 %v2956, %v2956
      %v2973 = vmul.f32 %v2957, %v2957
      %v2974 = vadd.f32 %v2958, %v2959
      %v2975 = vadd.f32 %v2974, %v2960
      %v2976 = vadd.f32 %v2975, %v2961
      %v2977 = vadd.f32 %v2976, %v2962
      %v2978 = vadd.f32 %v2977, %v2963
      %v2979 = vadd.f32 %v2978, %v2964
      %v2980 = vadd.f32 %v2979, %v2965
      %v2981 = vadd.f32 %v2980, %v2966
      %v2982 = vadd.f32 %v2981, %v2967
      %v2983 = vadd.f32 %v2982, %v2968
      %v2984 = vadd.f32 %v2983, %v2969
      %v2985 = vadd.f32 %v2984, %v2970
      %v2986 = vadd.f32 %v2985, %v2971
      %v2987 = vadd.f32 %v2986, %v2972
      %v2988 = vadd.f32 %v2987, %v2973
      %v2989 = vrot.slane %v2988, 4
      %v2990 = vadd.f32 %v2988, %v2989
      %v2991 = vrot.slane %v2990, 2
      %v2992 = vadd.f32 %v2990, %v2991
      %v2993 = vrot.slane %v2992, 1
      %v2994 = vadd.f32 %v2992, %v2993
      %vm2995 = vcmask 1040384
      %v2996 = vsel %vm2995, %v2940, %v2994
      %2997 = vst [vmem:[%s210] sm:$0x3] %v2996
      %s2998 = smul.u32 8, %s21
      %p2999 = scmp.lt.s32.totalorder %s20, 1
      %s3000 = scalar_select %p2999, %s20, 1
      %p3001 = scmp.lt.s32.totalorder %s2998, 15
      %s3002 = scalar_select %p3001, %s2998, 15
      %p3003 = scmp.lt.s32.totalorder %s22, 0
      %s3004 = scalar_select %p3003, %s22, 0
      %s3005 = smul.addr %s3002, 2
      %s3006 = sadd.s32 %s3004, %s3005
      %s3007 = smul.addr %s3000, 32
      %s3008 = sadd.s32 %s3006, %s3007
      %s3009 = smul.addr %s3008, 8
      %s3010 = scalar_lea.vmem %s2, %s3009
      %p3011 = scmp.lt.s32.totalorder %s20, 1
      %s3012 = scalar_select %p3011, %s20, 1
      %p3013 = scmp.lt.s32.totalorder %s21, 1
      %s3014 = scalar_select %p3013, %s21, 1
      %p3015 = scmp.lt.s32.totalorder %s22, 0
      %s3016 = scalar_select %p3015, %s22, 0
      %s3017 = sadd.s32 %s3016, %s3014
      %s3018 = smul.addr %s3012, 2
      %s3019 = sadd.s32 %s3017, %s3018
      %s3020 = smul.addr %s3019, 2
      %s3021 = scalar_lea.vmem %s3, %s3020
      // Predicated region
      $region105: #{cnn_block.2} parent=23 // pred_check
        %p3022 = pneg %p82
      $region106: #{cnn_block.2} parent=23 // pred_check_branch
        %3024 = sbr.rel (%p3022) target = $region108
      $region107: #{cnn_block.2} parent=23 // pred_region
        %s3025 = smul.u32 8, %s21
      $region108: #{cnn_block.2} parent=23 // pred_fallthru
        _
      // Predicated region
      $region109: #{cnn_block.2} parent=23 // pred_check
        %p3026 = pneg %p112
      $region110: #{cnn_block.2} parent=23 // pred_check_branch
        %3028 = sbr.rel (%p3026) target = $region112
      $region111: #{cnn_block.2} parent=23 // pred_region
        _
      $region112: #{cnn_block.2} parent=23 // pred_fallthru
        _
    $region24: #{cnn_block.2} parent=5 // pred_fallthru
      _
    %p3029 = scmp.le.s32.totalorder 2, %s10
    // Predicated region
    $region113: #{cnn_block.2} parent=5 // pred_check
      %p3030 = pneg %p3029
    $region114: #{cnn_block.2} parent=5 // pred_check_branch
      %3032 = sbr.rel (%p3030) target = $region116
    $region115: #{cnn_block.2} parent=5 // pred_region
      %s3033 = ssub.s32 %s10, 2
      // Predicated region
      $region117: #{cnn_block.2} parent=115 // pred_check
        %p3034 = pneg %p88
      $region118: #{cnn_block.2} parent=115 // pred_check_branch
        %3036 = sbr.rel (%p3034) target = $region120
      $region119: #{cnn_block.2} parent=115 // pred_region
        %s3037 = smul.u32 8, %s24
        %p3038 = scmp.lt.s32.totalorder %s23, 1
        %s3039 = scalar_select %p3038, %s23, 1
        %p3040 = scmp.lt.s32.totalorder %s3037, 15
        %s3041 = scalar_select %p3040, %s3037, 15
        %p3042 = scmp.lt.s32.totalorder %s25, 0
        %s3043 = scalar_select %p3042, %s25, 0
        %s3044 = smul.addr %s3041, 2
        %s3045 = sadd.s32 %s3043, %s3044
        %s3046 = smul.addr %s3039, 32
        %s3047 = sadd.s32 %s3045, %s3046
        %s3048 = smul.addr %s3047, 8
        %s3049 = scalar_lea.vmem %s2, %s3048
      $region120: #{cnn_block.2} parent=115 // pred_fallthru
        _
      // Predicated region
      $region121: #{cnn_block.2} parent=115 // pred_check
        %p3050 = pneg %p118
      $region122: #{cnn_block.2} parent=115 // pred_check_branch
        %3052 = sbr.rel (%p3050) target = $region124
      $region123: #{cnn_block.2} parent=115 // pred_region
        %p3053 = scmp.lt.s32.totalorder %s23, 1
        %s3054 = scalar_select %p3053, %s23, 1
        %p3055 = scmp.lt.s32.totalorder %s24, 1
        %s3056 = scalar_select %p3055, %s24, 1
        %p3057 = scmp.lt.s32.totalorder %s25, 0
        %s3058 = scalar_select %p3057, %s25, 0
        %s3059 = sadd.s32 %s3058, %s3056
        %s3060 = smul.addr %s3054, 2
        %s3061 = sadd.s32 %s3059, %s3060
        %s3062 = smul.addr %s3061, 2
        %s3063 = scalar_lea.vmem %s3, %s3062
      $region124: #{cnn_block.2} parent=115 // pred_fallthru
        _
    $region116: #{cnn_block.2} parent=5 // pred_fallthru
      _
  $region6: #{cnn_block.2} parent=0 // loop_footer
    %s14 = sadd.s32 1, %s10
  $region7: #{cnn_block.2} parent=0 // loop_footer_branch
    %9 = sbr.rel target = $region3
  $region8: #{cnn_block.2} parent=0 // loop_exit
    _
  %3064 = vsyncmov [#allocation3]
  %s3065 = vpop.sfrf %3064
  %p3066 = scmp.eq.s32.totalorder %s3065, 0
  %p3067 = pneg %p3066
  %3069 = shalt.err (%p3067)
  %s3070 = scalar_lea.sflag [#allocation3], 1
  %3071 = vsyncmov %s3070
  %s3072 = vpop.sfrf %3071
  %p3073 = scmp.eq.s32.totalorder %s3072, 0
  %p3074 = pneg %p3073
  %3076 = shalt.err (%p3074)

</llo_original>
